<compile_context>
chip_gen: v6e
topology: v6e:2x2x1
jax: 0.10.0
libtpu: 0.0.40
codegen_flags: <defaults>
</compile_context>

<pallas_src>
import functools

import jax
import jax.numpy as jnp
from jax.experimental import pallas as pl
from jax.experimental.pallas import tpu as pltpu  # noqa: F401  (TPU backend)

# ----------------------------- model config ---------------------------------
BATCH = 2
SEQ = 8
INPUT_DIM = 16
HIDDEN_DIM = 32
OUTPUT_DIM = 1
N_LAYERS = 2
# TODO(synk): nn.LSTM dropout (drop_prob=0.2) only applies in training mode;
#             this implements the inference forward pass, so it is omitted.


# --------------------------- fused Pallas kernel -----------------------------
def _lstm_net_kernel(*refs, n_layers, seq_len, batch, hidden_dim):
    """Whole LSTMNet forward in a single kernel invocation (no grid).

    Ref order:
      x (B,T,D), h0 (L,B,H), c0 (L,B,H),
      [wih_l (Din,4H), whh_l (H,4H), b_l (1,4H)] * L,
      fc_w (H,O), fc_b (1,O),
      out (B,O), h_n (L,B,H), c_n (L,B,H)
    Gate order along the 4H axis is (i, f, g, o), matching nn.LSTM.
    """
    H = hidden_dim
    B = batch
    x_ref, h0_ref, c0_ref = refs[0:3]
    w_refs = refs[3:3 + 3 * n_layers]
    fcw_ref, fcb_ref = refs[3 + 3 * n_layers:5 + 3 * n_layers]
    out_ref, hn_ref, cn_ref = refs[5 + 3 * n_layers:8 + 3 * n_layers]

    # Hoist: load each weight once; pre-broadcast the fused bias to (B, 4H) so
    # the unrolled time loop never re-issues a broadcast_in_dim.
    layer_w = []
    for l in range(n_layers):
        wih = w_refs[3 * l + 0][...]
        whh = w_refs[3 * l + 1][...]
        b = jnp.broadcast_to(w_refs[3 * l + 2][...], (B, 4 * H))
        layer_w.append((wih, whh, b))

    h = [h0_ref[l] for l in range(n_layers)]
    c = [c0_ref[l] for l in range(n_layers)]

    def cell(x_t, h_prev, c_prev, wih, whh, b):
        gates = (jnp.dot(x_t, wih, preferred_element_type=jnp.float32)
                 + jnp.dot(h_prev, whh, preferred_element_type=jnp.float32)
                 + b)
        # Transcendentals over the full (B, 4H) = (B, 128) lane tile (EUP),
        # then cheap lane slices for the individual gates.
        sig = jax.nn.sigmoid(gates)
        th = jnp.tanh(gates)
        i_g = sig[:, 0 * H:1 * H]
        f_g = sig[:, 1 * H:2 * H]
        g_g = th[:, 2 * H:3 * H]
        o_g = sig[:, 3 * H:4 * H]
        c_new = f_g * c_prev + i_g * g_g
        h_new = o_g * jnp.tanh(c_new)
        return h_new, c_new

    # Statically unrolled recurrence; both layers interleaved per step so the
    # layer-0 output sequence never needs to be stored anywhere.
    for t in range(seq_len):
        layer_in = x_ref[:, t, :]                       # static slice, (B, Din)
        for l in range(n_layers):
            wih, whh, b = layer_w[l]
            h[l], c[l] = cell(layer_in, h[l], c[l], wih, whh, b)
            layer_in = h[l]

    # Head: fc(relu(h_T of the top layer)).
    y = jnp.maximum(h[n_layers - 1], 0.0)
    out_ref[...] = (jnp.dot(y, fcw_ref[...],
                            preferred_element_type=jnp.float32) + fcb_ref[...])

    for l in range(n_layers):
        hn_ref[l, :, :] = h[l]
        cn_ref[l, :, :] = c[l]


def _build_forward(B, T, L, H, O):
    kernel = functools.partial(_lstm_net_kernel, n_layers=L, seq_len=T,
                               batch=B, hidden_dim=H)
    return pl.pallas_call(
        kernel,
        out_shape=(
            jax.ShapeDtypeStruct((B, O), jnp.float32),
            jax.ShapeDtypeStruct((L, B, H), jnp.float32),
            jax.ShapeDtypeStruct((L, B, H), jnp.float32),
        ),
        # No grid / specs: every array is a full-array VMEM block (total
        # footprint ~60 KiB — trivially fits on v5e/v6e/v7x).
    )


@jax.jit
def lstm_net_forward(x_btd, h0, c0, layer_params, fc_w_t, fc_b):
    """Equivalent of LSTMNet.forward(x, (h0, c0)) — single fused pallas_call."""
    B, T, _ = x_btd.shape
    L, _, H = h0.shape
    O = fc_w_t.shape[1]
    flat_w = []
    for wih_t, whh_t, bias in layer_params:
        flat_w += [wih_t, whh_t, bias]
    fwd = _build_forward(B, T, L, H, O)
    out, h_n, c_n = fwd(x_btd, h0, c0, *flat_w, fc_w_t, fc_b)
    return out, (h_n, c_n)


# --------------------------- pure-JAX reference -------------------------------
def lstm_net_ref(x_btd, h0, c0, layer_params, fc_w_t, fc_b):
    B, T, _ = x_btd.shape
    H = h0.shape[-1]
    layer_in = x_btd
    hs, cs = [], []
    for l, (wih_t, whh_t, bias) in enumerate(layer_params):
        h, c = h0[l], c0[l]
        outs = []
        for t in range(T):
            g = layer_in[:, t] @ wih_t + h @ whh_t + bias
            i_g = jax.nn.sigmoid(g[:, :H])
            f_g = jax.nn.sigmoid(g[:, H:2 * H])
            g_g = jnp.tanh(g[:, 2 * H:3 * H])
            o_g = jax.nn.sigmoid(g[:, 3 * H:])
            c = f_g * c + i_g * g_g
            h = o_g * jnp.tanh(c)
            outs.append(h)
        layer_in = jnp.stack(outs, axis=1)
        hs.append(h)
        cs.append(c)
    out = jnp.maximum(layer_in[:, -1], 0.0) @ fc_w_t + fc_b
    return out, (jnp.stack(hs), jnp.stack(cs))


# ------------------------------- params init ---------------------------------
def init_params(key):
    """Deterministic params matching nn.LSTM / nn.Linear shapes (PyTorch init)."""
    k = 1.0 / jnp.sqrt(jnp.float32(HIDDEN_DIM))
    layer_params = []
    for l in range(N_LAYERS):
        d_in = INPUT_DIM if l == 0 else HIDDEN_DIM
        key, k1, k2, k3, k4 = jax.random.split(key, 5)
        w_ih = jax.random.uniform(k1, (4 * HIDDEN_DIM, d_in), jnp.float32, -k, k)
        w_hh = jax.random.uniform(k2, (4 * HIDDEN_DIM, HIDDEN_DIM), jnp.float32, -k, k)
        b_ih = jax.random.uniform(k3, (4 * HIDDEN_DIM,), jnp.float32, -k, k)
        b_hh = jax.random.uniform(k4, (4 * HIDDEN_DIM,), jnp.float32, -k, k)
        # Pre-transpose weights and fuse the two biases (b_ih + b_hh) once.
        layer_params.append((w_ih.T, w_hh.T, (b_ih + b_hh)[None, :]))
    key, k5, k6 = jax.random.split(key, 3)
    kf = 1.0 / jnp.sqrt(jnp.float32(HIDDEN_DIM))
    fc_w = jax.random.uniform(k5, (OUTPUT_DIM, HIDDEN_DIM), jnp.float32, -kf, kf)
    fc_b = jax.random.uniform(k6, (OUTPUT_DIM,), jnp.float32, -kf, kf)
    return layer_params, fc_w.T, fc_b[None, :]


# ---------------------------------- main --------------------------------------
if __name__ == "__main__":
    key = jax.random.PRNGKey(0)
    key, kx = jax.random.split(key)
    x = jax.random.normal(kx, (BATCH, SEQ, INPUT_DIM), jnp.float32)
    # init_hidden(batch_size): zeros of shape (n_layers, B, H)
    h0 = jnp.zeros((N_LAYERS, BATCH, HIDDEN_DIM), jnp.float32)
    c0 = jnp.zeros((N_LAYERS, BATCH, HIDDEN_DIM), jnp.float32)

    layer_params, fc_w_t, fc_b = init_params(key)

    out, (h_n, c_n) = lstm_net_forward(x, h0, c0, layer_params, fc_w_t, fc_b)
    jax.block_until_ready(out)
    jax.block_until_ready(h_n)
    jax.block_until_ready(c_n)

    # sanity check against a pure-JAX reference
    out_ref, (h_ref, c_ref) = lstm_net_ref(x, h0, c0, layer_params, fc_w_t, fc_b)
    assert out.shape == (BATCH, OUTPUT_DIM)
    assert h_n.shape == (N_LAYERS, BATCH, HIDDEN_DIM)
    assert c_n.shape == (N_LAYERS, BATCH, HIDDEN_DIM)
    assert jnp.allclose(out, out_ref, atol=1e-2, rtol=1e-2)
    assert jnp.allclose(h_n, h_ref, atol=1e-2, rtol=1e-2)
    assert jnp.allclose(c_n, c_ref, atol=1e-2, rtol=1e-2)

    print("KERNEL_OK")
</pallas_src>

<mosaic_0001>
module attributes {stable_mosaic.version = 11 : i64} {
  func.func @_lstm_net_kernel(%arg0: memref<2x8x16xf32, #tpu.memory_space<vmem>>, %arg1: memref<2x2x32xf32, #tpu.memory_space<vmem>>, %arg2: memref<2x2x32xf32, #tpu.memory_space<vmem>>, %arg3: memref<16x128xf32, #tpu.memory_space<vmem>>, %arg4: memref<32x128xf32, #tpu.memory_space<vmem>>, %arg5: memref<1x128xf32, #tpu.memory_space<vmem>>, %arg6: memref<32x128xf32, #tpu.memory_space<vmem>>, %arg7: memref<32x128xf32, #tpu.memory_space<vmem>>, %arg8: memref<1x128xf32, #tpu.memory_space<vmem>>, %arg9: memref<32x1xf32, #tpu.memory_space<vmem>>, %arg10: memref<1x1xf32, #tpu.memory_space<vmem>>, %arg11: memref<2x1xf32, #tpu.memory_space<vmem>>, %arg12: memref<2x2x32xf32, #tpu.memory_space<vmem>>, %arg13: memref<2x2x32xf32, #tpu.memory_space<vmem>>) attributes {dimension_semantics = [], scalar_prefetch = 0 : i64, scratch_operands = 0 : i64, tpu.core_type = #tpu.core_type<tc>} {
    %c0 = arith.constant 0 : index
    %c0_0 = arith.constant 0 : index
    %0 = vector.load %arg3[%c0, %c0_0] : memref<16x128xf32, #tpu.memory_space<vmem>>, vector<16x128xf32>
    %c0_1 = arith.constant 0 : index
    %c0_2 = arith.constant 0 : index
    %1 = vector.load %arg4[%c0_1, %c0_2] : memref<32x128xf32, #tpu.memory_space<vmem>>, vector<32x128xf32>
    %c0_3 = arith.constant 0 : index
    %c0_4 = arith.constant 0 : index
    %2 = vector.load %arg5[%c0_3, %c0_4] : memref<1x128xf32, #tpu.memory_space<vmem>>, vector<1x128xf32>
    %3 = vector.shape_cast %2 : vector<1x128xf32> to vector<1x128xf32>
    %4 = vector.broadcast %3 : vector<1x128xf32> to vector<2x128xf32>
    %c0_5 = arith.constant 0 : index
    %c0_6 = arith.constant 0 : index
    %5 = vector.load %arg6[%c0_5, %c0_6] : memref<32x128xf32, #tpu.memory_space<vmem>>, vector<32x128xf32>
    %c0_7 = arith.constant 0 : index
    %c0_8 = arith.constant 0 : index
    %6 = vector.load %arg7[%c0_7, %c0_8] : memref<32x128xf32, #tpu.memory_space<vmem>>, vector<32x128xf32>
    %c0_9 = arith.constant 0 : index
    %c0_10 = arith.constant 0 : index
    %7 = vector.load %arg8[%c0_9, %c0_10] : memref<1x128xf32, #tpu.memory_space<vmem>>, vector<1x128xf32>
    %8 = vector.shape_cast %7 : vector<1x128xf32> to vector<1x128xf32>
    %9 = vector.broadcast %8 : vector<1x128xf32> to vector<2x128xf32>
    %c0_11 = arith.constant 0 : index
    %c0_12 = arith.constant 0 : index
    %c0_13 = arith.constant 0 : index
    %10 = vector.load %arg1[%c0_11, %c0_12, %c0_13] : memref<2x2x32xf32, #tpu.memory_space<vmem>>, vector<1x2x32xf32>
    %11 = vector.shape_cast %10 : vector<1x2x32xf32> to vector<2x32xf32>
    %c1 = arith.constant 1 : index
    %c0_14 = arith.constant 0 : index
    %c0_15 = arith.constant 0 : index
    %12 = vector.load %arg1[%c1, %c0_14, %c0_15] : memref<2x2x32xf32, #tpu.memory_space<vmem>>, vector<1x2x32xf32>
    %13 = vector.shape_cast %12 : vector<1x2x32xf32> to vector<2x32xf32>
    %c0_16 = arith.constant 0 : index
    %c0_17 = arith.constant 0 : index
    %c0_18 = arith.constant 0 : index
    %14 = vector.load %arg2[%c0_16, %c0_17, %c0_18] : memref<2x2x32xf32, #tpu.memory_space<vmem>>, vector<1x2x32xf32>
    %15 = vector.shape_cast %14 : vector<1x2x32xf32> to vector<2x32xf32>
    %c1_19 = arith.constant 1 : index
    %c0_20 = arith.constant 0 : index
    %c0_21 = arith.constant 0 : index
    %16 = vector.load %arg2[%c1_19, %c0_20, %c0_21] : memref<2x2x32xf32, #tpu.memory_space<vmem>>, vector<1x2x32xf32>
    %17 = vector.shape_cast %16 : vector<1x2x32xf32> to vector<2x32xf32>
    %c0_22 = arith.constant 0 : index
    %c0_23 = arith.constant 0 : index
    %c0_24 = arith.constant 0 : index
    %18 = vector.load %arg0[%c0_22, %c0_23, %c0_24] : memref<2x8x16xf32, #tpu.memory_space<vmem>>, vector<2x1x16xf32>
    %19 = vector.shape_cast %18 : vector<2x1x16xf32> to vector<2x16xf32>
    %cst = arith.constant dense<0.000000e+00> : vector<2x128xf32>
    %20 = tpu.matmul %19, %0, %cst {dimension_numbers = #tpu.dot_dimension_numbers<[1], [0], [0], [1], [0, 0, 1, 1], [], []>} : vector<2x16xf32>, vector<16x128xf32>, vector<2x128xf32> -> vector<2x128xf32>
    %cst_25 = arith.constant dense<0.000000e+00> : vector<2x128xf32>
    %21 = tpu.matmul %11, %1, %cst_25 {dimension_numbers = #tpu.dot_dimension_numbers<[1], [0], [0], [1], [0, 0, 1, 1], [], []>} : vector<2x32xf32>, vector<32x128xf32>, vector<2x128xf32> -> vector<2x128xf32>
    %22 = arith.addf %20, %21 : vector<2x128xf32>
    %23 = arith.addf %22, %4 : vector<2x128xf32>
    %24 = arith.negf %23 : vector<2x128xf32>
    %25 = math.exp %24 : vector<2x128xf32>
    %cst_26 = arith.constant 1.000000e+00 : f32
    %26 = vector.broadcast %cst_26 : f32 to vector<2x128xf32>
    %27 = arith.addf %26, %25 : vector<2x128xf32>
    %28 = arith.divf %26, %27 : vector<2x128xf32>
    %29 = math.tanh %23 : vector<2x128xf32>
    %30 = vector.extract_strided_slice %28 {offsets = [0, 0], sizes = [2, 32], strides = [1, 1]} : vector<2x128xf32> to vector<2x32xf32>
    %31 = vector.extract_strided_slice %28 {offsets = [0, 32], sizes = [2, 32], strides = [1, 1]} : vector<2x128xf32> to vector<2x32xf32>
    %32 = vector.extract_strided_slice %29 {offsets = [0, 64], sizes = [2, 32], strides = [1, 1]} : vector<2x128xf32> to vector<2x32xf32>
    %33 = vector.extract_strided_slice %28 {offsets = [0, 96], sizes = [2, 32], strides = [1, 1]} : vector<2x128xf32> to vector<2x32xf32>
    %34 = arith.mulf %31, %15 : vector<2x32xf32>
    %35 = arith.mulf %30, %32 : vector<2x32xf32>
    %36 = arith.addf %34, %35 : vector<2x32xf32>
    %37 = math.tanh %36 : vector<2x32xf32>
    %38 = arith.mulf %33, %37 : vector<2x32xf32>
    %cst_27 = arith.constant dense<0.000000e+00> : vector<2x128xf32>
    %39 = tpu.matmul %38, %5, %cst_27 {dimension_numbers = #tpu.dot_dimension_numbers<[1], [0], [0], [1], [0, 0, 1, 1], [], []>} : vector<2x32xf32>, vector<32x128xf32>, vector<2x128xf32> -> vector<2x128xf32>
    %cst_28 = arith.constant dense<0.000000e+00> : vector<2x128xf32>
    %40 = tpu.matmul %13, %6, %cst_28 {dimension_numbers = #tpu.dot_dimension_numbers<[1], [0], [0], [1], [0, 0, 1, 1], [], []>} : vector<2x32xf32>, vector<32x128xf32>, vector<2x128xf32> -> vector<2x128xf32>
    %41 = arith.addf %39, %40 : vector<2x128xf32>
    %42 = arith.addf %41, %9 : vector<2x128xf32>
    %43 = arith.negf %42 : vector<2x128xf32>
    %44 = math.exp %43 : vector<2x128xf32>
    %cst_29 = arith.constant 1.000000e+00 : f32
    %45 = vector.broadcast %cst_29 : f32 to vector<2x128xf32>
    %46 = arith.addf %45, %44 : vector<2x128xf32>
    %47 = arith.divf %45, %46 : vector<2x128xf32>
    %48 = math.tanh %42 : vector<2x128xf32>
    %49 = vector.extract_strided_slice %47 {offsets = [0, 0], sizes = [2, 32], strides = [1, 1]} : vector<2x128xf32> to vector<2x32xf32>
    %50 = vector.extract_strided_slice %47 {offsets = [0, 32], sizes = [2, 32], strides = [1, 1]} : vector<2x128xf32> to vector<2x32xf32>
    %51 = vector.extract_strided_slice %48 {offsets = [0, 64], sizes = [2, 32], strides = [1, 1]} : vector<2x128xf32> to vector<2x32xf32>
    %52 = vector.extract_strided_slice %47 {offsets = [0, 96], sizes = [2, 32], strides = [1, 1]} : vector<2x128xf32> to vector<2x32xf32>
    %53 = arith.mulf %50, %17 : vector<2x32xf32>
    %54 = arith.mulf %49, %51 : vector<2x32xf32>
    %55 = arith.addf %53, %54 : vector<2x32xf32>
    %56 = math.tanh %55 : vector<2x32xf32>
    %57 = arith.mulf %52, %56 : vector<2x32xf32>
    %c0_30 = arith.constant 0 : index
    %c1_31 = arith.constant 1 : index
    %c0_32 = arith.constant 0 : index
    %58 = vector.load %arg0[%c0_30, %c1_31, %c0_32] : memref<2x8x16xf32, #tpu.memory_space<vmem>>, vector<2x1x16xf32>
    %59 = vector.shape_cast %58 : vector<2x1x16xf32> to vector<2x16xf32>
    %cst_33 = arith.constant dense<0.000000e+00> : vector<2x128xf32>
    %60 = tpu.matmul %59, %0, %cst_33 {dimension_numbers = #tpu.dot_dimension_numbers<[1], [0], [0], [1], [0, 0, 1, 1], [], []>} : vector<2x16xf32>, vector<16x128xf32>, vector<2x128xf32> -> vector<2x128xf32>
    %cst_34 = arith.constant dense<0.000000e+00> : vector<2x128xf32>
    %61 = tpu.matmul %38, %1, %cst_34 {dimension_numbers = #tpu.dot_dimension_numbers<[1], [0], [0], [1], [0, 0, 1, 1], [], []>} : vector<2x32xf32>, vector<32x128xf32>, vector<2x128xf32> -> vector<2x128xf32>
    %62 = arith.addf %60, %61 : vector<2x128xf32>
    %63 = arith.addf %62, %4 : vector<2x128xf32>
    %64 = arith.negf %63 : vector<2x128xf32>
    %65 = math.exp %64 : vector<2x128xf32>
    %cst_35 = arith.constant 1.000000e+00 : f32
    %66 = vector.broadcast %cst_35 : f32 to vector<2x128xf32>
    %67 = arith.addf %66, %65 : vector<2x128xf32>
    %68 = arith.divf %66, %67 : vector<2x128xf32>
    %69 = math.tanh %63 : vector<2x128xf32>
    %70 = vector.extract_strided_slice %68 {offsets = [0, 0], sizes = [2, 32], strides = [1, 1]} : vector<2x128xf32> to vector<2x32xf32>
    %71 = vector.extract_strided_slice %68 {offsets = [0, 32], sizes = [2, 32], strides = [1, 1]} : vector<2x128xf32> to vector<2x32xf32>
    %72 = vector.extract_strided_slice %69 {offsets = [0, 64], sizes = [2, 32], strides = [1, 1]} : vector<2x128xf32> to vector<2x32xf32>
    %73 = vector.extract_strided_slice %68 {offsets = [0, 96], sizes = [2, 32], strides = [1, 1]} : vector<2x128xf32> to vector<2x32xf32>
    %74 = arith.mulf %71, %36 : vector<2x32xf32>
    %75 = arith.mulf %70, %72 : vector<2x32xf32>
    %76 = arith.addf %74, %75 : vector<2x32xf32>
    %77 = math.tanh %76 : vector<2x32xf32>
    %78 = arith.mulf %73, %77 : vector<2x32xf32>
    %cst_36 = arith.constant dense<0.000000e+00> : vector<2x128xf32>
    %79 = tpu.matmul %78, %5, %cst_36 {dimension_numbers = #tpu.dot_dimension_numbers<[1], [0], [0], [1], [0, 0, 1, 1], [], []>} : vector<2x32xf32>, vector<32x128xf32>, vector<2x128xf32> -> vector<2x128xf32>
    %cst_37 = arith.constant dense<0.000000e+00> : vector<2x128xf32>
    %80 = tpu.matmul %57, %6, %cst_37 {dimension_numbers = #tpu.dot_dimension_numbers<[1], [0], [0], [1], [0, 0, 1, 1], [], []>} : vector<2x32xf32>, vector<32x128xf32>, vector<2x128xf32> -> vector<2x128xf32>
    %81 = arith.addf %79, %80 : vector<2x128xf32>
    %82 = arith.addf %81, %9 : vector<2x128xf32>
    %83 = arith.negf %82 : vector<2x128xf32>
    %84 = math.exp %83 : vector<2x128xf32>
    %cst_38 = arith.constant 1.000000e+00 : f32
    %85 = vector.broadcast %cst_38 : f32 to vector<2x128xf32>
    %86 = arith.addf %85, %84 : vector<2x128xf32>
    %87 = arith.divf %85, %86 : vector<2x128xf32>
    %88 = math.tanh %82 : vector<2x128xf32>
    %89 = vector.extract_strided_slice %87 {offsets = [0, 0], sizes = [2, 32], strides = [1, 1]} : vector<2x128xf32> to vector<2x32xf32>
    %90 = vector.extract_strided_slice %87 {offsets = [0, 32], sizes = [2, 32], strides = [1, 1]} : vector<2x128xf32> to vector<2x32xf32>
    %91 = vector.extract_strided_slice %88 {offsets = [0, 64], sizes = [2, 32], strides = [1, 1]} : vector<2x128xf32> to vector<2x32xf32>
    %92 = vector.extract_strided_slice %87 {offsets = [0, 96], sizes = [2, 32], strides = [1, 1]} : vector<2x128xf32> to vector<2x32xf32>
    %93 = arith.mulf %90, %55 : vector<2x32xf32>
    %94 = arith.mulf %89, %91 : vector<2x32xf32>
    %95 = arith.addf %93, %94 : vector<2x32xf32>
    %96 = math.tanh %95 : vector<2x32xf32>
    %97 = arith.mulf %92, %96 : vector<2x32xf32>
    %c0_39 = arith.constant 0 : index
    %c2 = arith.constant 2 : index
    %c0_40 = arith.constant 0 : index
    %98 = vector.load %arg0[%c0_39, %c2, %c0_40] : memref<2x8x16xf32, #tpu.memory_space<vmem>>, vector<2x1x16xf32>
    %99 = vector.shape_cast %98 : vector<2x1x16xf32> to vector<2x16xf32>
    %cst_41 = arith.constant dense<0.000000e+00> : vector<2x128xf32>
    %100 = tpu.matmul %99, %0, %cst_41 {dimension_numbers = #tpu.dot_dimension_numbers<[1], [0], [0], [1], [0, 0, 1, 1], [], []>} : vector<2x16xf32>, vector<16x128xf32>, vector<2x128xf32> -> vector<2x128xf32>
    %cst_42 = arith.constant dense<0.000000e+00> : vector<2x128xf32>
    %101 = tpu.matmul %78, %1, %cst_42 {dimension_numbers = #tpu.dot_dimension_numbers<[1], [0], [0], [1], [0, 0, 1, 1], [], []>} : vector<2x32xf32>, vector<32x128xf32>, vector<2x128xf32> -> vector<2x128xf32>
    %102 = arith.addf %100, %101 : vector<2x128xf32>
    %103 = arith.addf %102, %4 : vector<2x128xf32>
    %104 = arith.negf %103 : vector<2x128xf32>
    %105 = math.exp %104 : vector<2x128xf32>
    %cst_43 = arith.constant 1.000000e+00 : f32
    %106 = vector.broadcast %cst_43 : f32 to vector<2x128xf32>
    %107 = arith.addf %106, %105 : vector<2x128xf32>
    %108 = arith.divf %106, %107 : vector<2x128xf32>
    %109 = math.tanh %103 : vector<2x128xf32>
    %110 = vector.extract_strided_slice %108 {offsets = [0, 0], sizes = [2, 32], strides = [1, 1]} : vector<2x128xf32> to vector<2x32xf32>
    %111 = vector.extract_strided_slice %108 {offsets = [0, 32], sizes = [2, 32], strides = [1, 1]} : vector<2x128xf32> to vector<2x32xf32>
    %112 = vector.extract_strided_slice %109 {offsets = [0, 64], sizes = [2, 32], strides = [1, 1]} : vector<2x128xf32> to vector<2x32xf32>
    %113 = vector.extract_strided_slice %108 {offsets = [0, 96], sizes = [2, 32], strides = [1, 1]} : vector<2x128xf32> to vector<2x32xf32>
    %114 = arith.mulf %111, %76 : vector<2x32xf32>
    %115 = arith.mulf %110, %112 : vector<2x32xf32>
    %116 = arith.addf %114, %115 : vector<2x32xf32>
    %117 = math.tanh %116 : vector<2x32xf32>
    %118 = arith.mulf %113, %117 : vector<2x32xf32>
    %cst_44 = arith.constant dense<0.000000e+00> : vector<2x128xf32>
    %119 = tpu.matmul %118, %5, %cst_44 {dimension_numbers = #tpu.dot_dimension_numbers<[1], [0], [0], [1], [0, 0, 1, 1], [], []>} : vector<2x32xf32>, vector<32x128xf32>, vector<2x128xf32> -> vector<2x128xf32>
    %cst_45 = arith.constant dense<0.000000e+00> : vector<2x128xf32>
    %120 = tpu.matmul %97, %6, %cst_45 {dimension_numbers = #tpu.dot_dimension_numbers<[1], [0], [0], [1], [0, 0, 1, 1], [], []>} : vector<2x32xf32>, vector<32x128xf32>, vector<2x128xf32> -> vector<2x128xf32>
    %121 = arith.addf %119, %120 : vector<2x128xf32>
    %122 = arith.addf %121, %9 : vector<2x128xf32>
    %123 = arith.negf %122 : vector<2x128xf32>
    %124 = math.exp %123 : vector<2x128xf32>
    %cst_46 = arith.constant 1.000000e+00 : f32
    %125 = vector.broadcast %cst_46 : f32 to vector<2x128xf32>
    %126 = arith.addf %125, %124 : vector<2x128xf32>
    %127 = arith.divf %125, %126 : vector<2x128xf32>
    %128 = math.tanh %122 : vector<2x128xf32>
    %129 = vector.extract_strided_slice %127 {offsets = [0, 0], sizes = [2, 32], strides = [1, 1]} : vector<2x128xf32> to vector<2x32xf32>
    %130 = vector.extract_strided_slice %127 {offsets = [0, 32], sizes = [2, 32], strides = [1, 1]} : vector<2x128xf32> to vector<2x32xf32>
    %131 = vector.extract_strided_slice %128 {offsets = [0, 64], sizes = [2, 32], strides = [1, 1]} : vector<2x128xf32> to vector<2x32xf32>
    %132 = vector.extract_strided_slice %127 {offsets = [0, 96], sizes = [2, 32], strides = [1, 1]} : vector<2x128xf32> to vector<2x32xf32>
    %133 = arith.mulf %130, %95 : vector<2x32xf32>
    %134 = arith.mulf %129, %131 : vector<2x32xf32>
    %135 = arith.addf %133, %134 : vector<2x32xf32>
    %136 = math.tanh %135 : vector<2x32xf32>
    %137 = arith.mulf %132, %136 : vector<2x32xf32>
    %c0_47 = arith.constant 0 : index
    %c3 = arith.constant 3 : index
    %c0_48 = arith.constant 0 : index
    %138 = vector.load %arg0[%c0_47, %c3, %c0_48] : memref<2x8x16xf32, #tpu.memory_space<vmem>>, vector<2x1x16xf32>
    %139 = vector.shape_cast %138 : vector<2x1x16xf32> to vector<2x16xf32>
    %cst_49 = arith.constant dense<0.000000e+00> : vector<2x128xf32>
    %140 = tpu.matmul %139, %0, %cst_49 {dimension_numbers = #tpu.dot_dimension_numbers<[1], [0], [0], [1], [0, 0, 1, 1], [], []>} : vector<2x16xf32>, vector<16x128xf32>, vector<2x128xf32> -> vector<2x128xf32>
    %cst_50 = arith.constant dense<0.000000e+00> : vector<2x128xf32>
    %141 = tpu.matmul %118, %1, %cst_50 {dimension_numbers = #tpu.dot_dimension_numbers<[1], [0], [0], [1], [0, 0, 1, 1], [], []>} : vector<2x32xf32>, vector<32x128xf32>, vector<2x128xf32> -> vector<2x128xf32>
    %142 = arith.addf %140, %141 : vector<2x128xf32>
    %143 = arith.addf %142, %4 : vector<2x128xf32>
    %144 = arith.negf %143 : vector<2x128xf32>
    %145 = math.exp %144 : vector<2x128xf32>
    %cst_51 = arith.constant 1.000000e+00 : f32
    %146 = vector.broadcast %cst_51 : f32 to vector<2x128xf32>
    %147 = arith.addf %146, %145 : vector<2x128xf32>
    %148 = arith.divf %146, %147 : vector<2x128xf32>
    %149 = math.tanh %143 : vector<2x128xf32>
    %150 = vector.extract_strided_slice %148 {offsets = [0, 0], sizes = [2, 32], strides = [1, 1]} : vector<2x128xf32> to vector<2x32xf32>
    %151 = vector.extract_strided_slice %148 {offsets = [0, 32], sizes = [2, 32], strides = [1, 1]} : vector<2x128xf32> to vector<2x32xf32>
    %152 = vector.extract_strided_slice %149 {offsets = [0, 64], sizes = [2, 32], strides = [1, 1]} : vector<2x128xf32> to vector<2x32xf32>
    %153 = vector.extract_strided_slice %148 {offsets = [0, 96], sizes = [2, 32], strides = [1, 1]} : vector<2x128xf32> to vector<2x32xf32>
    %154 = arith.mulf %151, %116 : vector<2x32xf32>
    %155 = arith.mulf %150, %152 : vector<2x32xf32>
    %156 = arith.addf %154, %155 : vector<2x32xf32>
    %157 = math.tanh %156 : vector<2x32xf32>
    %158 = arith.mulf %153, %157 : vector<2x32xf32>
    %cst_52 = arith.constant dense<0.000000e+00> : vector<2x128xf32>
    %159 = tpu.matmul %158, %5, %cst_52 {dimension_numbers = #tpu.dot_dimension_numbers<[1], [0], [0], [1], [0, 0, 1, 1], [], []>} : vector<2x32xf32>, vector<32x128xf32>, vector<2x128xf32> -> vector<2x128xf32>
    %cst_53 = arith.constant dense<0.000000e+00> : vector<2x128xf32>
    %160 = tpu.matmul %137, %6, %cst_53 {dimension_numbers = #tpu.dot_dimension_numbers<[1], [0], [0], [1], [0, 0, 1, 1], [], []>} : vector<2x32xf32>, vector<32x128xf32>, vector<2x128xf32> -> vector<2x128xf32>
    %161 = arith.addf %159, %160 : vector<2x128xf32>
    %162 = arith.addf %161, %9 : vector<2x128xf32>
    %163 = arith.negf %162 : vector<2x128xf32>
    %164 = math.exp %163 : vector<2x128xf32>
    %cst_54 = arith.constant 1.000000e+00 : f32
    %165 = vector.broadcast %cst_54 : f32 to vector<2x128xf32>
    %166 = arith.addf %165, %164 : vector<2x128xf32>
    %167 = arith.divf %165, %166 : vector<2x128xf32>
    %168 = math.tanh %162 : vector<2x128xf32>
    %169 = vector.extract_strided_slice %167 {offsets = [0, 0], sizes = [2, 32], strides = [1, 1]} : vector<2x128xf32> to vector<2x32xf32>
    %170 = vector.extract_strided_slice %167 {offsets = [0, 32], sizes = [2, 32], strides = [1, 1]} : vector<2x128xf32> to vector<2x32xf32>
    %171 = vector.extract_strided_slice %168 {offsets = [0, 64], sizes = [2, 32], strides = [1, 1]} : vector<2x128xf32> to vector<2x32xf32>
    %172 = vector.extract_strided_slice %167 {offsets = [0, 96], sizes = [2, 32], strides = [1, 1]} : vector<2x128xf32> to vector<2x32xf32>
    %173 = arith.mulf %170, %135 : vector<2x32xf32>
    %174 = arith.mulf %169, %171 : vector<2x32xf32>
    %175 = arith.addf %173, %174 : vector<2x32xf32>
    %176 = math.tanh %175 : vector<2x32xf32>
    %177 = arith.mulf %172, %176 : vector<2x32xf32>
    %c0_55 = arith.constant 0 : index
    %c4 = arith.constant 4 : index
    %c0_56 = arith.constant 0 : index
    %178 = vector.load %arg0[%c0_55, %c4, %c0_56] : memref<2x8x16xf32, #tpu.memory_space<vmem>>, vector<2x1x16xf32>
    %179 = vector.shape_cast %178 : vector<2x1x16xf32> to vector<2x16xf32>
    %cst_57 = arith.constant dense<0.000000e+00> : vector<2x128xf32>
    %180 = tpu.matmul %179, %0, %cst_57 {dimension_numbers = #tpu.dot_dimension_numbers<[1], [0], [0], [1], [0, 0, 1, 1], [], []>} : vector<2x16xf32>, vector<16x128xf32>, vector<2x128xf32> -> vector<2x128xf32>
    %cst_58 = arith.constant dense<0.000000e+00> : vector<2x128xf32>
    %181 = tpu.matmul %158, %1, %cst_58 {dimension_numbers = #tpu.dot_dimension_numbers<[1], [0], [0], [1], [0, 0, 1, 1], [], []>} : vector<2x32xf32>, vector<32x128xf32>, vector<2x128xf32> -> vector<2x128xf32>
    %182 = arith.addf %180, %181 : vector<2x128xf32>
    %183 = arith.addf %182, %4 : vector<2x128xf32>
    %184 = arith.negf %183 : vector<2x128xf32>
    %185 = math.exp %184 : vector<2x128xf32>
    %cst_59 = arith.constant 1.000000e+00 : f32
    %186 = vector.broadcast %cst_59 : f32 to vector<2x128xf32>
    %187 = arith.addf %186, %185 : vector<2x128xf32>
    %188 = arith.divf %186, %187 : vector<2x128xf32>
    %189 = math.tanh %183 : vector<2x128xf32>
    %190 = vector.extract_strided_slice %188 {offsets = [0, 0], sizes = [2, 32], strides = [1, 1]} : vector<2x128xf32> to vector<2x32xf32>
    %191 = vector.extract_strided_slice %188 {offsets = [0, 32], sizes = [2, 32], strides = [1, 1]} : vector<2x128xf32> to vector<2x32xf32>
    %192 = vector.extract_strided_slice %189 {offsets = [0, 64], sizes = [2, 32], strides = [1, 1]} : vector<2x128xf32> to vector<2x32xf32>
    %193 = vector.extract_strided_slice %188 {offsets = [0, 96], sizes = [2, 32], strides = [1, 1]} : vector<2x128xf32> to vector<2x32xf32>
    %194 = arith.mulf %191, %156 : vector<2x32xf32>
    %195 = arith.mulf %190, %192 : vector<2x32xf32>
    %196 = arith.addf %194, %195 : vector<2x32xf32>
    %197 = math.tanh %196 : vector<2x32xf32>
    %198 = arith.mulf %193, %197 : vector<2x32xf32>
    %cst_60 = arith.constant dense<0.000000e+00> : vector<2x128xf32>
    %199 = tpu.matmul %198, %5, %cst_60 {dimension_numbers = #tpu.dot_dimension_numbers<[1], [0], [0], [1], [0, 0, 1, 1], [], []>} : vector<2x32xf32>, vector<32x128xf32>, vector<2x128xf32> -> vector<2x128xf32>
    %cst_61 = arith.constant dense<0.000000e+00> : vector<2x128xf32>
    %200 = tpu.matmul %177, %6, %cst_61 {dimension_numbers = #tpu.dot_dimension_numbers<[1], [0], [0], [1], [0, 0, 1, 1], [], []>} : vector<2x32xf32>, vector<32x128xf32>, vector<2x128xf32> -> vector<2x128xf32>
    %201 = arith.addf %199, %200 : vector<2x128xf32>
    %202 = arith.addf %201, %9 : vector<2x128xf32>
    %203 = arith.negf %202 : vector<2x128xf32>
    %204 = math.exp %203 : vector<2x128xf32>
    %cst_62 = arith.constant 1.000000e+00 : f32
    %205 = vector.broadcast %cst_62 : f32 to vector<2x128xf32>
    %206 = arith.addf %205, %204 : vector<2x128xf32>
    %207 = arith.divf %205, %206 : vector<2x128xf32>
    %208 = math.tanh %202 : vector<2x128xf32>
    %209 = vector.extract_strided_slice %207 {offsets = [0, 0], sizes = [2, 32], strides = [1, 1]} : vector<2x128xf32> to vector<2x32xf32>
    %210 = vector.extract_strided_slice %207 {offsets = [0, 32], sizes = [2, 32], strides = [1, 1]} : vector<2x128xf32> to vector<2x32xf32>
    %211 = vector.extract_strided_slice %208 {offsets = [0, 64], sizes = [2, 32], strides = [1, 1]} : vector<2x128xf32> to vector<2x32xf32>
    %212 = vector.extract_strided_slice %207 {offsets = [0, 96], sizes = [2, 32], strides = [1, 1]} : vector<2x128xf32> to vector<2x32xf32>
    %213 = arith.mulf %210, %175 : vector<2x32xf32>
    %214 = arith.mulf %209, %211 : vector<2x32xf32>
    %215 = arith.addf %213, %214 : vector<2x32xf32>
    %216 = math.tanh %215 : vector<2x32xf32>
    %217 = arith.mulf %212, %216 : vector<2x32xf32>
    %c0_63 = arith.constant 0 : index
    %c5 = arith.constant 5 : index
    %c0_64 = arith.constant 0 : index
    %218 = vector.load %arg0[%c0_63, %c5, %c0_64] : memref<2x8x16xf32, #tpu.memory_space<vmem>>, vector<2x1x16xf32>
    %219 = vector.shape_cast %218 : vector<2x1x16xf32> to vector<2x16xf32>
    %cst_65 = arith.constant dense<0.000000e+00> : vector<2x128xf32>
    %220 = tpu.matmul %219, %0, %cst_65 {dimension_numbers = #tpu.dot_dimension_numbers<[1], [0], [0], [1], [0, 0, 1, 1], [], []>} : vector<2x16xf32>, vector<16x128xf32>, vector<2x128xf32> -> vector<2x128xf32>
    %cst_66 = arith.constant dense<0.000000e+00> : vector<2x128xf32>
    %221 = tpu.matmul %198, %1, %cst_66 {dimension_numbers = #tpu.dot_dimension_numbers<[1], [0], [0], [1], [0, 0, 1, 1], [], []>} : vector<2x32xf32>, vector<32x128xf32>, vector<2x128xf32> -> vector<2x128xf32>
    %222 = arith.addf %220, %221 : vector<2x128xf32>
    %223 = arith.addf %222, %4 : vector<2x128xf32>
    %224 = arith.negf %223 : vector<2x128xf32>
    %225 = math.exp %224 : vector<2x128xf32>
    %cst_67 = arith.constant 1.000000e+00 : f32
    %226 = vector.broadcast %cst_67 : f32 to vector<2x128xf32>
    %227 = arith.addf %226, %225 : vector<2x128xf32>
    %228 = arith.divf %226, %227 : vector<2x128xf32>
    %229 = math.tanh %223 : vector<2x128xf32>
    %230 = vector.extract_strided_slice %228 {offsets = [0, 0], sizes = [2, 32], strides = [1, 1]} : vector<2x128xf32> to vector<2x32xf32>
    %231 = vector.extract_strided_slice %228 {offsets = [0, 32], sizes = [2, 32], strides = [1, 1]} : vector<2x128xf32> to vector<2x32xf32>
    %232 = vector.extract_strided_slice %229 {offsets = [0, 64], sizes = [2, 32], strides = [1, 1]} : vector<2x128xf32> to vector<2x32xf32>
    %233 = vector.extract_strided_slice %228 {offsets = [0, 96], sizes = [2, 32], strides = [1, 1]} : vector<2x128xf32> to vector<2x32xf32>
    %234 = arith.mulf %231, %196 : vector<2x32xf32>
    %235 = arith.mulf %230, %232 : vector<2x32xf32>
    %236 = arith.addf %234, %235 : vector<2x32xf32>
    %237 = math.tanh %236 : vector<2x32xf32>
    %238 = arith.mulf %233, %237 : vector<2x32xf32>
    %cst_68 = arith.constant dense<0.000000e+00> : vector<2x128xf32>
    %239 = tpu.matmul %238, %5, %cst_68 {dimension_numbers = #tpu.dot_dimension_numbers<[1], [0], [0], [1], [0, 0, 1, 1], [], []>} : vector<2x32xf32>, vector<32x128xf32>, vector<2x128xf32> -> vector<2x128xf32>
    %cst_69 = arith.constant dense<0.000000e+00> : vector<2x128xf32>
    %240 = tpu.matmul %217, %6, %cst_69 {dimension_numbers = #tpu.dot_dimension_numbers<[1], [0], [0], [1], [0, 0, 1, 1], [], []>} : vector<2x32xf32>, vector<32x128xf32>, vector<2x128xf32> -> vector<2x128xf32>
    %241 = arith.addf %239, %240 : vector<2x128xf32>
    %242 = arith.addf %241, %9 : vector<2x128xf32>
    %243 = arith.negf %242 : vector<2x128xf32>
    %244 = math.exp %243 : vector<2x128xf32>
    %cst_70 = arith.constant 1.000000e+00 : f32
    %245 = vector.broadcast %cst_70 : f32 to vector<2x128xf32>
    %246 = arith.addf %245, %244 : vector<2x128xf32>
    %247 = arith.divf %245, %246 : vector<2x128xf32>
    %248 = math.tanh %242 : vector<2x128xf32>
    %249 = vector.extract_strided_slice %247 {offsets = [0, 0], sizes = [2, 32], strides = [1, 1]} : vector<2x128xf32> to vector<2x32xf32>
    %250 = vector.extract_strided_slice %247 {offsets = [0, 32], sizes = [2, 32], strides = [1, 1]} : vector<2x128xf32> to vector<2x32xf32>
    %251 = vector.extract_strided_slice %248 {offsets = [0, 64], sizes = [2, 32], strides = [1, 1]} : vector<2x128xf32> to vector<2x32xf32>
    %252 = vector.extract_strided_slice %247 {offsets = [0, 96], sizes = [2, 32], strides = [1, 1]} : vector<2x128xf32> to vector<2x32xf32>
    %253 = arith.mulf %250, %215 : vector<2x32xf32>
    %254 = arith.mulf %249, %251 : vector<2x32xf32>
    %255 = arith.addf %253, %254 : vector<2x32xf32>
    %256 = math.tanh %255 : vector<2x32xf32>
    %257 = arith.mulf %252, %256 : vector<2x32xf32>
    %c0_71 = arith.constant 0 : index
    %c6 = arith.constant 6 : index
    %c0_72 = arith.constant 0 : index
    %258 = vector.load %arg0[%c0_71, %c6, %c0_72] : memref<2x8x16xf32, #tpu.memory_space<vmem>>, vector<2x1x16xf32>
    %259 = vector.shape_cast %258 : vector<2x1x16xf32> to vector<2x16xf32>
    %cst_73 = arith.constant dense<0.000000e+00> : vector<2x128xf32>
    %260 = tpu.matmul %259, %0, %cst_73 {dimension_numbers = #tpu.dot_dimension_numbers<[1], [0], [0], [1], [0, 0, 1, 1], [], []>} : vector<2x16xf32>, vector<16x128xf32>, vector<2x128xf32> -> vector<2x128xf32>
    %cst_74 = arith.constant dense<0.000000e+00> : vector<2x128xf32>
    %261 = tpu.matmul %238, %1, %cst_74 {dimension_numbers = #tpu.dot_dimension_numbers<[1], [0], [0], [1], [0, 0, 1, 1], [], []>} : vector<2x32xf32>, vector<32x128xf32>, vector<2x128xf32> -> vector<2x128xf32>
    %262 = arith.addf %260, %261 : vector<2x128xf32>
    %263 = arith.addf %262, %4 : vector<2x128xf32>
    %264 = arith.negf %263 : vector<2x128xf32>
    %265 = math.exp %264 : vector<2x128xf32>
    %cst_75 = arith.constant 1.000000e+00 : f32
    %266 = vector.broadcast %cst_75 : f32 to vector<2x128xf32>
    %267 = arith.addf %266, %265 : vector<2x128xf32>
    %268 = arith.divf %266, %267 : vector<2x128xf32>
    %269 = math.tanh %263 : vector<2x128xf32>
    %270 = vector.extract_strided_slice %268 {offsets = [0, 0], sizes = [2, 32], strides = [1, 1]} : vector<2x128xf32> to vector<2x32xf32>
    %271 = vector.extract_strided_slice %268 {offsets = [0, 32], sizes = [2, 32], strides = [1, 1]} : vector<2x128xf32> to vector<2x32xf32>
    %272 = vector.extract_strided_slice %269 {offsets = [0, 64], sizes = [2, 32], strides = [1, 1]} : vector<2x128xf32> to vector<2x32xf32>
    %273 = vector.extract_strided_slice %268 {offsets = [0, 96], sizes = [2, 32], strides = [1, 1]} : vector<2x128xf32> to vector<2x32xf32>
    %274 = arith.mulf %271, %236 : vector<2x32xf32>
    %275 = arith.mulf %270, %272 : vector<2x32xf32>
    %276 = arith.addf %274, %275 : vector<2x32xf32>
    %277 = math.tanh %276 : vector<2x32xf32>
    %278 = arith.mulf %273, %277 : vector<2x32xf32>
    %cst_76 = arith.constant dense<0.000000e+00> : vector<2x128xf32>
    %279 = tpu.matmul %278, %5, %cst_76 {dimension_numbers = #tpu.dot_dimension_numbers<[1], [0], [0], [1], [0, 0, 1, 1], [], []>} : vector<2x32xf32>, vector<32x128xf32>, vector<2x128xf32> -> vector<2x128xf32>
    %cst_77 = arith.constant dense<0.000000e+00> : vector<2x128xf32>
    %280 = tpu.matmul %257, %6, %cst_77 {dimension_numbers = #tpu.dot_dimension_numbers<[1], [0], [0], [1], [0, 0, 1, 1], [], []>} : vector<2x32xf32>, vector<32x128xf32>, vector<2x128xf32> -> vector<2x128xf32>
    %281 = arith.addf %279, %280 : vector<2x128xf32>
    %282 = arith.addf %281, %9 : vector<2x128xf32>
    %283 = arith.negf %282 : vector<2x128xf32>
    %284 = math.exp %283 : vector<2x128xf32>
    %cst_78 = arith.constant 1.000000e+00 : f32
    %285 = vector.broadcast %cst_78 : f32 to vector<2x128xf32>
    %286 = arith.addf %285, %284 : vector<2x128xf32>
    %287 = arith.divf %285, %286 : vector<2x128xf32>
    %288 = math.tanh %282 : vector<2x128xf32>
    %289 = vector.extract_strided_slice %287 {offsets = [0, 0], sizes = [2, 32], strides = [1, 1]} : vector<2x128xf32> to vector<2x32xf32>
    %290 = vector.extract_strided_slice %287 {offsets = [0, 32], sizes = [2, 32], strides = [1, 1]} : vector<2x128xf32> to vector<2x32xf32>
    %291 = vector.extract_strided_slice %288 {offsets = [0, 64], sizes = [2, 32], strides = [1, 1]} : vector<2x128xf32> to vector<2x32xf32>
    %292 = vector.extract_strided_slice %287 {offsets = [0, 96], sizes = [2, 32], strides = [1, 1]} : vector<2x128xf32> to vector<2x32xf32>
    %293 = arith.mulf %290, %255 : vector<2x32xf32>
    %294 = arith.mulf %289, %291 : vector<2x32xf32>
    %295 = arith.addf %293, %294 : vector<2x32xf32>
    %296 = math.tanh %295 : vector<2x32xf32>
    %297 = arith.mulf %292, %296 : vector<2x32xf32>
    %c0_79 = arith.constant 0 : index
    %c7 = arith.constant 7 : index
    %c0_80 = arith.constant 0 : index
    %298 = vector.load %arg0[%c0_79, %c7, %c0_80] : memref<2x8x16xf32, #tpu.memory_space<vmem>>, vector<2x1x16xf32>
    %299 = vector.shape_cast %298 : vector<2x1x16xf32> to vector<2x16xf32>
    %cst_81 = arith.constant dense<0.000000e+00> : vector<2x128xf32>
    %300 = tpu.matmul %299, %0, %cst_81 {dimension_numbers = #tpu.dot_dimension_numbers<[1], [0], [0], [1], [0, 0, 1, 1], [], []>} : vector<2x16xf32>, vector<16x128xf32>, vector<2x128xf32> -> vector<2x128xf32>
    %cst_82 = arith.constant dense<0.000000e+00> : vector<2x128xf32>
    %301 = tpu.matmul %278, %1, %cst_82 {dimension_numbers = #tpu.dot_dimension_numbers<[1], [0], [0], [1], [0, 0, 1, 1], [], []>} : vector<2x32xf32>, vector<32x128xf32>, vector<2x128xf32> -> vector<2x128xf32>
    %302 = arith.addf %300, %301 : vector<2x128xf32>
    %303 = arith.addf %302, %4 : vector<2x128xf32>
    %304 = arith.negf %303 : vector<2x128xf32>
    %305 = math.exp %304 : vector<2x128xf32>
    %cst_83 = arith.constant 1.000000e+00 : f32
    %306 = vector.broadcast %cst_83 : f32 to vector<2x128xf32>
    %307 = arith.addf %306, %305 : vector<2x128xf32>
    %308 = arith.divf %306, %307 : vector<2x128xf32>
    %309 = math.tanh %303 : vector<2x128xf32>
    %310 = vector.extract_strided_slice %308 {offsets = [0, 0], sizes = [2, 32], strides = [1, 1]} : vector<2x128xf32> to vector<2x32xf32>
    %311 = vector.extract_strided_slice %308 {offsets = [0, 32], sizes = [2, 32], strides = [1, 1]} : vector<2x128xf32> to vector<2x32xf32>
    %312 = vector.extract_strided_slice %309 {offsets = [0, 64], sizes = [2, 32], strides = [1, 1]} : vector<2x128xf32> to vector<2x32xf32>
    %313 = vector.extract_strided_slice %308 {offsets = [0, 96], sizes = [2, 32], strides = [1, 1]} : vector<2x128xf32> to vector<2x32xf32>
    %314 = arith.mulf %311, %276 : vector<2x32xf32>
    %315 = arith.mulf %310, %312 : vector<2x32xf32>
    %316 = arith.addf %314, %315 : vector<2x32xf32>
    %317 = math.tanh %316 : vector<2x32xf32>
    %318 = arith.mulf %313, %317 : vector<2x32xf32>
    %cst_84 = arith.constant dense<0.000000e+00> : vector<2x128xf32>
    %319 = tpu.matmul %318, %5, %cst_84 {dimension_numbers = #tpu.dot_dimension_numbers<[1], [0], [0], [1], [0, 0, 1, 1], [], []>} : vector<2x32xf32>, vector<32x128xf32>, vector<2x128xf32> -> vector<2x128xf32>
    %cst_85 = arith.constant dense<0.000000e+00> : vector<2x128xf32>
    %320 = tpu.matmul %297, %6, %cst_85 {dimension_numbers = #tpu.dot_dimension_numbers<[1], [0], [0], [1], [0, 0, 1, 1], [], []>} : vector<2x32xf32>, vector<32x128xf32>, vector<2x128xf32> -> vector<2x128xf32>
    %321 = arith.addf %319, %320 : vector<2x128xf32>
    %322 = arith.addf %321, %9 : vector<2x128xf32>
    %323 = arith.negf %322 : vector<2x128xf32>
    %324 = math.exp %323 : vector<2x128xf32>
    %cst_86 = arith.constant 1.000000e+00 : f32
    %325 = vector.broadcast %cst_86 : f32 to vector<2x128xf32>
    %326 = arith.addf %325, %324 : vector<2x128xf32>
    %327 = arith.divf %325, %326 : vector<2x128xf32>
    %328 = math.tanh %322 : vector<2x128xf32>
    %329 = vector.extract_strided_slice %327 {offsets = [0, 0], sizes = [2, 32], strides = [1, 1]} : vector<2x128xf32> to vector<2x32xf32>
    %330 = vector.extract_strided_slice %327 {offsets = [0, 32], sizes = [2, 32], strides = [1, 1]} : vector<2x128xf32> to vector<2x32xf32>
    %331 = vector.extract_strided_slice %328 {offsets = [0, 64], sizes = [2, 32], strides = [1, 1]} : vector<2x128xf32> to vector<2x32xf32>
    %332 = vector.extract_strided_slice %327 {offsets = [0, 96], sizes = [2, 32], strides = [1, 1]} : vector<2x128xf32> to vector<2x32xf32>
    %333 = arith.mulf %330, %295 : vector<2x32xf32>
    %334 = arith.mulf %329, %331 : vector<2x32xf32>
    %335 = arith.addf %333, %334 : vector<2x32xf32>
    %336 = math.tanh %335 : vector<2x32xf32>
    %337 = arith.mulf %332, %336 : vector<2x32xf32>
    %cst_87 = arith.constant 0.000000e+00 : f32
    %338 = vector.broadcast %cst_87 : f32 to vector<2x32xf32>
    %339 = arith.maximumf %337, %338 : vector<2x32xf32>
    %c0_88 = arith.constant 0 : index
    %c0_89 = arith.constant 0 : index
    %340 = vector.load %arg9[%c0_88, %c0_89] : memref<32x1xf32, #tpu.memory_space<vmem>>, vector<32x1xf32>
    %cst_90 = arith.constant dense<0.000000e+00> : vector<2x1xf32>
    %341 = tpu.matmul %339, %340, %cst_90 {dimension_numbers = #tpu.dot_dimension_numbers<[1], [0], [0], [1], [0, 0, 1, 1], [], []>} : vector<2x32xf32>, vector<32x1xf32>, vector<2x1xf32> -> vector<2x1xf32>
    %c0_91 = arith.constant 0 : index
    %c0_92 = arith.constant 0 : index
    %342 = vector.load %arg10[%c0_91, %c0_92] : memref<1x1xf32, #tpu.memory_space<vmem>>, vector<1x1xf32>
    %343 = vector.broadcast %342 : vector<1x1xf32> to vector<2x1xf32>
    %344 = arith.addf %341, %343 : vector<2x1xf32>
    %c0_93 = arith.constant 0 : index
    %c0_94 = arith.constant 0 : index
    %345 = vector.load %arg11[%c0_93, %c0_94] : memref<2x1xf32, #tpu.memory_space<vmem>>, vector<2x1xf32>
    tpu.vector_store %arg11[%c0_93, %c0_94], %344 {strides = array<i32>} : memref<2x1xf32, #tpu.memory_space<vmem>>, vector<2x1xf32>,
    %c0_95 = arith.constant 0 : index
    %c0_96 = arith.constant 0 : index
    %c0_97 = arith.constant 0 : index
    %346 = vector.load %arg12[%c0_95, %c0_96, %c0_97] : memref<2x2x32xf32, #tpu.memory_space<vmem>>, vector<1x2x32xf32>
    %347 = vector.shape_cast %346 : vector<1x2x32xf32> to vector<2x32xf32>
    %348 = vector.shape_cast %318 : vector<2x32xf32> to vector<1x2x32xf32>
    tpu.vector_store %arg12[%c0_95, %c0_96, %c0_97], %348 {strides = array<i32>} : memref<2x2x32xf32, #tpu.memory_space<vmem>>, vector<1x2x32xf32>,
    %c0_98 = arith.constant 0 : index
    %c0_99 = arith.constant 0 : index
    %c0_100 = arith.constant 0 : index
    %349 = vector.load %arg13[%c0_98, %c0_99, %c0_100] : memref<2x2x32xf32, #tpu.memory_space<vmem>>, vector<1x2x32xf32>
    %350 = vector.shape_cast %349 : vector<1x2x32xf32> to vector<2x32xf32>
    %351 = vector.shape_cast %316 : vector<2x32xf32> to vector<1x2x32xf32>
    tpu.vector_store %arg13[%c0_98, %c0_99, %c0_100], %351 {strides = array<i32>} : memref<2x2x32xf32, #tpu.memory_space<vmem>>, vector<1x2x32xf32>,
    %c1_101 = arith.constant 1 : index
    %c0_102 = arith.constant 0 : index
    %c0_103 = arith.constant 0 : index
    %352 = vector.load %arg12[%c1_101, %c0_102, %c0_103] : memref<2x2x32xf32, #tpu.memory_space<vmem>>, vector<1x2x32xf32>
    %353 = vector.shape_cast %352 : vector<1x2x32xf32> to vector<2x32xf32>
    %354 = vector.shape_cast %337 : vector<2x32xf32> to vector<1x2x32xf32>
    tpu.vector_store %arg12[%c1_101, %c0_102, %c0_103], %354 {strides = array<i32>} : memref<2x2x32xf32, #tpu.memory_space<vmem>>, vector<1x2x32xf32>,
    %c1_104 = arith.constant 1 : index
    %c0_105 = arith.constant 0 : index
    %c0_106 = arith.constant 0 : index
    %355 = vector.load %arg13[%c1_104, %c0_105, %c0_106] : memref<2x2x32xf32, #tpu.memory_space<vmem>>, vector<1x2x32xf32>
    %356 = vector.shape_cast %355 : vector<1x2x32xf32> to vector<2x32xf32>
    %357 = vector.shape_cast %335 : vector<2x32xf32> to vector<1x2x32xf32>
    tpu.vector_store %arg13[%c1_104, %c0_105, %c0_106], %357 {strides = array<i32>} : memref<2x2x32xf32, #tpu.memory_space<vmem>>, vector<1x2x32xf32>,
    return
  }
}

</mosaic_0001>

<llo_original>
// kernel: lstm_net_forward.1
$region0: #{lstm_net_forward.1}
  #allocation0 [shape = 'u32[]', space=smem, size = 0x4, offset = 0x4, fixed_abs, tag = 'smem constant byte address 0x4 - core index']
  #allocation1 [shape = 'u32[144,128]{1,0:T(1,128)}', space=vmem, size = 0x12000, scoped, tag = 'internal scratch']
  #allocation2 [shape = 'f32[1,1]{1,0:T(1,128)S(1)}', space=vmem, size = 0x200, scoped, tag = 'scoped memory for lstm_net_forward.1']
  %s0 = inlined_call_operand.hbm [shape: f32[2,8,16], index: 0, kind: input, shape index: {}]
  %s1 = inlined_call_operand.vmem [shape: f32[2,2,32], index: 1, kind: input, shape index: {}]
  %s2 = inlined_call_operand.vmem [shape: f32[2,2,32], index: 2, kind: input, shape index: {}]
  %s3 = inlined_call_operand.hbm [shape: f32[16,128], index: 3, kind: input, shape index: {}]
  %s4 = inlined_call_operand.vmem [shape: f32[32,128], index: 4, kind: input, shape index: {}]
  %s5 = inlined_call_operand.vmem [shape: f32[1,128], index: 5, kind: input, shape index: {}]
  %s6 = inlined_call_operand.hbm [shape: f32[32,128], index: 6, kind: input, shape index: {}]
  %s7 = inlined_call_operand.hbm [shape: f32[32,128], index: 7, kind: input, shape index: {}]
  %s8 = inlined_call_operand.vmem [shape: f32[1,128], index: 8, kind: input, shape index: {}]
  %s9 = inlined_call_operand.vmem [shape: f32[32,1], index: 9, kind: input, shape index: {}]
  %s10 = inlined_call_operand.<no memory space> [shape: f32[1,1], index: 10, kind: input, shape index: {}]
  %s11 = inlined_call_operand.vmem [shape: f32[2,1], index: 11, kind: output, shape index: {0}]
  %s12 = inlined_call_operand.hbm [shape: f32[2,2,32], index: 12, kind: output, shape index: {1}]
  %s13 = inlined_call_operand.hbm [shape: f32[2,2,32], index: 13, kind: output, shape index: {2}]
  %14 = xla_tuple %s11, %s12, %s13
  %s15 = sld [smem:[#allocation0]]
  $region86: #{lstm_net_forward.1} parent=0
    _
  %s17 = ssub.s32 1, %s15
  %s18 = scalar_select 0, %s17, %s15
  %v19 = vstv %s10
  %20 = vst [vmem:[#allocation2] sm:$0x1] %v19
  $region1: #{lstm_net_forward.1} parent=0
    #allocation3 [shape = 'u8[8192]{0}', space=vmem, size = 0x2000, scoped, tag = 'input window, operand 0, single buffered']
    #allocation4 [shape = 's32[1]{0}', space=sflag, size = 0x4, scoped, tag = 'scoped memory for lstm_net_forward.1']
    #allocation5 [shape = 's32[1]{0}', space=sflag, size = 0x4, scoped, tag = 'scoped memory for lstm_net_forward.1']
    #allocation6 [shape = 'u8[8192]{0}', space=vmem, size = 0x2000, scoped, tag = 'input window, operand 3, single buffered']
    #allocation7 [shape = 's32[1]{0}', space=sflag, size = 0x4, scoped, tag = 'scoped memory for lstm_net_forward.1']
    #allocation8 [shape = 'u8[16384]{0}', space=vmem, size = 0x4000, scoped, tag = 'input window, operand 6, single buffered']
    #allocation9 [shape = 'u8[16384]{0}', space=vmem, size = 0x4000, scoped, tag = 'input window, operand 7, single buffered']
    #allocation10 [shape = 's32[1]{0}', space=sflag, size = 0x4, scoped, tag = 'scoped memory for lstm_net_forward.1']
    #allocation11 [shape = 'u8[2048]{0}', space=vmem, size = 0x800, scoped, tag = 'output window, operand 1, single buffered']
    #allocation12 [shape = 'u8[2048]{0}', space=vmem, size = 0x800, scoped, tag = 'output window, operand 2, single buffered']
    #allocation13 [shape = 's32[1]{0}', space=sflag, size = 0x4, scoped, tag = 'scoped memory for lstm_net_forward.1']
    %21 = vsyncpa [#allocation4], 0
    %22 = vsyncpa [#allocation7], 0
    %23 = vsyncpa [#allocation10], 0
    %24 = vsyncpa [#allocation5], 0
    %25 = vsyncpa [#allocation13], 0
    // Predicated region
    $region2: #{lstm_net_forward.1} parent=1 // pred_check
      _
    $region3: #{lstm_net_forward.1} parent=1 // pred_check_branch
      %27 = sbr.rel (0) target = $region5
    $region4: #{lstm_net_forward.1} parent=1 // pred_region
      %s29 = ssub.s32 256, 256
      %30 = vsyncadd [#allocation4], %s29
      %s31 = sshll.u32 [#allocation3], 4
      %s32 = int_to_ptr.vmem [resolvable:$true] %s31
      %37 = dma.hbm_to_vmem [thread:$0]  %s0, 256, %s32, [#allocation4], 128, 128, 8
    $region5: #{lstm_net_forward.1} parent=1 // pred_fallthru
      _
    // Predicated region
    $region6: #{lstm_net_forward.1} parent=1 // pred_check
      _
    $region7: #{lstm_net_forward.1} parent=1 // pred_check_branch
      %39 = sbr.rel (0) target = $region9
    $region8: #{lstm_net_forward.1} parent=1 // pred_region
      _
    $region9: #{lstm_net_forward.1} parent=1 // pred_fallthru
      _
    // Predicated region
    $region10: #{lstm_net_forward.1} parent=1 // pred_check
      _
    $region11: #{lstm_net_forward.1} parent=1 // pred_check_branch
      %41 = sbr.rel (0) target = $region13
    $region12: #{lstm_net_forward.1} parent=1 // pred_region
      _
    $region13: #{lstm_net_forward.1} parent=1 // pred_fallthru
      _
    // Predicated region
    $region14: #{lstm_net_forward.1} parent=1 // pred_check
      _
    $region15: #{lstm_net_forward.1} parent=1 // pred_check_branch
      %43 = sbr.rel (0) target = $region17
    $region16: #{lstm_net_forward.1} parent=1 // pred_region
      %s45 = ssub.s32 256, 256
      %46 = vsyncadd [#allocation7], %s45
      %s47 = sshll.u32 [#allocation6], 4
      %s48 = int_to_ptr.vmem [resolvable:$true] %s47
      %53 = dma.hbm_to_vmem [thread:$0]  %s3, 256, %s48, [#allocation7], 128, 128, 8
    $region17: #{lstm_net_forward.1} parent=1 // pred_fallthru
      _
    // Predicated region
    $region18: #{lstm_net_forward.1} parent=1 // pred_check
      _
    $region19: #{lstm_net_forward.1} parent=1 // pred_check_branch
      %55 = sbr.rel (0) target = $region21
    $region20: #{lstm_net_forward.1} parent=1 // pred_region
      _
    $region21: #{lstm_net_forward.1} parent=1 // pred_fallthru
      _
    // Predicated region
    $region22: #{lstm_net_forward.1} parent=1 // pred_check
      _
    $region23: #{lstm_net_forward.1} parent=1 // pred_check_branch
      %57 = sbr.rel (0) target = $region25
    $region24: #{lstm_net_forward.1} parent=1 // pred_region
      _
    $region25: #{lstm_net_forward.1} parent=1 // pred_fallthru
      _
    // Predicated region
    $region26: #{lstm_net_forward.1} parent=1 // pred_check
      _
    $region27: #{lstm_net_forward.1} parent=1 // pred_check_branch
      %59 = sbr.rel (0) target = $region29
    $region28: #{lstm_net_forward.1} parent=1 // pred_region
      %s61 = ssub.s32 512, 512
      %62 = vsyncadd [#allocation7], %s61
      %s63 = sshll.u32 [#allocation8], 4
      %s64 = int_to_ptr.vmem [resolvable:$true] %s63
      %69 = dma.hbm_to_vmem [thread:$0]  %s6, 512, %s64, [#allocation7], 128, 128, 8
    $region29: #{lstm_net_forward.1} parent=1 // pred_fallthru
      _
    // Predicated region
    $region30: #{lstm_net_forward.1} parent=1 // pred_check
      _
    $region31: #{lstm_net_forward.1} parent=1 // pred_check_branch
      %71 = sbr.rel (0) target = $region33
    $region32: #{lstm_net_forward.1} parent=1 // pred_region
      %s73 = ssub.s32 512, 512
      %74 = vsyncadd [#allocation10], %s73
      %s75 = sshll.u32 [#allocation9], 4
      %s76 = int_to_ptr.vmem [resolvable:$true] %s75
      %81 = dma.hbm_to_vmem [thread:$0]  %s7, 512, %s76, [#allocation10], 128, 128, 8
    $region33: #{lstm_net_forward.1} parent=1 // pred_fallthru
      _
    // Predicated region
    $region34: #{lstm_net_forward.1} parent=1 // pred_check
      _
    $region35: #{lstm_net_forward.1} parent=1 // pred_check_branch
      %83 = sbr.rel (0) target = $region37
    $region36: #{lstm_net_forward.1} parent=1 // pred_region
      _
    $region37: #{lstm_net_forward.1} parent=1 // pred_fallthru
      _
    // Predicated region
    $region38: #{lstm_net_forward.1} parent=1 // pred_check
      _
    $region39: #{lstm_net_forward.1} parent=1 // pred_check_branch
      %85 = sbr.rel (0) target = $region41
    $region40: #{lstm_net_forward.1} parent=1 // pred_region
      _
    $region41: #{lstm_net_forward.1} parent=1 // pred_fallthru
      _
    // Predicated region
    $region42: #{lstm_net_forward.1} parent=1 // pred_check
      _
    $region43: #{lstm_net_forward.1} parent=1 // pred_check_branch
      %87 = sbr.rel (0) target = $region45
    $region44: #{lstm_net_forward.1} parent=1 // pred_region
      _
    $region45: #{lstm_net_forward.1} parent=1 // pred_fallthru
      _
    // Predicated region
    $region46: #{lstm_net_forward.1} parent=1 // pred_check
      _
    $region47: #{lstm_net_forward.1} parent=1 // pred_check_branch
      %89 = sbr.rel (0) target = $region49
    $region48: #{lstm_net_forward.1} parent=1 // pred_region
      %90 = dma.done [#allocation4], 256
    $region49: #{lstm_net_forward.1} parent=1 // pred_fallthru
      _
    // Predicated region
    $region50: #{lstm_net_forward.1} parent=1 // pred_check
      _
    $region51: #{lstm_net_forward.1} parent=1 // pred_check_branch
      %92 = sbr.rel (0) target = $region53
    $region52: #{lstm_net_forward.1} parent=1 // pred_region
      %93 = dma.done [#allocation7], 256
    $region53: #{lstm_net_forward.1} parent=1 // pred_fallthru
      _
    // Predicated region
    $region54: #{lstm_net_forward.1} parent=1 // pred_check
      _
    $region55: #{lstm_net_forward.1} parent=1 // pred_check_branch
      %95 = sbr.rel (0) target = $region57
    $region56: #{lstm_net_forward.1} parent=1 // pred_region
      %96 = dma.done [#allocation7], 512
    $region57: #{lstm_net_forward.1} parent=1 // pred_fallthru
      _
    // Predicated region
    $region58: #{lstm_net_forward.1} parent=1 // pred_check
      _
    $region59: #{lstm_net_forward.1} parent=1 // pred_check_branch
      %98 = sbr.rel (0) target = $region61
    $region60: #{lstm_net_forward.1} parent=1 // pred_region
      %99 = dma.done [#allocation10], 512
    $region61: #{lstm_net_forward.1} parent=1 // pred_fallthru
      _
    %v100 = vld [vmem:[#allocation6] sm:$0xff]
    %v101 = vld [vmem:[#allocation6 + $0x8] sm:$0xff]
    %v102 = vld [vmem:[%s4] sm:$0xff]
    %v103 = vld [vmem:[%s4 + $0x8] sm:$0xff]
    %v104 = vld [vmem:[%s4 + $0x10] sm:$0xff]
    %v105 = vld [vmem:[%s4 + $0x18] sm:$0xff]
    %v106 = vld [vmem:[%s5] sm:$0x1]
    %v108 = vlaneseq
    %v109 = vshrl.u32 %v108, 7
    %v110 = vsub.s32 0, %v109
    %v111 = vrot.slane %v106, %v110
    %v113 = vld [vmem:[#allocation8] sm:$0xff]
    %v114 = vld [vmem:[#allocation8 + $0x8] sm:$0xff]
    %v115 = vld [vmem:[#allocation8 + $0x10] sm:$0xff]
    %v116 = vld [vmem:[#allocation8 + $0x18] sm:$0xff]
    %v117 = vld [vmem:[#allocation9] sm:$0xff]
    %v118 = vld [vmem:[#allocation9 + $0x8] sm:$0xff]
    %v119 = vld [vmem:[#allocation9 + $0x10] sm:$0xff]
    %v120 = vld [vmem:[#allocation9 + $0x18] sm:$0xff]
    %v121 = vld [vmem:[%s8] sm:$0x1]
    %v123 = vlaneseq
    %v124 = vshrl.u32 %v123, 7
    %v125 = vsub.s32 0, %v124
    %v126 = vrot.slane %v121, %v125
    %v128 = vld [vmem:[%s1] sm:$0x3]
    %s129 = scalar_lea.vmem %s1, 2
    %v130 = vld [vmem:[%s129] sm:$0x3]
    %v131 = vld [vmem:[%s2] sm:$0x3]
    %s132 = scalar_lea.vmem %s2, 2
    %v133 = vld [vmem:[%s132] sm:$0x3]
    %v134 = vld [vmem:[#allocation3] sm:$0x1]
    %v135 = vld [vmem:[#allocation3 + $0x8] sm:$0x1]
    %vm136 = vcmask 261120
    %v138 = vsel %vm136, %v128, 0
    %140 = vmatprep.subr.mxu0 0.0
    %141 = vmatpush1.msra.mxu0 0.0
    %142 = vmatprep.subr.mxu0 0.0
    %143 = vmatpush1.msra.mxu0 0.0
    %144 = vmatprep.subr.mxu0 0.0
    %145 = vmatpush1.msra.mxu0 0.0
    %146 = vmatprep.subr.mxu0 0.0
    %147 = vmatpush1.msra.mxu0 0.0
    %148 = vmatprep.subr.mxu0 0.0
    %149 = vmatpush1.msra.mxu0 0.0
    %150 = vmatprep.subr.mxu0 0.0
    %151 = vmatpush1.msra.mxu0 0.0
    %152 = vmatprep.subr.mxu0 0.0
    %153 = vmatpush1.msra.mxu0 0.0
    %154 = vmatprep.subr.mxu0 0.0
    %155 = vmatpush1.msra.mxu0 0.0
    %156 = vmatprep.subr.mxu0 0.0
    %157 = vmatpush1.msra.mxu0 0.0
    %158 = vmatprep.subr.mxu0 0.0
    %159 = vmatpush1.msra.mxu0 0.0
    %160 = vmatprep.subr.mxu0 0.0
    %161 = vmatpush1.msra.mxu0 0.0
    %162 = vmatprep.subr.mxu0 0.0
    %163 = vmatpush1.msra.mxu0 0.0
    %164 = vmatprep.subr.mxu0 0.0
    %165 = vmatpush1.msra.mxu0 %v105
    %166 = vmatprep.subr.mxu0 0.0
    %167 = vmatpush1.msra.mxu0 %v104
    %168 = vmatprep.subr.mxu0 0.0
    %169 = vmatpush1.msra.mxu0 %v103
    %170 = vmatprep.subr.mxu0 0.0
    %171 = vmatpush1.msra.mxu0 %v102
    %172 = vmatprep.subr.mxu0 0.0
    %173 = vmatpush2.msra.mxu0 0.0
    %174 = vmatprep.subr.mxu0 0.0
    %175 = vmatpush2.msra.mxu0 0.0
    %176 = vmatprep.subr.mxu0 0.0
    %177 = vmatpush2.msra.mxu0 0.0
    %178 = vmatprep.subr.mxu0 0.0
    %179 = vmatpush2.msra.mxu0 0.0
    %180 = vmatprep.subr.mxu0 0.0
    %181 = vmatpush2.msra.mxu0 0.0
    %182 = vmatprep.subr.mxu0 0.0
    %183 = vmatpush2.msra.mxu0 0.0
    %184 = vmatprep.subr.mxu0 0.0
    %185 = vmatpush2.msra.mxu0 0.0
    %186 = vmatprep.subr.mxu0 0.0
    %187 = vmatpush2.msra.mxu0 0.0
    %188 = vmatprep.subr.mxu0 0.0
    %189 = vmatpush2.msra.mxu0 0.0
    %190 = vmatprep.subr.mxu0 0.0
    %191 = vmatpush2.msra.mxu0 0.0
    %192 = vmatprep.subr.mxu0 0.0
    %193 = vmatpush2.msra.mxu0 0.0
    %194 = vmatprep.subr.mxu0 0.0
    %195 = vmatpush2.msra.mxu0 0.0
    %196 = vmatprep.subr.mxu0 0.0
    %197 = vmatpush2.msra.mxu0 0.0
    %198 = vmatprep.subr.mxu0 0.0
    %199 = vmatpush2.msra.mxu0 0.0
    %200 = vmatprep.subr.mxu0 0.0
    %201 = vmatpush2.msra.mxu0 0.0
    %202 = vmatprep.subr.mxu0 0.0
    %203 = vmatpush2.msra.mxu0 0.0
    %204 = vmatprep.mubr.f32.mxu0 0.0
    %205 = vmatmul.mubr.f32.gmra.mxu0 %v138
    %v206 = vpop.f32.mrf.mxu0
    %v207 = vadd.f32 0.0, %v206
    %v208 = vpop.f32.mrf.mxu0
    %209 = vdwg.mxu0
    %v212 = vrot.slane %v135, 7
    %vm213 = vcmask 1041409
    %v214 = vsel %vm213, %v212, %v134
    %vm215 = vcmask 130048
    %v216 = vsel %vm215, %v214, 0
    %218 = vmatprep.subr.mxu0 0.0
    %219 = vmatpush1.msra.mxu0 0.0
    %220 = vmatprep.subr.mxu0 0.0
    %221 = vmatpush1.msra.mxu0 0.0
    %222 = vmatprep.subr.mxu0 0.0
    %223 = vmatpush1.msra.mxu0 0.0
    %224 = vmatprep.subr.mxu0 0.0
    %225 = vmatpush1.msra.mxu0 0.0
    %226 = vmatprep.subr.mxu0 0.0
    %227 = vmatpush1.msra.mxu0 0.0
    %228 = vmatprep.subr.mxu0 0.0
    %229 = vmatpush1.msra.mxu0 0.0
    %230 = vmatprep.subr.mxu0 0.0
    %231 = vmatpush1.msra.mxu0 0.0
    %232 = vmatprep.subr.mxu0 0.0
    %233 = vmatpush1.msra.mxu0 0.0
    %234 = vmatprep.subr.mxu0 0.0
    %235 = vmatpush1.msra.mxu0 0.0
    %236 = vmatprep.subr.mxu0 0.0
    %237 = vmatpush1.msra.mxu0 0.0
    %238 = vmatprep.subr.mxu0 0.0
    %239 = vmatpush1.msra.mxu0 0.0
    %240 = vmatprep.subr.mxu0 0.0
    %241 = vmatpush1.msra.mxu0 0.0
    %242 = vmatprep.subr.mxu0 0.0
    %243 = vmatpush1.msra.mxu0 0.0
    %244 = vmatprep.subr.mxu0 0.0
    %245 = vmatpush1.msra.mxu0 0.0
    %246 = vmatprep.subr.mxu0 0.0
    %247 = vmatpush1.msra.mxu0 %v101
    %248 = vmatprep.subr.mxu0 0.0
    %249 = vmatpush1.msra.mxu0 %v100
    %250 = vmatprep.subr.mxu0 0.0
    %251 = vmatpush2.msra.mxu0 0.0
    %252 = vmatprep.subr.mxu0 0.0
    %253 = vmatpush2.msra.mxu0 0.0
    %254 = vmatprep.subr.mxu0 0.0
    %255 = vmatpush2.msra.mxu0 0.0
    %256 = vmatprep.subr.mxu0 0.0
    %257 = vmatpush2.msra.mxu0 0.0
    %258 = vmatprep.subr.mxu0 0.0
    %259 = vmatpush2.msra.mxu0 0.0
    %260 = vmatprep.subr.mxu0 0.0
    %261 = vmatpush2.msra.mxu0 0.0
    %262 = vmatprep.subr.mxu0 0.0
    %263 = vmatpush2.msra.mxu0 0.0
    %264 = vmatprep.subr.mxu0 0.0
    %265 = vmatpush2.msra.mxu0 0.0
    %266 = vmatprep.subr.mxu0 0.0
    %267 = vmatpush2.msra.mxu0 0.0
    %268 = vmatprep.subr.mxu0 0.0
    %269 = vmatpush2.msra.mxu0 0.0
    %270 = vmatprep.subr.mxu0 0.0
    %271 = vmatpush2.msra.mxu0 0.0
    %272 = vmatprep.subr.mxu0 0.0
    %273 = vmatpush2.msra.mxu0 0.0
    %274 = vmatprep.subr.mxu0 0.0
    %275 = vmatpush2.msra.mxu0 0.0
    %276 = vmatprep.subr.mxu0 0.0
    %277 = vmatpush2.msra.mxu0 0.0
    %278 = vmatprep.subr.mxu0 0.0
    %279 = vmatpush2.msra.mxu0 0.0
    %280 = vmatprep.subr.mxu0 0.0
    %281 = vmatpush2.msra.mxu0 0.0
    %282 = vmatprep.mubr.f32.mxu0 0.0
    %283 = vmatmul.mubr.f32.gmra.mxu0 %v216
    %v284 = vpop.f32.mrf.mxu0
    %v285 = vadd.f32 %v207, %v284
    %v286 = vpop.f32.mrf.mxu0
    %287 = vdwg.mxu0
    %v288 = vadd.f32 %v285, %v111
    %v289 = vxor.u32 %v288, 2147483648
    %v290 = vmul.f32 %v289, 1.442695
    %v291 = vpow.pop %v290
    %v292 = vadd.f32 %v291, 1.0
    %v293 = vrcp.pop %v292
    %v294 = vmul.f32 1.0, %v293
    %v295 = vtanh.pop %v288
    %297 = vrot.lane.b32.xlu0 %v131, 32
    %v298 = vpop.permute.xlu0 %297
    %v300 = vmul.f32 %v294, %v298
    %302 = vrot.lane.b32.xlu0 %v295, 64
    %v303 = vpop.permute.xlu0 %302
    %v305 = vmul.f32 %v294, %v303
    %307 = vrot.lane.b32.xlu0 %v305, 32
    %v308 = vpop.permute.xlu0 %307
    %v310 = vadd.f32 %v300, %v308
    %v311 = vtanh.pop %v310
    %313 = vrot.lane.b32.xlu0 %v311, 64
    %v314 = vpop.permute.xlu0 %313
    %v316 = vmul.f32 %v294, %v314
    %v318 = vsel %vm136, %v130, 0
    %320 = vmatprep.subr.mxu0 0.0
    %321 = vmatpush1.msra.mxu0 0.0
    %322 = vmatprep.subr.mxu0 0.0
    %323 = vmatpush1.msra.mxu0 0.0
    %324 = vmatprep.subr.mxu0 0.0
    %325 = vmatpush1.msra.mxu0 0.0
    %326 = vmatprep.subr.mxu0 0.0
    %327 = vmatpush1.msra.mxu0 0.0
    %328 = vmatprep.subr.mxu0 0.0
    %329 = vmatpush1.msra.mxu0 0.0
    %330 = vmatprep.subr.mxu0 0.0
    %331 = vmatpush1.msra.mxu0 0.0
    %332 = vmatprep.subr.mxu0 0.0
    %333 = vmatpush1.msra.mxu0 0.0
    %334 = vmatprep.subr.mxu0 0.0
    %335 = vmatpush1.msra.mxu0 0.0
    %336 = vmatprep.subr.mxu0 0.0
    %337 = vmatpush1.msra.mxu0 0.0
    %338 = vmatprep.subr.mxu0 0.0
    %339 = vmatpush1.msra.mxu0 0.0
    %340 = vmatprep.subr.mxu0 0.0
    %341 = vmatpush1.msra.mxu0 0.0
    %342 = vmatprep.subr.mxu0 0.0
    %343 = vmatpush1.msra.mxu0 0.0
    %344 = vmatprep.subr.mxu0 0.0
    %345 = vmatpush1.msra.mxu0 %v120
    %346 = vmatprep.subr.mxu0 0.0
    %347 = vmatpush1.msra.mxu0 %v119
    %348 = vmatprep.subr.mxu0 0.0
    %349 = vmatpush1.msra.mxu0 %v118
    %350 = vmatprep.subr.mxu0 0.0
    %351 = vmatpush1.msra.mxu0 %v117
    %352 = vmatprep.subr.mxu0 0.0
    %353 = vmatpush2.msra.mxu0 0.0
    %354 = vmatprep.subr.mxu0 0.0
    %355 = vmatpush2.msra.mxu0 0.0
    %356 = vmatprep.subr.mxu0 0.0
    %357 = vmatpush2.msra.mxu0 0.0
    %358 = vmatprep.subr.mxu0 0.0
    %359 = vmatpush2.msra.mxu0 0.0
    %360 = vmatprep.subr.mxu0 0.0
    %361 = vmatpush2.msra.mxu0 0.0
    %362 = vmatprep.subr.mxu0 0.0
    %363 = vmatpush2.msra.mxu0 0.0
    %364 = vmatprep.subr.mxu0 0.0
    %365 = vmatpush2.msra.mxu0 0.0
    %366 = vmatprep.subr.mxu0 0.0
    %367 = vmatpush2.msra.mxu0 0.0
    %368 = vmatprep.subr.mxu0 0.0
    %369 = vmatpush2.msra.mxu0 0.0
    %370 = vmatprep.subr.mxu0 0.0
    %371 = vmatpush2.msra.mxu0 0.0
    %372 = vmatprep.subr.mxu0 0.0
    %373 = vmatpush2.msra.mxu0 0.0
    %374 = vmatprep.subr.mxu0 0.0
    %375 = vmatpush2.msra.mxu0 0.0
    %376 = vmatprep.subr.mxu0 0.0
    %377 = vmatpush2.msra.mxu0 0.0
    %378 = vmatprep.subr.mxu0 0.0
    %379 = vmatpush2.msra.mxu0 0.0
    %380 = vmatprep.subr.mxu0 0.0
    %381 = vmatpush2.msra.mxu0 0.0
    %382 = vmatprep.subr.mxu0 0.0
    %383 = vmatpush2.msra.mxu0 0.0
    %384 = vmatprep.mubr.f32.mxu0 0.0
    %385 = vmatmul.mubr.f32.gmra.mxu0 %v318
    %v386 = vpop.f32.mrf.mxu0
    %v387 = vadd.f32 0.0, %v386
    %v388 = vpop.f32.mrf.mxu0
    %389 = vdwg.mxu0
    %391 = vrot.lane.b32.xlu0 %v316, 32
    %v392 = vpop.permute.xlu0 %391
    %v393 = vsel %vm136, %v392, 0
    %395 = vmatprep.subr.mxu0 0.0
    %396 = vmatpush1.msra.mxu0 0.0
    %397 = vmatprep.subr.mxu0 0.0
    %398 = vmatpush1.msra.mxu0 0.0
    %399 = vmatprep.subr.mxu0 0.0
    %400 = vmatpush1.msra.mxu0 0.0
    %401 = vmatprep.subr.mxu0 0.0
    %402 = vmatpush1.msra.mxu0 0.0
    %403 = vmatprep.subr.mxu0 0.0
    %404 = vmatpush1.msra.mxu0 0.0
    %405 = vmatprep.subr.mxu0 0.0
    %406 = vmatpush1.msra.mxu0 0.0
    %407 = vmatprep.subr.mxu0 0.0
    %408 = vmatpush1.msra.mxu0 0.0
    %409 = vmatprep.subr.mxu0 0.0
    %410 = vmatpush1.msra.mxu0 0.0
    %411 = vmatprep.subr.mxu0 0.0
    %412 = vmatpush1.msra.mxu0 0.0
    %413 = vmatprep.subr.mxu0 0.0
    %414 = vmatpush1.msra.mxu0 0.0
    %415 = vmatprep.subr.mxu0 0.0
    %416 = vmatpush1.msra.mxu0 0.0
    %417 = vmatprep.subr.mxu0 0.0
    %418 = vmatpush1.msra.mxu0 0.0
    %419 = vmatprep.subr.mxu0 0.0
    %420 = vmatpush1.msra.mxu0 %v116
    %421 = vmatprep.subr.mxu0 0.0
    %422 = vmatpush1.msra.mxu0 %v115
    %423 = vmatprep.subr.mxu0 0.0
    %424 = vmatpush1.msra.mxu0 %v114
    %425 = vmatprep.subr.mxu0 0.0
    %426 = vmatpush1.msra.mxu0 %v113
    %427 = vmatprep.subr.mxu0 0.0
    %428 = vmatpush2.msra.mxu0 0.0
    %429 = vmatprep.subr.mxu0 0.0
    %430 = vmatpush2.msra.mxu0 0.0
    %431 = vmatprep.subr.mxu0 0.0
    %432 = vmatpush2.msra.mxu0 0.0
    %433 = vmatprep.subr.mxu0 0.0
    %434 = vmatpush2.msra.mxu0 0.0
    %435 = vmatprep.subr.mxu0 0.0
    %436 = vmatpush2.msra.mxu0 0.0
    %437 = vmatprep.subr.mxu0 0.0
    %438 = vmatpush2.msra.mxu0 0.0
    %439 = vmatprep.subr.mxu0 0.0
    %440 = vmatpush2.msra.mxu0 0.0
    %441 = vmatprep.subr.mxu0 0.0
    %442 = vmatpush2.msra.mxu0 0.0
    %443 = vmatprep.subr.mxu0 0.0
    %444 = vmatpush2.msra.mxu0 0.0
    %445 = vmatprep.subr.mxu0 0.0
    %446 = vmatpush2.msra.mxu0 0.0
    %447 = vmatprep.subr.mxu0 0.0
    %448 = vmatpush2.msra.mxu0 0.0
    %449 = vmatprep.subr.mxu0 0.0
    %450 = vmatpush2.msra.mxu0 0.0
    %451 = vmatprep.subr.mxu0 0.0
    %452 = vmatpush2.msra.mxu0 0.0
    %453 = vmatprep.subr.mxu0 0.0
    %454 = vmatpush2.msra.mxu0 0.0
    %455 = vmatprep.subr.mxu0 0.0
    %456 = vmatpush2.msra.mxu0 0.0
    %457 = vmatprep.subr.mxu0 0.0
    %458 = vmatpush2.msra.mxu0 0.0
    %459 = vmatprep.mubr.f32.mxu0 0.0
    %460 = vmatmul.mubr.f32.gmra.mxu0 %v393
    %v461 = vpop.f32.mrf.mxu0
    %v462 = vadd.f32 %v387, %v461
    %v463 = vpop.f32.mrf.mxu0
    %464 = vdwg.mxu0
    %v465 = vadd.f32 %v462, %v126
    %v466 = vxor.u32 %v465, 2147483648
    %v467 = vmul.f32 %v466, 1.442695
    %v468 = vpow.pop %v467
    %v469 = vadd.f32 %v468, 1.0
    %v470 = vrcp.pop %v469
    %v471 = vmul.f32 1.0, %v470
    %v472 = vtanh.pop %v465
    %474 = vrot.lane.b32.xlu0 %v133, 32
    %v475 = vpop.permute.xlu0 %474
    %v477 = vmul.f32 %v471, %v475
    %479 = vrot.lane.b32.xlu0 %v472, 64
    %v480 = vpop.permute.xlu0 %479
    %v482 = vmul.f32 %v471, %v480
    %484 = vrot.lane.b32.xlu0 %v482, 32
    %v485 = vpop.permute.xlu0 %484
    %v487 = vadd.f32 %v477, %v485
    %v488 = vtanh.pop %v487
    %490 = vrot.lane.b32.xlu0 %v488, 64
    %v491 = vpop.permute.xlu0 %490
    %v493 = vmul.f32 %v471, %v491
    %v494 = vld [vmem:[#allocation3 + $0x1] sm:$0x1]
    %v495 = vld [vmem:[#allocation3 + $0x9] sm:$0x1]
    %496 = vmatprep.subr.mxu0 0.0
    %497 = vmatpush1.msra.mxu0 0.0
    %498 = vmatprep.subr.mxu0 0.0
    %499 = vmatpush1.msra.mxu0 0.0
    %500 = vmatprep.subr.mxu0 0.0
    %501 = vmatpush1.msra.mxu0 0.0
    %502 = vmatprep.subr.mxu0 0.0
    %503 = vmatpush1.msra.mxu0 0.0
    %504 = vmatprep.subr.mxu0 0.0
    %505 = vmatpush1.msra.mxu0 0.0
    %506 = vmatprep.subr.mxu0 0.0
    %507 = vmatpush1.msra.mxu0 0.0
    %508 = vmatprep.subr.mxu0 0.0
    %509 = vmatpush1.msra.mxu0 0.0
    %510 = vmatprep.subr.mxu0 0.0
    %511 = vmatpush1.msra.mxu0 0.0
    %512 = vmatprep.subr.mxu0 0.0
    %513 = vmatpush1.msra.mxu0 0.0
    %514 = vmatprep.subr.mxu0 0.0
    %515 = vmatpush1.msra.mxu0 0.0
    %516 = vmatprep.subr.mxu0 0.0
    %517 = vmatpush1.msra.mxu0 0.0
    %518 = vmatprep.subr.mxu0 0.0
    %519 = vmatpush1.msra.mxu0 0.0
    %520 = vmatprep.subr.mxu0 0.0
    %521 = vmatpush1.msra.mxu0 %v105
    %522 = vmatprep.subr.mxu0 0.0
    %523 = vmatpush1.msra.mxu0 %v104
    %524 = vmatprep.subr.mxu0 0.0
    %525 = vmatpush1.msra.mxu0 %v103
    %526 = vmatprep.subr.mxu0 0.0
    %527 = vmatpush1.msra.mxu0 %v102
    %528 = vmatprep.subr.mxu0 0.0
    %529 = vmatpush2.msra.mxu0 0.0
    %530 = vmatprep.subr.mxu0 0.0
    %531 = vmatpush2.msra.mxu0 0.0
    %532 = vmatprep.subr.mxu0 0.0
    %533 = vmatpush2.msra.mxu0 0.0
    %534 = vmatprep.subr.mxu0 0.0
    %535 = vmatpush2.msra.mxu0 0.0
    %536 = vmatprep.subr.mxu0 0.0
    %537 = vmatpush2.msra.mxu0 0.0
    %538 = vmatprep.subr.mxu0 0.0
    %539 = vmatpush2.msra.mxu0 0.0
    %540 = vmatprep.subr.mxu0 0.0
    %541 = vmatpush2.msra.mxu0 0.0
    %542 = vmatprep.subr.mxu0 0.0
    %543 = vmatpush2.msra.mxu0 0.0
    %544 = vmatprep.subr.mxu0 0.0
    %545 = vmatpush2.msra.mxu0 0.0
    %546 = vmatprep.subr.mxu0 0.0
    %547 = vmatpush2.msra.mxu0 0.0
    %548 = vmatprep.subr.mxu0 0.0
    %549 = vmatpush2.msra.mxu0 0.0
    %550 = vmatprep.subr.mxu0 0.0
    %551 = vmatpush2.msra.mxu0 0.0
    %552 = vmatprep.subr.mxu0 0.0
    %553 = vmatpush2.msra.mxu0 0.0
    %554 = vmatprep.subr.mxu0 0.0
    %555 = vmatpush2.msra.mxu0 0.0
    %556 = vmatprep.subr.mxu0 0.0
    %557 = vmatpush2.msra.mxu0 0.0
    %558 = vmatprep.subr.mxu0 0.0
    %559 = vmatpush2.msra.mxu0 0.0
    %560 = vmatprep.mubr.f32.mxu0 0.0
    %561 = vmatmul.mubr.f32.gmra.mxu0 %v393
    %v562 = vpop.f32.mrf.mxu0
    %v563 = vadd.f32 0.0, %v562
    %v564 = vpop.f32.mrf.mxu0
    %565 = vdwg.mxu0
    %v568 = vrot.slane %v495, 7
    %v569 = vsel %vm213, %v568, %v494
    %v570 = vsel %vm215, %v569, 0
    %572 = vmatprep.subr.mxu0 0.0
    %573 = vmatpush1.msra.mxu0 0.0
    %574 = vmatprep.subr.mxu0 0.0
    %575 = vmatpush1.msra.mxu0 0.0
    %576 = vmatprep.subr.mxu0 0.0
    %577 = vmatpush1.msra.mxu0 0.0
    %578 = vmatprep.subr.mxu0 0.0
    %579 = vmatpush1.msra.mxu0 0.0
    %580 = vmatprep.subr.mxu0 0.0
    %581 = vmatpush1.msra.mxu0 0.0
    %582 = vmatprep.subr.mxu0 0.0
    %583 = vmatpush1.msra.mxu0 0.0
    %584 = vmatprep.subr.mxu0 0.0
    %585 = vmatpush1.msra.mxu0 0.0
    %586 = vmatprep.subr.mxu0 0.0
    %587 = vmatpush1.msra.mxu0 0.0
    %588 = vmatprep.subr.mxu0 0.0
    %589 = vmatpush1.msra.mxu0 0.0
    %590 = vmatprep.subr.mxu0 0.0
    %591 = vmatpush1.msra.mxu0 0.0
    %592 = vmatprep.subr.mxu0 0.0
    %593 = vmatpush1.msra.mxu0 0.0
    %594 = vmatprep.subr.mxu0 0.0
    %595 = vmatpush1.msra.mxu0 0.0
    %596 = vmatprep.subr.mxu0 0.0
    %597 = vmatpush1.msra.mxu0 0.0
    %598 = vmatprep.subr.mxu0 0.0
    %599 = vmatpush1.msra.mxu0 0.0
    %600 = vmatprep.subr.mxu0 0.0
    %601 = vmatpush1.msra.mxu0 %v101
    %602 = vmatprep.subr.mxu0 0.0
    %603 = vmatpush1.msra.mxu0 %v100
    %604 = vmatprep.subr.mxu0 0.0
    %605 = vmatpush2.msra.mxu0 0.0
    %606 = vmatprep.subr.mxu0 0.0
    %607 = vmatpush2.msra.mxu0 0.0
    %608 = vmatprep.subr.mxu0 0.0
    %609 = vmatpush2.msra.mxu0 0.0
    %610 = vmatprep.subr.mxu0 0.0
    %611 = vmatpush2.msra.mxu0 0.0
    %612 = vmatprep.subr.mxu0 0.0
    %613 = vmatpush2.msra.mxu0 0.0
    %614 = vmatprep.subr.mxu0 0.0
    %615 = vmatpush2.msra.mxu0 0.0
    %616 = vmatprep.subr.mxu0 0.0
    %617 = vmatpush2.msra.mxu0 0.0
    %618 = vmatprep.subr.mxu0 0.0
    %619 = vmatpush2.msra.mxu0 0.0
    %620 = vmatprep.subr.mxu0 0.0
    %621 = vmatpush2.msra.mxu0 0.0
    %622 = vmatprep.subr.mxu0 0.0
    %623 = vmatpush2.msra.mxu0 0.0
    %624 = vmatprep.subr.mxu0 0.0
    %625 = vmatpush2.msra.mxu0 0.0
    %626 = vmatprep.subr.mxu0 0.0
    %627 = vmatpush2.msra.mxu0 0.0
    %628 = vmatprep.subr.mxu0 0.0
    %629 = vmatpush2.msra.mxu0 0.0
    %630 = vmatprep.subr.mxu0 0.0
    %631 = vmatpush2.msra.mxu0 0.0
    %632 = vmatprep.subr.mxu0 0.0
    %633 = vmatpush2.msra.mxu0 0.0
    %634 = vmatprep.subr.mxu0 0.0
    %635 = vmatpush2.msra.mxu0 0.0
    %636 = vmatprep.mubr.f32.mxu0 0.0
    %637 = vmatmul.mubr.f32.gmra.mxu0 %v570
    %v638 = vpop.f32.mrf.mxu0
    %v639 = vadd.f32 %v563, %v638
    %v640 = vpop.f32.mrf.mxu0
    %641 = vdwg.mxu0
    %v642 = vadd.f32 %v639, %v111
    %v643 = vxor.u32 %v642, 2147483648
    %v644 = vmul.f32 %v643, 1.442695
    %v645 = vpow.pop %v644
    %v646 = vadd.f32 %v645, 1.0
    %v647 = vrcp.pop %v646
    %v648 = vmul.f32 1.0, %v647
    %v649 = vtanh.pop %v642
    %v650 = vmul.f32 %v648, %v310
    %652 = vrot.lane.b32.xlu0 %v649, 64
    %v653 = vpop.permute.xlu0 %652
    %v655 = vmul.f32 %v648, %v653
    %657 = vrot.lane.b32.xlu0 %v655, 32
    %v658 = vpop.permute.xlu0 %657
    %v660 = vadd.f32 %v650, %v658
    %v661 = vtanh.pop %v660
    %663 = vrot.lane.b32.xlu0 %v661, 64
    %v664 = vpop.permute.xlu0 %663
    %v666 = vmul.f32 %v648, %v664
    %668 = vrot.lane.b32.xlu0 %v493, 32
    %v669 = vpop.permute.xlu0 %668
    %v670 = vsel %vm136, %v669, 0
    %672 = vmatprep.subr.mxu0 0.0
    %673 = vmatpush1.msra.mxu0 0.0
    %674 = vmatprep.subr.mxu0 0.0
    %675 = vmatpush1.msra.mxu0 0.0
    %676 = vmatprep.subr.mxu0 0.0
    %677 = vmatpush1.msra.mxu0 0.0
    %678 = vmatprep.subr.mxu0 0.0
    %679 = vmatpush1.msra.mxu0 0.0
    %680 = vmatprep.subr.mxu0 0.0
    %681 = vmatpush1.msra.mxu0 0.0
    %682 = vmatprep.subr.mxu0 0.0
    %683 = vmatpush1.msra.mxu0 0.0
    %684 = vmatprep.subr.mxu0 0.0
    %685 = vmatpush1.msra.mxu0 0.0
    %686 = vmatprep.subr.mxu0 0.0
    %687 = vmatpush1.msra.mxu0 0.0
    %688 = vmatprep.subr.mxu0 0.0
    %689 = vmatpush1.msra.mxu0 0.0
    %690 = vmatprep.subr.mxu0 0.0
    %691 = vmatpush1.msra.mxu0 0.0
    %692 = vmatprep.subr.mxu0 0.0
    %693 = vmatpush1.msra.mxu0 0.0
    %694 = vmatprep.subr.mxu0 0.0
    %695 = vmatpush1.msra.mxu0 0.0
    %696 = vmatprep.subr.mxu0 0.0
    %697 = vmatpush1.msra.mxu0 %v120
    %698 = vmatprep.subr.mxu0 0.0
    %699 = vmatpush1.msra.mxu0 %v119
    %700 = vmatprep.subr.mxu0 0.0
    %701 = vmatpush1.msra.mxu0 %v118
    %702 = vmatprep.subr.mxu0 0.0
    %703 = vmatpush1.msra.mxu0 %v117
    %704 = vmatprep.subr.mxu0 0.0
    %705 = vmatpush2.msra.mxu0 0.0
    %706 = vmatprep.subr.mxu0 0.0
    %707 = vmatpush2.msra.mxu0 0.0
    %708 = vmatprep.subr.mxu0 0.0
    %709 = vmatpush2.msra.mxu0 0.0
    %710 = vmatprep.subr.mxu0 0.0
    %711 = vmatpush2.msra.mxu0 0.0
    %712 = vmatprep.subr.mxu0 0.0
    %713 = vmatpush2.msra.mxu0 0.0
    %714 = vmatprep.subr.mxu0 0.0
    %715 = vmatpush2.msra.mxu0 0.0
    %716 = vmatprep.subr.mxu0 0.0
    %717 = vmatpush2.msra.mxu0 0.0
    %718 = vmatprep.subr.mxu0 0.0
    %719 = vmatpush2.msra.mxu0 0.0
    %720 = vmatprep.subr.mxu0 0.0
    %721 = vmatpush2.msra.mxu0 0.0
    %722 = vmatprep.subr.mxu0 0.0
    %723 = vmatpush2.msra.mxu0 0.0
    %724 = vmatprep.subr.mxu0 0.0
    %725 = vmatpush2.msra.mxu0 0.0
    %726 = vmatprep.subr.mxu0 0.0
    %727 = vmatpush2.msra.mxu0 0.0
    %728 = vmatprep.subr.mxu0 0.0
    %729 = vmatpush2.msra.mxu0 0.0
    %730 = vmatprep.subr.mxu0 0.0
    %731 = vmatpush2.msra.mxu0 0.0
    %732 = vmatprep.subr.mxu0 0.0
    %733 = vmatpush2.msra.mxu0 0.0
    %734 = vmatprep.subr.mxu0 0.0
    %735 = vmatpush2.msra.mxu0 0.0
    %736 = vmatprep.mubr.f32.mxu0 0.0
    %737 = vmatmul.mubr.f32.gmra.mxu0 %v670
    %v738 = vpop.f32.mrf.mxu0
    %v739 = vadd.f32 0.0, %v738
    %v740 = vpop.f32.mrf.mxu0
    %741 = vdwg.mxu0
    %743 = vrot.lane.b32.xlu0 %v666, 32
    %v744 = vpop.permute.xlu0 %743
    %v745 = vsel %vm136, %v744, 0
    %747 = vmatprep.subr.mxu0 0.0
    %748 = vmatpush1.msra.mxu0 0.0
    %749 = vmatprep.subr.mxu0 0.0
    %750 = vmatpush1.msra.mxu0 0.0
    %751 = vmatprep.subr.mxu0 0.0
    %752 = vmatpush1.msra.mxu0 0.0
    %753 = vmatprep.subr.mxu0 0.0
    %754 = vmatpush1.msra.mxu0 0.0
    %755 = vmatprep.subr.mxu0 0.0
    %756 = vmatpush1.msra.mxu0 0.0
    %757 = vmatprep.subr.mxu0 0.0
    %758 = vmatpush1.msra.mxu0 0.0
    %759 = vmatprep.subr.mxu0 0.0
    %760 = vmatpush1.msra.mxu0 0.0
    %761 = vmatprep.subr.mxu0 0.0
    %762 = vmatpush1.msra.mxu0 0.0
    %763 = vmatprep.subr.mxu0 0.0
    %764 = vmatpush1.msra.mxu0 0.0
    %765 = vmatprep.subr.mxu0 0.0
    %766 = vmatpush1.msra.mxu0 0.0
    %767 = vmatprep.subr.mxu0 0.0
    %768 = vmatpush1.msra.mxu0 0.0
    %769 = vmatprep.subr.mxu0 0.0
    %770 = vmatpush1.msra.mxu0 0.0
    %771 = vmatprep.subr.mxu0 0.0
    %772 = vmatpush1.msra.mxu0 %v116
    %773 = vmatprep.subr.mxu0 0.0
    %774 = vmatpush1.msra.mxu0 %v115
    %775 = vmatprep.subr.mxu0 0.0
    %776 = vmatpush1.msra.mxu0 %v114
    %777 = vmatprep.subr.mxu0 0.0
    %778 = vmatpush1.msra.mxu0 %v113
    %779 = vmatprep.subr.mxu0 0.0
    %780 = vmatpush2.msra.mxu0 0.0
    %781 = vmatprep.subr.mxu0 0.0
    %782 = vmatpush2.msra.mxu0 0.0
    %783 = vmatprep.subr.mxu0 0.0
    %784 = vmatpush2.msra.mxu0 0.0
    %785 = vmatprep.subr.mxu0 0.0
    %786 = vmatpush2.msra.mxu0 0.0
    %787 = vmatprep.subr.mxu0 0.0
    %788 = vmatpush2.msra.mxu0 0.0
    %789 = vmatprep.subr.mxu0 0.0
    %790 = vmatpush2.msra.mxu0 0.0
    %791 = vmatprep.subr.mxu0 0.0
    %792 = vmatpush2.msra.mxu0 0.0
    %793 = vmatprep.subr.mxu0 0.0
    %794 = vmatpush2.msra.mxu0 0.0
    %795 = vmatprep.subr.mxu0 0.0
    %796 = vmatpush2.msra.mxu0 0.0
    %797 = vmatprep.subr.mxu0 0.0
    %798 = vmatpush2.msra.mxu0 0.0
    %799 = vmatprep.subr.mxu0 0.0
    %800 = vmatpush2.msra.mxu0 0.0
    %801 = vmatprep.subr.mxu0 0.0
    %802 = vmatpush2.msra.mxu0 0.0
    %803 = vmatprep.subr.mxu0 0.0
    %804 = vmatpush2.msra.mxu0 0.0
    %805 = vmatprep.subr.mxu0 0.0
    %806 = vmatpush2.msra.mxu0 0.0
    %807 = vmatprep.subr.mxu0 0.0
    %808 = vmatpush2.msra.mxu0 0.0
    %809 = vmatprep.subr.mxu0 0.0
    %810 = vmatpush2.msra.mxu0 0.0
    %811 = vmatprep.mubr.f32.mxu0 0.0
    %812 = vmatmul.mubr.f32.gmra.mxu0 %v745
    %v813 = vpop.f32.mrf.mxu0
    %v814 = vadd.f32 %v739, %v813
    %v815 = vpop.f32.mrf.mxu0
    %816 = vdwg.mxu0
    %v817 = vadd.f32 %v814, %v126
    %v818 = vxor.u32 %v817, 2147483648
    %v819 = vmul.f32 %v818, 1.442695
    %v820 = vpow.pop %v819
    %v821 = vadd.f32 %v820, 1.0
    %v822 = vrcp.pop %v821
    %v823 = vmul.f32 1.0, %v822
    %v824 = vtanh.pop %v817
    %v825 = vmul.f32 %v823, %v487
    %827 = vrot.lane.b32.xlu0 %v824, 64
    %v828 = vpop.permute.xlu0 %827
    %v830 = vmul.f32 %v823, %v828
    %832 = vrot.lane.b32.xlu0 %v830, 32
    %v833 = vpop.permute.xlu0 %832
    %v835 = vadd.f32 %v825, %v833
    %v836 = vtanh.pop %v835
    %838 = vrot.lane.b32.xlu0 %v836, 64
    %v839 = vpop.permute.xlu0 %838
    %v841 = vmul.f32 %v823, %v839
    %v842 = vld [vmem:[#allocation3 + $0x2] sm:$0x1]
    %v843 = vld [vmem:[#allocation3 + $0xa] sm:$0x1]
    %844 = vmatprep.subr.mxu0 0.0
    %845 = vmatpush1.msra.mxu0 0.0
    %846 = vmatprep.subr.mxu0 0.0
    %847 = vmatpush1.msra.mxu0 0.0
    %848 = vmatprep.subr.mxu0 0.0
    %849 = vmatpush1.msra.mxu0 0.0
    %850 = vmatprep.subr.mxu0 0.0
    %851 = vmatpush1.msra.mxu0 0.0
    %852 = vmatprep.subr.mxu0 0.0
    %853 = vmatpush1.msra.mxu0 0.0
    %854 = vmatprep.subr.mxu0 0.0
    %855 = vmatpush1.msra.mxu0 0.0
    %856 = vmatprep.subr.mxu0 0.0
    %857 = vmatpush1.msra.mxu0 0.0
    %858 = vmatprep.subr.mxu0 0.0
    %859 = vmatpush1.msra.mxu0 0.0
    %860 = vmatprep.subr.mxu0 0.0
    %861 = vmatpush1.msra.mxu0 0.0
    %862 = vmatprep.subr.mxu0 0.0
    %863 = vmatpush1.msra.mxu0 0.0
    %864 = vmatprep.subr.mxu0 0.0
    %865 = vmatpush1.msra.mxu0 0.0
    %866 = vmatprep.subr.mxu0 0.0
    %867 = vmatpush1.msra.mxu0 0.0
    %868 = vmatprep.subr.mxu0 0.0
    %869 = vmatpush1.msra.mxu0 %v105
    %870 = vmatprep.subr.mxu0 0.0
    %871 = vmatpush1.msra.mxu0 %v104
    %872 = vmatprep.subr.mxu0 0.0
    %873 = vmatpush1.msra.mxu0 %v103
    %874 = vmatprep.subr.mxu0 0.0
    %875 = vmatpush1.msra.mxu0 %v102
    %876 = vmatprep.subr.mxu0 0.0
    %877 = vmatpush2.msra.mxu0 0.0
    %878 = vmatprep.subr.mxu0 0.0
    %879 = vmatpush2.msra.mxu0 0.0
    %880 = vmatprep.subr.mxu0 0.0
    %881 = vmatpush2.msra.mxu0 0.0
    %882 = vmatprep.subr.mxu0 0.0
    %883 = vmatpush2.msra.mxu0 0.0
    %884 = vmatprep.subr.mxu0 0.0
    %885 = vmatpush2.msra.mxu0 0.0
    %886 = vmatprep.subr.mxu0 0.0
    %887 = vmatpush2.msra.mxu0 0.0
    %888 = vmatprep.subr.mxu0 0.0
    %889 = vmatpush2.msra.mxu0 0.0
    %890 = vmatprep.subr.mxu0 0.0
    %891 = vmatpush2.msra.mxu0 0.0
    %892 = vmatprep.subr.mxu0 0.0
    %893 = vmatpush2.msra.mxu0 0.0
    %894 = vmatprep.subr.mxu0 0.0
    %895 = vmatpush2.msra.mxu0 0.0
    %896 = vmatprep.subr.mxu0 0.0
    %897 = vmatpush2.msra.mxu0 0.0
    %898 = vmatprep.subr.mxu0 0.0
    %899 = vmatpush2.msra.mxu0 0.0
    %900 = vmatprep.subr.mxu0 0.0
    %901 = vmatpush2.msra.mxu0 0.0
    %902 = vmatprep.subr.mxu0 0.0
    %903 = vmatpush2.msra.mxu0 0.0
    %904 = vmatprep.subr.mxu0 0.0
    %905 = vmatpush2.msra.mxu0 0.0
    %906 = vmatprep.subr.mxu0 0.0
    %907 = vmatpush2.msra.mxu0 0.0
    %908 = vmatprep.mubr.f32.mxu0 0.0
    %909 = vmatmul.mubr.f32.gmra.mxu0 %v745
    %v910 = vpop.f32.mrf.mxu0
    %v911 = vadd.f32 0.0, %v910
    %v912 = vpop.f32.mrf.mxu0
    %913 = vdwg.mxu0
    %v916 = vrot.slane %v843, 7
    %v917 = vsel %vm213, %v916, %v842
    %v918 = vsel %vm215, %v917, 0
    %920 = vmatprep.subr.mxu0 0.0
    %921 = vmatpush1.msra.mxu0 0.0
    %922 = vmatprep.subr.mxu0 0.0
    %923 = vmatpush1.msra.mxu0 0.0
    %924 = vmatprep.subr.mxu0 0.0
    %925 = vmatpush1.msra.mxu0 0.0
    %926 = vmatprep.subr.mxu0 0.0
    %927 = vmatpush1.msra.mxu0 0.0
    %928 = vmatprep.subr.mxu0 0.0
    %929 = vmatpush1.msra.mxu0 0.0
    %930 = vmatprep.subr.mxu0 0.0
    %931 = vmatpush1.msra.mxu0 0.0
    %932 = vmatprep.subr.mxu0 0.0
    %933 = vmatpush1.msra.mxu0 0.0
    %934 = vmatprep.subr.mxu0 0.0
    %935 = vmatpush1.msra.mxu0 0.0
    %936 = vmatprep.subr.mxu0 0.0
    %937 = vmatpush1.msra.mxu0 0.0
    %938 = vmatprep.subr.mxu0 0.0
    %939 = vmatpush1.msra.mxu0 0.0
    %940 = vmatprep.subr.mxu0 0.0
    %941 = vmatpush1.msra.mxu0 0.0
    %942 = vmatprep.subr.mxu0 0.0
    %943 = vmatpush1.msra.mxu0 0.0
    %944 = vmatprep.subr.mxu0 0.0
    %945 = vmatpush1.msra.mxu0 0.0
    %946 = vmatprep.subr.mxu0 0.0
    %947 = vmatpush1.msra.mxu0 0.0
    %948 = vmatprep.subr.mxu0 0.0
    %949 = vmatpush1.msra.mxu0 %v101
    %950 = vmatprep.subr.mxu0 0.0
    %951 = vmatpush1.msra.mxu0 %v100
    %952 = vmatprep.subr.mxu0 0.0
    %953 = vmatpush2.msra.mxu0 0.0
    %954 = vmatprep.subr.mxu0 0.0
    %955 = vmatpush2.msra.mxu0 0.0
    %956 = vmatprep.subr.mxu0 0.0
    %957 = vmatpush2.msra.mxu0 0.0
    %958 = vmatprep.subr.mxu0 0.0
    %959 = vmatpush2.msra.mxu0 0.0
    %960 = vmatprep.subr.mxu0 0.0
    %961 = vmatpush2.msra.mxu0 0.0
    %962 = vmatprep.subr.mxu0 0.0
    %963 = vmatpush2.msra.mxu0 0.0
    %964 = vmatprep.subr.mxu0 0.0
    %965 = vmatpush2.msra.mxu0 0.0
    %966 = vmatprep.subr.mxu0 0.0
    %967 = vmatpush2.msra.mxu0 0.0
    %968 = vmatprep.subr.mxu0 0.0
    %969 = vmatpush2.msra.mxu0 0.0
    %970 = vmatprep.subr.mxu0 0.0
    %971 = vmatpush2.msra.mxu0 0.0
    %972 = vmatprep.subr.mxu0 0.0
    %973 = vmatpush2.msra.mxu0 0.0
    %974 = vmatprep.subr.mxu0 0.0
    %975 = vmatpush2.msra.mxu0 0.0
    %976 = vmatprep.subr.mxu0 0.0
    %977 = vmatpush2.msra.mxu0 0.0
    %978 = vmatprep.subr.mxu0 0.0
    %979 = vmatpush2.msra.mxu0 0.0
    %980 = vmatprep.subr.mxu0 0.0
    %981 = vmatpush2.msra.mxu0 0.0
    %982 = vmatprep.subr.mxu0 0.0
    %983 = vmatpush2.msra.mxu0 0.0
    %984 = vmatprep.mubr.f32.mxu0 0.0
    %985 = vmatmul.mubr.f32.gmra.mxu0 %v918
    %v986 = vpop.f32.mrf.mxu0
    %v987 = vadd.f32 %v911, %v986
    %v988 = vpop.f32.mrf.mxu0
    %989 = vdwg.mxu0
    %v990 = vadd.f32 %v987, %v111
    %v991 = vxor.u32 %v990, 2147483648
    %v992 = vmul.f32 %v991, 1.442695
    %v993 = vpow.pop %v992
    %v994 = vadd.f32 %v993, 1.0
    %v995 = vrcp.pop %v994
    %v996 = vmul.f32 1.0, %v995
    %v997 = vtanh.pop %v990
    %v998 = vmul.f32 %v996, %v660
    %1000 = vrot.lane.b32.xlu0 %v997, 64
    %v1001 = vpop.permute.xlu0 %1000
    %v1003 = vmul.f32 %v996, %v1001
    %1005 = vrot.lane.b32.xlu0 %v1003, 32
    %v1006 = vpop.permute.xlu0 %1005
    %v1008 = vadd.f32 %v998, %v1006
    %v1009 = vtanh.pop %v1008
    %1011 = vrot.lane.b32.xlu0 %v1009, 64
    %v1012 = vpop.permute.xlu0 %1011
    %v1014 = vmul.f32 %v996, %v1012
    %1016 = vrot.lane.b32.xlu0 %v841, 32
    %v1017 = vpop.permute.xlu0 %1016
    %v1018 = vsel %vm136, %v1017, 0
    %1020 = vmatprep.subr.mxu0 0.0
    %1021 = vmatpush1.msra.mxu0 0.0
    %1022 = vmatprep.subr.mxu0 0.0
    %1023 = vmatpush1.msra.mxu0 0.0
    %1024 = vmatprep.subr.mxu0 0.0
    %1025 = vmatpush1.msra.mxu0 0.0
    %1026 = vmatprep.subr.mxu0 0.0
    %1027 = vmatpush1.msra.mxu0 0.0
    %1028 = vmatprep.subr.mxu0 0.0
    %1029 = vmatpush1.msra.mxu0 0.0
    %1030 = vmatprep.subr.mxu0 0.0
    %1031 = vmatpush1.msra.mxu0 0.0
    %1032 = vmatprep.subr.mxu0 0.0
    %1033 = vmatpush1.msra.mxu0 0.0
    %1034 = vmatprep.subr.mxu0 0.0
    %1035 = vmatpush1.msra.mxu0 0.0
    %1036 = vmatprep.subr.mxu0 0.0
    %1037 = vmatpush1.msra.mxu0 0.0
    %1038 = vmatprep.subr.mxu0 0.0
    %1039 = vmatpush1.msra.mxu0 0.0
    %1040 = vmatprep.subr.mxu0 0.0
    %1041 = vmatpush1.msra.mxu0 0.0
    %1042 = vmatprep.subr.mxu0 0.0
    %1043 = vmatpush1.msra.mxu0 0.0
    %1044 = vmatprep.subr.mxu0 0.0
    %1045 = vmatpush1.msra.mxu0 %v120
    %1046 = vmatprep.subr.mxu0 0.0
    %1047 = vmatpush1.msra.mxu0 %v119
    %1048 = vmatprep.subr.mxu0 0.0
    %1049 = vmatpush1.msra.mxu0 %v118
    %1050 = vmatprep.subr.mxu0 0.0
    %1051 = vmatpush1.msra.mxu0 %v117
    %1052 = vmatprep.subr.mxu0 0.0
    %1053 = vmatpush2.msra.mxu0 0.0
    %1054 = vmatprep.subr.mxu0 0.0
    %1055 = vmatpush2.msra.mxu0 0.0
    %1056 = vmatprep.subr.mxu0 0.0
    %1057 = vmatpush2.msra.mxu0 0.0
    %1058 = vmatprep.subr.mxu0 0.0
    %1059 = vmatpush2.msra.mxu0 0.0
    %1060 = vmatprep.subr.mxu0 0.0
    %1061 = vmatpush2.msra.mxu0 0.0
    %1062 = vmatprep.subr.mxu0 0.0
    %1063 = vmatpush2.msra.mxu0 0.0
    %1064 = vmatprep.subr.mxu0 0.0
    %1065 = vmatpush2.msra.mxu0 0.0
    %1066 = vmatprep.subr.mxu0 0.0
    %1067 = vmatpush2.msra.mxu0 0.0
    %1068 = vmatprep.subr.mxu0 0.0
    %1069 = vmatpush2.msra.mxu0 0.0
    %1070 = vmatprep.subr.mxu0 0.0
    %1071 = vmatpush2.msra.mxu0 0.0
    %1072 = vmatprep.subr.mxu0 0.0
    %1073 = vmatpush2.msra.mxu0 0.0
    %1074 = vmatprep.subr.mxu0 0.0
    %1075 = vmatpush2.msra.mxu0 0.0
    %1076 = vmatprep.subr.mxu0 0.0
    %1077 = vmatpush2.msra.mxu0 0.0
    %1078 = vmatprep.subr.mxu0 0.0
    %1079 = vmatpush2.msra.mxu0 0.0
    %1080 = vmatprep.subr.mxu0 0.0
    %1081 = vmatpush2.msra.mxu0 0.0
    %1082 = vmatprep.subr.mxu0 0.0
    %1083 = vmatpush2.msra.mxu0 0.0
    %1084 = vmatprep.mubr.f32.mxu0 0.0
    %1085 = vmatmul.mubr.f32.gmra.mxu0 %v1018
    %v1086 = vpop.f32.mrf.mxu0
    %v1087 = vadd.f32 0.0, %v1086
    %v1088 = vpop.f32.mrf.mxu0
    %1089 = vdwg.mxu0
    %1091 = vrot.lane.b32.xlu0 %v1014, 32
    %v1092 = vpop.permute.xlu0 %1091
    %v1093 = vsel %vm136, %v1092, 0
    %1095 = vmatprep.subr.mxu0 0.0
    %1096 = vmatpush1.msra.mxu0 0.0
    %1097 = vmatprep.subr.mxu0 0.0
    %1098 = vmatpush1.msra.mxu0 0.0
    %1099 = vmatprep.subr.mxu0 0.0
    %1100 = vmatpush1.msra.mxu0 0.0
    %1101 = vmatprep.subr.mxu0 0.0
    %1102 = vmatpush1.msra.mxu0 0.0
    %1103 = vmatprep.subr.mxu0 0.0
    %1104 = vmatpush1.msra.mxu0 0.0
    %1105 = vmatprep.subr.mxu0 0.0
    %1106 = vmatpush1.msra.mxu0 0.0
    %1107 = vmatprep.subr.mxu0 0.0
    %1108 = vmatpush1.msra.mxu0 0.0
    %1109 = vmatprep.subr.mxu0 0.0
    %1110 = vmatpush1.msra.mxu0 0.0
    %1111 = vmatprep.subr.mxu0 0.0
    %1112 = vmatpush1.msra.mxu0 0.0
    %1113 = vmatprep.subr.mxu0 0.0
    %1114 = vmatpush1.msra.mxu0 0.0
    %1115 = vmatprep.subr.mxu0 0.0
    %1116 = vmatpush1.msra.mxu0 0.0
    %1117 = vmatprep.subr.mxu0 0.0
    %1118 = vmatpush1.msra.mxu0 0.0
    %1119 = vmatprep.subr.mxu0 0.0
    %1120 = vmatpush1.msra.mxu0 %v116
    %1121 = vmatprep.subr.mxu0 0.0
    %1122 = vmatpush1.msra.mxu0 %v115
    %1123 = vmatprep.subr.mxu0 0.0
    %1124 = vmatpush1.msra.mxu0 %v114
    %1125 = vmatprep.subr.mxu0 0.0
    %1126 = vmatpush1.msra.mxu0 %v113
    %1127 = vmatprep.subr.mxu0 0.0
    %1128 = vmatpush2.msra.mxu0 0.0
    %1129 = vmatprep.subr.mxu0 0.0
    %1130 = vmatpush2.msra.mxu0 0.0
    %1131 = vmatprep.subr.mxu0 0.0
    %1132 = vmatpush2.msra.mxu0 0.0
    %1133 = vmatprep.subr.mxu0 0.0
    %1134 = vmatpush2.msra.mxu0 0.0
    %1135 = vmatprep.subr.mxu0 0.0
    %1136 = vmatpush2.msra.mxu0 0.0
    %1137 = vmatprep.subr.mxu0 0.0
    %1138 = vmatpush2.msra.mxu0 0.0
    %1139 = vmatprep.subr.mxu0 0.0
    %1140 = vmatpush2.msra.mxu0 0.0
    %1141 = vmatprep.subr.mxu0 0.0
    %1142 = vmatpush2.msra.mxu0 0.0
    %1143 = vmatprep.subr.mxu0 0.0
    %1144 = vmatpush2.msra.mxu0 0.0
    %1145 = vmatprep.subr.mxu0 0.0
    %1146 = vmatpush2.msra.mxu0 0.0
    %1147 = vmatprep.subr.mxu0 0.0
    %1148 = vmatpush2.msra.mxu0 0.0
    %1149 = vmatprep.subr.mxu0 0.0
    %1150 = vmatpush2.msra.mxu0 0.0
    %1151 = vmatprep.subr.mxu0 0.0
    %1152 = vmatpush2.msra.mxu0 0.0
    %1153 = vmatprep.subr.mxu0 0.0
    %1154 = vmatpush2.msra.mxu0 0.0
    %1155 = vmatprep.subr.mxu0 0.0
    %1156 = vmatpush2.msra.mxu0 0.0
    %1157 = vmatprep.subr.mxu0 0.0
    %1158 = vmatpush2.msra.mxu0 0.0
    %1159 = vmatprep.mubr.f32.mxu0 0.0
    %1160 = vmatmul.mubr.f32.gmra.mxu0 %v1093
    %v1161 = vpop.f32.mrf.mxu0
    %v1162 = vadd.f32 %v1087, %v1161
    %v1163 = vpop.f32.mrf.mxu0
    %1164 = vdwg.mxu0
    %v1165 = vadd.f32 %v1162, %v126
    %v1166 = vxor.u32 %v1165, 2147483648
    %v1167 = vmul.f32 %v1166, 1.442695
    %v1168 = vpow.pop %v1167
    %v1169 = vadd.f32 %v1168, 1.0
    %v1170 = vrcp.pop %v1169
    %v1171 = vmul.f32 1.0, %v1170
    %v1172 = vtanh.pop %v1165
    %v1173 = vmul.f32 %v1171, %v835
    %1175 = vrot.lane.b32.xlu0 %v1172, 64
    %v1176 = vpop.permute.xlu0 %1175
    %v1178 = vmul.f32 %v1171, %v1176
    %1180 = vrot.lane.b32.xlu0 %v1178, 32
    %v1181 = vpop.permute.xlu0 %1180
    %v1183 = vadd.f32 %v1173, %v1181
    %v1184 = vtanh.pop %v1183
    %1186 = vrot.lane.b32.xlu0 %v1184, 64
    %v1187 = vpop.permute.xlu0 %1186
    %v1189 = vmul.f32 %v1171, %v1187
    %v1190 = vld [vmem:[#allocation3 + $0x3] sm:$0x1]
    %v1191 = vld [vmem:[#allocation3 + $0xb] sm:$0x1]
    %1192 = vmatprep.subr.mxu0 0.0
    %1193 = vmatpush1.msra.mxu0 0.0
    %1194 = vmatprep.subr.mxu0 0.0
    %1195 = vmatpush1.msra.mxu0 0.0
    %1196 = vmatprep.subr.mxu0 0.0
    %1197 = vmatpush1.msra.mxu0 0.0
    %1198 = vmatprep.subr.mxu0 0.0
    %1199 = vmatpush1.msra.mxu0 0.0
    %1200 = vmatprep.subr.mxu0 0.0
    %1201 = vmatpush1.msra.mxu0 0.0
    %1202 = vmatprep.subr.mxu0 0.0
    %1203 = vmatpush1.msra.mxu0 0.0
    %1204 = vmatprep.subr.mxu0 0.0
    %1205 = vmatpush1.msra.mxu0 0.0
    %1206 = vmatprep.subr.mxu0 0.0
    %1207 = vmatpush1.msra.mxu0 0.0
    %1208 = vmatprep.subr.mxu0 0.0
    %1209 = vmatpush1.msra.mxu0 0.0
    %1210 = vmatprep.subr.mxu0 0.0
    %1211 = vmatpush1.msra.mxu0 0.0
    %1212 = vmatprep.subr.mxu0 0.0
    %1213 = vmatpush1.msra.mxu0 0.0
    %1214 = vmatprep.subr.mxu0 0.0
    %1215 = vmatpush1.msra.mxu0 0.0
    %1216 = vmatprep.subr.mxu0 0.0
    %1217 = vmatpush1.msra.mxu0 %v105
    %1218 = vmatprep.subr.mxu0 0.0
    %1219 = vmatpush1.msra.mxu0 %v104
    %1220 = vmatprep.subr.mxu0 0.0
    %1221 = vmatpush1.msra.mxu0 %v103
    %1222 = vmatprep.subr.mxu0 0.0
    %1223 = vmatpush1.msra.mxu0 %v102
    %1224 = vmatprep.subr.mxu0 0.0
    %1225 = vmatpush2.msra.mxu0 0.0
    %1226 = vmatprep.subr.mxu0 0.0
    %1227 = vmatpush2.msra.mxu0 0.0
    %1228 = vmatprep.subr.mxu0 0.0
    %1229 = vmatpush2.msra.mxu0 0.0
    %1230 = vmatprep.subr.mxu0 0.0
    %1231 = vmatpush2.msra.mxu0 0.0
    %1232 = vmatprep.subr.mxu0 0.0
    %1233 = vmatpush2.msra.mxu0 0.0
    %1234 = vmatprep.subr.mxu0 0.0
    %1235 = vmatpush2.msra.mxu0 0.0
    %1236 = vmatprep.subr.mxu0 0.0
    %1237 = vmatpush2.msra.mxu0 0.0
    %1238 = vmatprep.subr.mxu0 0.0
    %1239 = vmatpush2.msra.mxu0 0.0
    %1240 = vmatprep.subr.mxu0 0.0
    %1241 = vmatpush2.msra.mxu0 0.0
    %1242 = vmatprep.subr.mxu0 0.0
    %1243 = vmatpush2.msra.mxu0 0.0
    %1244 = vmatprep.subr.mxu0 0.0
    %1245 = vmatpush2.msra.mxu0 0.0
    %1246 = vmatprep.subr.mxu0 0.0
    %1247 = vmatpush2.msra.mxu0 0.0
    %1248 = vmatprep.subr.mxu0 0.0
    %1249 = vmatpush2.msra.mxu0 0.0
    %1250 = vmatprep.subr.mxu0 0.0
    %1251 = vmatpush2.msra.mxu0 0.0
    %1252 = vmatprep.subr.mxu0 0.0
    %1253 = vmatpush2.msra.mxu0 0.0
    %1254 = vmatprep.subr.mxu0 0.0
    %1255 = vmatpush2.msra.mxu0 0.0
    %1256 = vmatprep.mubr.f32.mxu0 0.0
    %1257 = vmatmul.mubr.f32.gmra.mxu0 %v1093
    %v1258 = vpop.f32.mrf.mxu0
    %v1259 = vadd.f32 0.0, %v1258
    %v1260 = vpop.f32.mrf.mxu0
    %1261 = vdwg.mxu0
    %v1264 = vrot.slane %v1191, 7
    %v1265 = vsel %vm213, %v1264, %v1190
    %v1266 = vsel %vm215, %v1265, 0
    %1268 = vmatprep.subr.mxu0 0.0
    %1269 = vmatpush1.msra.mxu0 0.0
    %1270 = vmatprep.subr.mxu0 0.0
    %1271 = vmatpush1.msra.mxu0 0.0
    %1272 = vmatprep.subr.mxu0 0.0
    %1273 = vmatpush1.msra.mxu0 0.0
    %1274 = vmatprep.subr.mxu0 0.0
    %1275 = vmatpush1.msra.mxu0 0.0
    %1276 = vmatprep.subr.mxu0 0.0
    %1277 = vmatpush1.msra.mxu0 0.0
    %1278 = vmatprep.subr.mxu0 0.0
    %1279 = vmatpush1.msra.mxu0 0.0
    %1280 = vmatprep.subr.mxu0 0.0
    %1281 = vmatpush1.msra.mxu0 0.0
    %1282 = vmatprep.subr.mxu0 0.0
    %1283 = vmatpush1.msra.mxu0 0.0
    %1284 = vmatprep.subr.mxu0 0.0
    %1285 = vmatpush1.msra.mxu0 0.0
    %1286 = vmatprep.subr.mxu0 0.0
    %1287 = vmatpush1.msra.mxu0 0.0
    %1288 = vmatprep.subr.mxu0 0.0
    %1289 = vmatpush1.msra.mxu0 0.0
    %1290 = vmatprep.subr.mxu0 0.0
    %1291 = vmatpush1.msra.mxu0 0.0
    %1292 = vmatprep.subr.mxu0 0.0
    %1293 = vmatpush1.msra.mxu0 0.0
    %1294 = vmatprep.subr.mxu0 0.0
    %1295 = vmatpush1.msra.mxu0 0.0
    %1296 = vmatprep.subr.mxu0 0.0
    %1297 = vmatpush1.msra.mxu0 %v101
    %1298 = vmatprep.subr.mxu0 0.0
    %1299 = vmatpush1.msra.mxu0 %v100
    %1300 = vmatprep.subr.mxu0 0.0
    %1301 = vmatpush2.msra.mxu0 0.0
    %1302 = vmatprep.subr.mxu0 0.0
    %1303 = vmatpush2.msra.mxu0 0.0
    %1304 = vmatprep.subr.mxu0 0.0
    %1305 = vmatpush2.msra.mxu0 0.0
    %1306 = vmatprep.subr.mxu0 0.0
    %1307 = vmatpush2.msra.mxu0 0.0
    %1308 = vmatprep.subr.mxu0 0.0
    %1309 = vmatpush2.msra.mxu0 0.0
    %1310 = vmatprep.subr.mxu0 0.0
    %1311 = vmatpush2.msra.mxu0 0.0
    %1312 = vmatprep.subr.mxu0 0.0
    %1313 = vmatpush2.msra.mxu0 0.0
    %1314 = vmatprep.subr.mxu0 0.0
    %1315 = vmatpush2.msra.mxu0 0.0
    %1316 = vmatprep.subr.mxu0 0.0
    %1317 = vmatpush2.msra.mxu0 0.0
    %1318 = vmatprep.subr.mxu0 0.0
    %1319 = vmatpush2.msra.mxu0 0.0
    %1320 = vmatprep.subr.mxu0 0.0
    %1321 = vmatpush2.msra.mxu0 0.0
    %1322 = vmatprep.subr.mxu0 0.0
    %1323 = vmatpush2.msra.mxu0 0.0
    %1324 = vmatprep.subr.mxu0 0.0
    %1325 = vmatpush2.msra.mxu0 0.0
    %1326 = vmatprep.subr.mxu0 0.0
    %1327 = vmatpush2.msra.mxu0 0.0
    %1328 = vmatprep.subr.mxu0 0.0
    %1329 = vmatpush2.msra.mxu0 0.0
    %1330 = vmatprep.subr.mxu0 0.0
    %1331 = vmatpush2.msra.mxu0 0.0
    %1332 = vmatprep.mubr.f32.mxu0 0.0
    %1333 = vmatmul.mubr.f32.gmra.mxu0 %v1266
    %v1334 = vpop.f32.mrf.mxu0
    %v1335 = vadd.f32 %v1259, %v1334
    %v1336 = vpop.f32.mrf.mxu0
    %1337 = vdwg.mxu0
    %v1338 = vadd.f32 %v1335, %v111
    %v1339 = vxor.u32 %v1338, 2147483648
    %v1340 = vmul.f32 %v1339, 1.442695
    %v1341 = vpow.pop %v1340
    %v1342 = vadd.f32 %v1341, 1.0
    %v1343 = vrcp.pop %v1342
    %v1344 = vmul.f32 1.0, %v1343
    %v1345 = vtanh.pop %v1338
    %v1346 = vmul.f32 %v1344, %v1008
    %1348 = vrot.lane.b32.xlu0 %v1345, 64
    %v1349 = vpop.permute.xlu0 %1348
    %v1351 = vmul.f32 %v1344, %v1349
    %1353 = vrot.lane.b32.xlu0 %v1351, 32
    %v1354 = vpop.permute.xlu0 %1353
    %v1356 = vadd.f32 %v1346, %v1354
    %v1357 = vtanh.pop %v1356
    %1359 = vrot.lane.b32.xlu0 %v1357, 64
    %v1360 = vpop.permute.xlu0 %1359
    %v1362 = vmul.f32 %v1344, %v1360
    %1364 = vrot.lane.b32.xlu0 %v1189, 32
    %v1365 = vpop.permute.xlu0 %1364
    %v1366 = vsel %vm136, %v1365, 0
    %1368 = vmatprep.subr.mxu0 0.0
    %1369 = vmatpush1.msra.mxu0 0.0
    %1370 = vmatprep.subr.mxu0 0.0
    %1371 = vmatpush1.msra.mxu0 0.0
    %1372 = vmatprep.subr.mxu0 0.0
    %1373 = vmatpush1.msra.mxu0 0.0
    %1374 = vmatprep.subr.mxu0 0.0
    %1375 = vmatpush1.msra.mxu0 0.0
    %1376 = vmatprep.subr.mxu0 0.0
    %1377 = vmatpush1.msra.mxu0 0.0
    %1378 = vmatprep.subr.mxu0 0.0
    %1379 = vmatpush1.msra.mxu0 0.0
    %1380 = vmatprep.subr.mxu0 0.0
    %1381 = vmatpush1.msra.mxu0 0.0
    %1382 = vmatprep.subr.mxu0 0.0
    %1383 = vmatpush1.msra.mxu0 0.0
    %1384 = vmatprep.subr.mxu0 0.0
    %1385 = vmatpush1.msra.mxu0 0.0
    %1386 = vmatprep.subr.mxu0 0.0
    %1387 = vmatpush1.msra.mxu0 0.0
    %1388 = vmatprep.subr.mxu0 0.0
    %1389 = vmatpush1.msra.mxu0 0.0
    %1390 = vmatprep.subr.mxu0 0.0
    %1391 = vmatpush1.msra.mxu0 0.0
    %1392 = vmatprep.subr.mxu0 0.0
    %1393 = vmatpush1.msra.mxu0 %v120
    %1394 = vmatprep.subr.mxu0 0.0
    %1395 = vmatpush1.msra.mxu0 %v119
    %1396 = vmatprep.subr.mxu0 0.0
    %1397 = vmatpush1.msra.mxu0 %v118
    %1398 = vmatprep.subr.mxu0 0.0
    %1399 = vmatpush1.msra.mxu0 %v117
    %1400 = vmatprep.subr.mxu0 0.0
    %1401 = vmatpush2.msra.mxu0 0.0
    %1402 = vmatprep.subr.mxu0 0.0
    %1403 = vmatpush2.msra.mxu0 0.0
    %1404 = vmatprep.subr.mxu0 0.0
    %1405 = vmatpush2.msra.mxu0 0.0
    %1406 = vmatprep.subr.mxu0 0.0
    %1407 = vmatpush2.msra.mxu0 0.0
    %1408 = vmatprep.subr.mxu0 0.0
    %1409 = vmatpush2.msra.mxu0 0.0
    %1410 = vmatprep.subr.mxu0 0.0
    %1411 = vmatpush2.msra.mxu0 0.0
    %1412 = vmatprep.subr.mxu0 0.0
    %1413 = vmatpush2.msra.mxu0 0.0
    %1414 = vmatprep.subr.mxu0 0.0
    %1415 = vmatpush2.msra.mxu0 0.0
    %1416 = vmatprep.subr.mxu0 0.0
    %1417 = vmatpush2.msra.mxu0 0.0
    %1418 = vmatprep.subr.mxu0 0.0
    %1419 = vmatpush2.msra.mxu0 0.0
    %1420 = vmatprep.subr.mxu0 0.0
    %1421 = vmatpush2.msra.mxu0 0.0
    %1422 = vmatprep.subr.mxu0 0.0
    %1423 = vmatpush2.msra.mxu0 0.0
    %1424 = vmatprep.subr.mxu0 0.0
    %1425 = vmatpush2.msra.mxu0 0.0
    %1426 = vmatprep.subr.mxu0 0.0
    %1427 = vmatpush2.msra.mxu0 0.0
    %1428 = vmatprep.subr.mxu0 0.0
    %1429 = vmatpush2.msra.mxu0 0.0
    %1430 = vmatprep.subr.mxu0 0.0
    %1431 = vmatpush2.msra.mxu0 0.0
    %1432 = vmatprep.mubr.f32.mxu0 0.0
    %1433 = vmatmul.mubr.f32.gmra.mxu0 %v1366
    %v1434 = vpop.f32.mrf.mxu0
    %v1435 = vadd.f32 0.0, %v1434
    %v1436 = vpop.f32.mrf.mxu0
    %1437 = vdwg.mxu0
    %1439 = vrot.lane.b32.xlu0 %v1362, 32
    %v1440 = vpop.permute.xlu0 %1439
    %v1441 = vsel %vm136, %v1440, 0
    %1443 = vmatprep.subr.mxu0 0.0
    %1444 = vmatpush1.msra.mxu0 0.0
    %1445 = vmatprep.subr.mxu0 0.0
    %1446 = vmatpush1.msra.mxu0 0.0
    %1447 = vmatprep.subr.mxu0 0.0
    %1448 = vmatpush1.msra.mxu0 0.0
    %1449 = vmatprep.subr.mxu0 0.0
    %1450 = vmatpush1.msra.mxu0 0.0
    %1451 = vmatprep.subr.mxu0 0.0
    %1452 = vmatpush1.msra.mxu0 0.0
    %1453 = vmatprep.subr.mxu0 0.0
    %1454 = vmatpush1.msra.mxu0 0.0
    %1455 = vmatprep.subr.mxu0 0.0
    %1456 = vmatpush1.msra.mxu0 0.0
    %1457 = vmatprep.subr.mxu0 0.0
    %1458 = vmatpush1.msra.mxu0 0.0
    %1459 = vmatprep.subr.mxu0 0.0
    %1460 = vmatpush1.msra.mxu0 0.0
    %1461 = vmatprep.subr.mxu0 0.0
    %1462 = vmatpush1.msra.mxu0 0.0
    %1463 = vmatprep.subr.mxu0 0.0
    %1464 = vmatpush1.msra.mxu0 0.0
    %1465 = vmatprep.subr.mxu0 0.0
    %1466 = vmatpush1.msra.mxu0 0.0
    %1467 = vmatprep.subr.mxu0 0.0
    %1468 = vmatpush1.msra.mxu0 %v116
    %1469 = vmatprep.subr.mxu0 0.0
    %1470 = vmatpush1.msra.mxu0 %v115
    %1471 = vmatprep.subr.mxu0 0.0
    %1472 = vmatpush1.msra.mxu0 %v114
    %1473 = vmatprep.subr.mxu0 0.0
    %1474 = vmatpush1.msra.mxu0 %v113
    %1475 = vmatprep.subr.mxu0 0.0
    %1476 = vmatpush2.msra.mxu0 0.0
    %1477 = vmatprep.subr.mxu0 0.0
    %1478 = vmatpush2.msra.mxu0 0.0
    %1479 = vmatprep.subr.mxu0 0.0
    %1480 = vmatpush2.msra.mxu0 0.0
    %1481 = vmatprep.subr.mxu0 0.0
    %1482 = vmatpush2.msra.mxu0 0.0
    %1483 = vmatprep.subr.mxu0 0.0
    %1484 = vmatpush2.msra.mxu0 0.0
    %1485 = vmatprep.subr.mxu0 0.0
    %1486 = vmatpush2.msra.mxu0 0.0
    %1487 = vmatprep.subr.mxu0 0.0
    %1488 = vmatpush2.msra.mxu0 0.0
    %1489 = vmatprep.subr.mxu0 0.0
    %1490 = vmatpush2.msra.mxu0 0.0
    %1491 = vmatprep.subr.mxu0 0.0
    %1492 = vmatpush2.msra.mxu0 0.0
    %1493 = vmatprep.subr.mxu0 0.0
    %1494 = vmatpush2.msra.mxu0 0.0
    %1495 = vmatprep.subr.mxu0 0.0
    %1496 = vmatpush2.msra.mxu0 0.0
    %1497 = vmatprep.subr.mxu0 0.0
    %1498 = vmatpush2.msra.mxu0 0.0
    %1499 = vmatprep.subr.mxu0 0.0
    %1500 = vmatpush2.msra.mxu0 0.0
    %1501 = vmatprep.subr.mxu0 0.0
    %1502 = vmatpush2.msra.mxu0 0.0
    %1503 = vmatprep.subr.mxu0 0.0
    %1504 = vmatpush2.msra.mxu0 0.0
    %1505 = vmatprep.subr.mxu0 0.0
    %1506 = vmatpush2.msra.mxu0 0.0
    %1507 = vmatprep.mubr.f32.mxu0 0.0
    %1508 = vmatmul.mubr.f32.gmra.mxu0 %v1441
    %v1509 = vpop.f32.mrf.mxu0
    %v1510 = vadd.f32 %v1435, %v1509
    %v1511 = vpop.f32.mrf.mxu0
    %1512 = vdwg.mxu0
    %v1513 = vadd.f32 %v1510, %v126
    %v1514 = vxor.u32 %v1513, 2147483648
    %v1515 = vmul.f32 %v1514, 1.442695
    %v1516 = vpow.pop %v1515
    %v1517 = vadd.f32 %v1516, 1.0
    %v1518 = vrcp.pop %v1517
    %v1519 = vmul.f32 1.0, %v1518
    %v1520 = vtanh.pop %v1513
    %v1521 = vmul.f32 %v1519, %v1183
    %1523 = vrot.lane.b32.xlu0 %v1520, 64
    %v1524 = vpop.permute.xlu0 %1523
    %v1526 = vmul.f32 %v1519, %v1524
    %1528 = vrot.lane.b32.xlu0 %v1526, 32
    %v1529 = vpop.permute.xlu0 %1528
    %v1531 = vadd.f32 %v1521, %v1529
    %v1532 = vtanh.pop %v1531
    %1534 = vrot.lane.b32.xlu0 %v1532, 64
    %v1535 = vpop.permute.xlu0 %1534
    %v1537 = vmul.f32 %v1519, %v1535
    %v1538 = vld [vmem:[#allocation3 + $0x4] sm:$0x1]
    %v1539 = vld [vmem:[#allocation3 + $0xc] sm:$0x1]
    %1540 = vmatprep.subr.mxu0 0.0
    %1541 = vmatpush1.msra.mxu0 0.0
    %1542 = vmatprep.subr.mxu0 0.0
    %1543 = vmatpush1.msra.mxu0 0.0
    %1544 = vmatprep.subr.mxu0 0.0
    %1545 = vmatpush1.msra.mxu0 0.0
    %1546 = vmatprep.subr.mxu0 0.0
    %1547 = vmatpush1.msra.mxu0 0.0
    %1548 = vmatprep.subr.mxu0 0.0
    %1549 = vmatpush1.msra.mxu0 0.0
    %1550 = vmatprep.subr.mxu0 0.0
    %1551 = vmatpush1.msra.mxu0 0.0
    %1552 = vmatprep.subr.mxu0 0.0
    %1553 = vmatpush1.msra.mxu0 0.0
    %1554 = vmatprep.subr.mxu0 0.0
    %1555 = vmatpush1.msra.mxu0 0.0
    %1556 = vmatprep.subr.mxu0 0.0
    %1557 = vmatpush1.msra.mxu0 0.0
    %1558 = vmatprep.subr.mxu0 0.0
    %1559 = vmatpush1.msra.mxu0 0.0
    %1560 = vmatprep.subr.mxu0 0.0
    %1561 = vmatpush1.msra.mxu0 0.0
    %1562 = vmatprep.subr.mxu0 0.0
    %1563 = vmatpush1.msra.mxu0 0.0
    %1564 = vmatprep.subr.mxu0 0.0
    %1565 = vmatpush1.msra.mxu0 %v105
    %1566 = vmatprep.subr.mxu0 0.0
    %1567 = vmatpush1.msra.mxu0 %v104
    %1568 = vmatprep.subr.mxu0 0.0
    %1569 = vmatpush1.msra.mxu0 %v103
    %1570 = vmatprep.subr.mxu0 0.0
    %1571 = vmatpush1.msra.mxu0 %v102
    %1572 = vmatprep.subr.mxu0 0.0
    %1573 = vmatpush2.msra.mxu0 0.0
    %1574 = vmatprep.subr.mxu0 0.0
    %1575 = vmatpush2.msra.mxu0 0.0
    %1576 = vmatprep.subr.mxu0 0.0
    %1577 = vmatpush2.msra.mxu0 0.0
    %1578 = vmatprep.subr.mxu0 0.0
    %1579 = vmatpush2.msra.mxu0 0.0
    %1580 = vmatprep.subr.mxu0 0.0
    %1581 = vmatpush2.msra.mxu0 0.0
    %1582 = vmatprep.subr.mxu0 0.0
    %1583 = vmatpush2.msra.mxu0 0.0
    %1584 = vmatprep.subr.mxu0 0.0
    %1585 = vmatpush2.msra.mxu0 0.0
    %1586 = vmatprep.subr.mxu0 0.0
    %1587 = vmatpush2.msra.mxu0 0.0
    %1588 = vmatprep.subr.mxu0 0.0
    %1589 = vmatpush2.msra.mxu0 0.0
    %1590 = vmatprep.subr.mxu0 0.0
    %1591 = vmatpush2.msra.mxu0 0.0
    %1592 = vmatprep.subr.mxu0 0.0
    %1593 = vmatpush2.msra.mxu0 0.0
    %1594 = vmatprep.subr.mxu0 0.0
    %1595 = vmatpush2.msra.mxu0 0.0
    %1596 = vmatprep.subr.mxu0 0.0
    %1597 = vmatpush2.msra.mxu0 0.0
    %1598 = vmatprep.subr.mxu0 0.0
    %1599 = vmatpush2.msra.mxu0 0.0
    %1600 = vmatprep.subr.mxu0 0.0
    %1601 = vmatpush2.msra.mxu0 0.0
    %1602 = vmatprep.subr.mxu0 0.0
    %1603 = vmatpush2.msra.mxu0 0.0
    %1604 = vmatprep.mubr.f32.mxu0 0.0
    %1605 = vmatmul.mubr.f32.gmra.mxu0 %v1441
    %v1606 = vpop.f32.mrf.mxu0
    %v1607 = vadd.f32 0.0, %v1606
    %v1608 = vpop.f32.mrf.mxu0
    %1609 = vdwg.mxu0
    %v1612 = vrot.slane %v1539, 7
    %v1613 = vsel %vm213, %v1612, %v1538
    %v1614 = vsel %vm215, %v1613, 0
    %1616 = vmatprep.subr.mxu0 0.0
    %1617 = vmatpush1.msra.mxu0 0.0
    %1618 = vmatprep.subr.mxu0 0.0
    %1619 = vmatpush1.msra.mxu0 0.0
    %1620 = vmatprep.subr.mxu0 0.0
    %1621 = vmatpush1.msra.mxu0 0.0
    %1622 = vmatprep.subr.mxu0 0.0
    %1623 = vmatpush1.msra.mxu0 0.0
    %1624 = vmatprep.subr.mxu0 0.0
    %1625 = vmatpush1.msra.mxu0 0.0
    %1626 = vmatprep.subr.mxu0 0.0
    %1627 = vmatpush1.msra.mxu0 0.0
    %1628 = vmatprep.subr.mxu0 0.0
    %1629 = vmatpush1.msra.mxu0 0.0
    %1630 = vmatprep.subr.mxu0 0.0
    %1631 = vmatpush1.msra.mxu0 0.0
    %1632 = vmatprep.subr.mxu0 0.0
    %1633 = vmatpush1.msra.mxu0 0.0
    %1634 = vmatprep.subr.mxu0 0.0
    %1635 = vmatpush1.msra.mxu0 0.0
    %1636 = vmatprep.subr.mxu0 0.0
    %1637 = vmatpush1.msra.mxu0 0.0
    %1638 = vmatprep.subr.mxu0 0.0
    %1639 = vmatpush1.msra.mxu0 0.0
    %1640 = vmatprep.subr.mxu0 0.0
    %1641 = vmatpush1.msra.mxu0 0.0
    %1642 = vmatprep.subr.mxu0 0.0
    %1643 = vmatpush1.msra.mxu0 0.0
    %1644 = vmatprep.subr.mxu0 0.0
    %1645 = vmatpush1.msra.mxu0 %v101
    %1646 = vmatprep.subr.mxu0 0.0
    %1647 = vmatpush1.msra.mxu0 %v100
    %1648 = vmatprep.subr.mxu0 0.0
    %1649 = vmatpush2.msra.mxu0 0.0
    %1650 = vmatprep.subr.mxu0 0.0
    %1651 = vmatpush2.msra.mxu0 0.0
    %1652 = vmatprep.subr.mxu0 0.0
    %1653 = vmatpush2.msra.mxu0 0.0
    %1654 = vmatprep.subr.mxu0 0.0
    %1655 = vmatpush2.msra.mxu0 0.0
    %1656 = vmatprep.subr.mxu0 0.0
    %1657 = vmatpush2.msra.mxu0 0.0
    %1658 = vmatprep.subr.mxu0 0.0
    %1659 = vmatpush2.msra.mxu0 0.0
    %1660 = vmatprep.subr.mxu0 0.0
    %1661 = vmatpush2.msra.mxu0 0.0
    %1662 = vmatprep.subr.mxu0 0.0
    %1663 = vmatpush2.msra.mxu0 0.0
    %1664 = vmatprep.subr.mxu0 0.0
    %1665 = vmatpush2.msra.mxu0 0.0
    %1666 = vmatprep.subr.mxu0 0.0
    %1667 = vmatpush2.msra.mxu0 0.0
    %1668 = vmatprep.subr.mxu0 0.0
    %1669 = vmatpush2.msra.mxu0 0.0
    %1670 = vmatprep.subr.mxu0 0.0
    %1671 = vmatpush2.msra.mxu0 0.0
    %1672 = vmatprep.subr.mxu0 0.0
    %1673 = vmatpush2.msra.mxu0 0.0
    %1674 = vmatprep.subr.mxu0 0.0
    %1675 = vmatpush2.msra.mxu0 0.0
    %1676 = vmatprep.subr.mxu0 0.0
    %1677 = vmatpush2.msra.mxu0 0.0
    %1678 = vmatprep.subr.mxu0 0.0
    %1679 = vmatpush2.msra.mxu0 0.0
    %1680 = vmatprep.mubr.f32.mxu0 0.0
    %1681 = vmatmul.mubr.f32.gmra.mxu0 %v1614
    %v1682 = vpop.f32.mrf.mxu0
    %v1683 = vadd.f32 %v1607, %v1682
    %v1684 = vpop.f32.mrf.mxu0
    %1685 = vdwg.mxu0
    %v1686 = vadd.f32 %v1683, %v111
    %v1687 = vxor.u32 %v1686, 2147483648
    %v1688 = vmul.f32 %v1687, 1.442695
    %v1689 = vpow.pop %v1688
    %v1690 = vadd.f32 %v1689, 1.0
    %v1691 = vrcp.pop %v1690
    %v1692 = vmul.f32 1.0, %v1691
    %v1693 = vtanh.pop %v1686
    %v1694 = vmul.f32 %v1692, %v1356
    %1696 = vrot.lane.b32.xlu0 %v1693, 64
    %v1697 = vpop.permute.xlu0 %1696
    %v1699 = vmul.f32 %v1692, %v1697
    %1701 = vrot.lane.b32.xlu0 %v1699, 32
    %v1702 = vpop.permute.xlu0 %1701
    %v1704 = vadd.f32 %v1694, %v1702
    %v1705 = vtanh.pop %v1704
    %1707 = vrot.lane.b32.xlu0 %v1705, 64
    %v1708 = vpop.permute.xlu0 %1707
    %v1710 = vmul.f32 %v1692, %v1708
    %1712 = vrot.lane.b32.xlu0 %v1537, 32
    %v1713 = vpop.permute.xlu0 %1712
    %v1714 = vsel %vm136, %v1713, 0
    %1716 = vmatprep.subr.mxu0 0.0
    %1717 = vmatpush1.msra.mxu0 0.0
    %1718 = vmatprep.subr.mxu0 0.0
    %1719 = vmatpush1.msra.mxu0 0.0
    %1720 = vmatprep.subr.mxu0 0.0
    %1721 = vmatpush1.msra.mxu0 0.0
    %1722 = vmatprep.subr.mxu0 0.0
    %1723 = vmatpush1.msra.mxu0 0.0
    %1724 = vmatprep.subr.mxu0 0.0
    %1725 = vmatpush1.msra.mxu0 0.0
    %1726 = vmatprep.subr.mxu0 0.0
    %1727 = vmatpush1.msra.mxu0 0.0
    %1728 = vmatprep.subr.mxu0 0.0
    %1729 = vmatpush1.msra.mxu0 0.0
    %1730 = vmatprep.subr.mxu0 0.0
    %1731 = vmatpush1.msra.mxu0 0.0
    %1732 = vmatprep.subr.mxu0 0.0
    %1733 = vmatpush1.msra.mxu0 0.0
    %1734 = vmatprep.subr.mxu0 0.0
    %1735 = vmatpush1.msra.mxu0 0.0
    %1736 = vmatprep.subr.mxu0 0.0
    %1737 = vmatpush1.msra.mxu0 0.0
    %1738 = vmatprep.subr.mxu0 0.0
    %1739 = vmatpush1.msra.mxu0 0.0
    %1740 = vmatprep.subr.mxu0 0.0
    %1741 = vmatpush1.msra.mxu0 %v120
    %1742 = vmatprep.subr.mxu0 0.0
    %1743 = vmatpush1.msra.mxu0 %v119
    %1744 = vmatprep.subr.mxu0 0.0
    %1745 = vmatpush1.msra.mxu0 %v118
    %1746 = vmatprep.subr.mxu0 0.0
    %1747 = vmatpush1.msra.mxu0 %v117
    %1748 = vmatprep.subr.mxu0 0.0
    %1749 = vmatpush2.msra.mxu0 0.0
    %1750 = vmatprep.subr.mxu0 0.0
    %1751 = vmatpush2.msra.mxu0 0.0
    %1752 = vmatprep.subr.mxu0 0.0
    %1753 = vmatpush2.msra.mxu0 0.0
    %1754 = vmatprep.subr.mxu0 0.0
    %1755 = vmatpush2.msra.mxu0 0.0
    %1756 = vmatprep.subr.mxu0 0.0
    %1757 = vmatpush2.msra.mxu0 0.0
    %1758 = vmatprep.subr.mxu0 0.0
    %1759 = vmatpush2.msra.mxu0 0.0
    %1760 = vmatprep.subr.mxu0 0.0
    %1761 = vmatpush2.msra.mxu0 0.0
    %1762 = vmatprep.subr.mxu0 0.0
    %1763 = vmatpush2.msra.mxu0 0.0
    %1764 = vmatprep.subr.mxu0 0.0
    %1765 = vmatpush2.msra.mxu0 0.0
    %1766 = vmatprep.subr.mxu0 0.0
    %1767 = vmatpush2.msra.mxu0 0.0
    %1768 = vmatprep.subr.mxu0 0.0
    %1769 = vmatpush2.msra.mxu0 0.0
    %1770 = vmatprep.subr.mxu0 0.0
    %1771 = vmatpush2.msra.mxu0 0.0
    %1772 = vmatprep.subr.mxu0 0.0
    %1773 = vmatpush2.msra.mxu0 0.0
    %1774 = vmatprep.subr.mxu0 0.0
    %1775 = vmatpush2.msra.mxu0 0.0
    %1776 = vmatprep.subr.mxu0 0.0
    %1777 = vmatpush2.msra.mxu0 0.0
    %1778 = vmatprep.subr.mxu0 0.0
    %1779 = vmatpush2.msra.mxu0 0.0
    %1780 = vmatprep.mubr.f32.mxu0 0.0
    %1781 = vmatmul.mubr.f32.gmra.mxu0 %v1714
    %v1782 = vpop.f32.mrf.mxu0
    %v1783 = vadd.f32 0.0, %v1782
    %v1784 = vpop.f32.mrf.mxu0
    %1785 = vdwg.mxu0
    %1787 = vrot.lane.b32.xlu0 %v1710, 32
    %v1788 = vpop.permute.xlu0 %1787
    %v1789 = vsel %vm136, %v1788, 0
    %1791 = vmatprep.subr.mxu0 0.0
    %1792 = vmatpush1.msra.mxu0 0.0
    %1793 = vmatprep.subr.mxu0 0.0
    %1794 = vmatpush1.msra.mxu0 0.0
    %1795 = vmatprep.subr.mxu0 0.0
    %1796 = vmatpush1.msra.mxu0 0.0
    %1797 = vmatprep.subr.mxu0 0.0
    %1798 = vmatpush1.msra.mxu0 0.0
    %1799 = vmatprep.subr.mxu0 0.0
    %1800 = vmatpush1.msra.mxu0 0.0
    %1801 = vmatprep.subr.mxu0 0.0
    %1802 = vmatpush1.msra.mxu0 0.0
    %1803 = vmatprep.subr.mxu0 0.0
    %1804 = vmatpush1.msra.mxu0 0.0
    %1805 = vmatprep.subr.mxu0 0.0
    %1806 = vmatpush1.msra.mxu0 0.0
    %1807 = vmatprep.subr.mxu0 0.0
    %1808 = vmatpush1.msra.mxu0 0.0
    %1809 = vmatprep.subr.mxu0 0.0
    %1810 = vmatpush1.msra.mxu0 0.0
    %1811 = vmatprep.subr.mxu0 0.0
    %1812 = vmatpush1.msra.mxu0 0.0
    %1813 = vmatprep.subr.mxu0 0.0
    %1814 = vmatpush1.msra.mxu0 0.0
    %1815 = vmatprep.subr.mxu0 0.0
    %1816 = vmatpush1.msra.mxu0 %v116
    %1817 = vmatprep.subr.mxu0 0.0
    %1818 = vmatpush1.msra.mxu0 %v115
    %1819 = vmatprep.subr.mxu0 0.0
    %1820 = vmatpush1.msra.mxu0 %v114
    %1821 = vmatprep.subr.mxu0 0.0
    %1822 = vmatpush1.msra.mxu0 %v113
    %1823 = vmatprep.subr.mxu0 0.0
    %1824 = vmatpush2.msra.mxu0 0.0
    %1825 = vmatprep.subr.mxu0 0.0
    %1826 = vmatpush2.msra.mxu0 0.0
    %1827 = vmatprep.subr.mxu0 0.0
    %1828 = vmatpush2.msra.mxu0 0.0
    %1829 = vmatprep.subr.mxu0 0.0
    %1830 = vmatpush2.msra.mxu0 0.0
    %1831 = vmatprep.subr.mxu0 0.0
    %1832 = vmatpush2.msra.mxu0 0.0
    %1833 = vmatprep.subr.mxu0 0.0
    %1834 = vmatpush2.msra.mxu0 0.0
    %1835 = vmatprep.subr.mxu0 0.0
    %1836 = vmatpush2.msra.mxu0 0.0
    %1837 = vmatprep.subr.mxu0 0.0
    %1838 = vmatpush2.msra.mxu0 0.0
    %1839 = vmatprep.subr.mxu0 0.0
    %1840 = vmatpush2.msra.mxu0 0.0
    %1841 = vmatprep.subr.mxu0 0.0
    %1842 = vmatpush2.msra.mxu0 0.0
    %1843 = vmatprep.subr.mxu0 0.0
    %1844 = vmatpush2.msra.mxu0 0.0
    %1845 = vmatprep.subr.mxu0 0.0
    %1846 = vmatpush2.msra.mxu0 0.0
    %1847 = vmatprep.subr.mxu0 0.0
    %1848 = vmatpush2.msra.mxu0 0.0
    %1849 = vmatprep.subr.mxu0 0.0
    %1850 = vmatpush2.msra.mxu0 0.0
    %1851 = vmatprep.subr.mxu0 0.0
    %1852 = vmatpush2.msra.mxu0 0.0
    %1853 = vmatprep.subr.mxu0 0.0
    %1854 = vmatpush2.msra.mxu0 0.0
    %1855 = vmatprep.mubr.f32.mxu0 0.0
    %1856 = vmatmul.mubr.f32.gmra.mxu0 %v1789
    %v1857 = vpop.f32.mrf.mxu0
    %v1858 = vadd.f32 %v1783, %v1857
    %v1859 = vpop.f32.mrf.mxu0
    %1860 = vdwg.mxu0
    %v1861 = vadd.f32 %v1858, %v126
    %v1862 = vxor.u32 %v1861, 2147483648
    %v1863 = vmul.f32 %v1862, 1.442695
    %v1864 = vpow.pop %v1863
    %v1865 = vadd.f32 %v1864, 1.0
    %v1866 = vrcp.pop %v1865
    %v1867 = vmul.f32 1.0, %v1866
    %v1868 = vtanh.pop %v1861
    %v1869 = vmul.f32 %v1867, %v1531
    %1871 = vrot.lane.b32.xlu0 %v1868, 64
    %v1872 = vpop.permute.xlu0 %1871
    %v1874 = vmul.f32 %v1867, %v1872
    %1876 = vrot.lane.b32.xlu0 %v1874, 32
    %v1877 = vpop.permute.xlu0 %1876
    %v1879 = vadd.f32 %v1869, %v1877
    %v1880 = vtanh.pop %v1879
    %1882 = vrot.lane.b32.xlu0 %v1880, 64
    %v1883 = vpop.permute.xlu0 %1882
    %v1885 = vmul.f32 %v1867, %v1883
    %v1886 = vld [vmem:[#allocation3 + $0x5] sm:$0x1]
    %v1887 = vld [vmem:[#allocation3 + $0xd] sm:$0x1]
    %1888 = vmatprep.subr.mxu0 0.0
    %1889 = vmatpush1.msra.mxu0 0.0
    %1890 = vmatprep.subr.mxu0 0.0
    %1891 = vmatpush1.msra.mxu0 0.0
    %1892 = vmatprep.subr.mxu0 0.0
    %1893 = vmatpush1.msra.mxu0 0.0
    %1894 = vmatprep.subr.mxu0 0.0
    %1895 = vmatpush1.msra.mxu0 0.0
    %1896 = vmatprep.subr.mxu0 0.0
    %1897 = vmatpush1.msra.mxu0 0.0
    %1898 = vmatprep.subr.mxu0 0.0
    %1899 = vmatpush1.msra.mxu0 0.0
    %1900 = vmatprep.subr.mxu0 0.0
    %1901 = vmatpush1.msra.mxu0 0.0
    %1902 = vmatprep.subr.mxu0 0.0
    %1903 = vmatpush1.msra.mxu0 0.0
    %1904 = vmatprep.subr.mxu0 0.0
    %1905 = vmatpush1.msra.mxu0 0.0
    %1906 = vmatprep.subr.mxu0 0.0
    %1907 = vmatpush1.msra.mxu0 0.0
    %1908 = vmatprep.subr.mxu0 0.0
    %1909 = vmatpush1.msra.mxu0 0.0
    %1910 = vmatprep.subr.mxu0 0.0
    %1911 = vmatpush1.msra.mxu0 0.0
    %1912 = vmatprep.subr.mxu0 0.0
    %1913 = vmatpush1.msra.mxu0 %v105
    %1914 = vmatprep.subr.mxu0 0.0
    %1915 = vmatpush1.msra.mxu0 %v104
    %1916 = vmatprep.subr.mxu0 0.0
    %1917 = vmatpush1.msra.mxu0 %v103
    %1918 = vmatprep.subr.mxu0 0.0
    %1919 = vmatpush1.msra.mxu0 %v102
    %1920 = vmatprep.subr.mxu0 0.0
    %1921 = vmatpush2.msra.mxu0 0.0
    %1922 = vmatprep.subr.mxu0 0.0
    %1923 = vmatpush2.msra.mxu0 0.0
    %1924 = vmatprep.subr.mxu0 0.0
    %1925 = vmatpush2.msra.mxu0 0.0
    %1926 = vmatprep.subr.mxu0 0.0
    %1927 = vmatpush2.msra.mxu0 0.0
    %1928 = vmatprep.subr.mxu0 0.0
    %1929 = vmatpush2.msra.mxu0 0.0
    %1930 = vmatprep.subr.mxu0 0.0
    %1931 = vmatpush2.msra.mxu0 0.0
    %1932 = vmatprep.subr.mxu0 0.0
    %1933 = vmatpush2.msra.mxu0 0.0
    %1934 = vmatprep.subr.mxu0 0.0
    %1935 = vmatpush2.msra.mxu0 0.0
    %1936 = vmatprep.subr.mxu0 0.0
    %1937 = vmatpush2.msra.mxu0 0.0
    %1938 = vmatprep.subr.mxu0 0.0
    %1939 = vmatpush2.msra.mxu0 0.0
    %1940 = vmatprep.subr.mxu0 0.0
    %1941 = vmatpush2.msra.mxu0 0.0
    %1942 = vmatprep.subr.mxu0 0.0
    %1943 = vmatpush2.msra.mxu0 0.0
    %1944 = vmatprep.subr.mxu0 0.0
    %1945 = vmatpush2.msra.mxu0 0.0
    %1946 = vmatprep.subr.mxu0 0.0
    %1947 = vmatpush2.msra.mxu0 0.0
    %1948 = vmatprep.subr.mxu0 0.0
    %1949 = vmatpush2.msra.mxu0 0.0
    %1950 = vmatprep.subr.mxu0 0.0
    %1951 = vmatpush2.msra.mxu0 0.0
    %1952 = vmatprep.mubr.f32.mxu0 0.0
    %1953 = vmatmul.mubr.f32.gmra.mxu0 %v1789
    %v1954 = vpop.f32.mrf.mxu0
    %v1955 = vadd.f32 0.0, %v1954
    %v1956 = vpop.f32.mrf.mxu0
    %1957 = vdwg.mxu0
    %v1960 = vrot.slane %v1887, 7
    %v1961 = vsel %vm213, %v1960, %v1886
    %v1962 = vsel %vm215, %v1961, 0
    %1964 = vmatprep.subr.mxu0 0.0
    %1965 = vmatpush1.msra.mxu0 0.0
    %1966 = vmatprep.subr.mxu0 0.0
    %1967 = vmatpush1.msra.mxu0 0.0
    %1968 = vmatprep.subr.mxu0 0.0
    %1969 = vmatpush1.msra.mxu0 0.0
    %1970 = vmatprep.subr.mxu0 0.0
    %1971 = vmatpush1.msra.mxu0 0.0
    %1972 = vmatprep.subr.mxu0 0.0
    %1973 = vmatpush1.msra.mxu0 0.0
    %1974 = vmatprep.subr.mxu0 0.0
    %1975 = vmatpush1.msra.mxu0 0.0
    %1976 = vmatprep.subr.mxu0 0.0
    %1977 = vmatpush1.msra.mxu0 0.0
    %1978 = vmatprep.subr.mxu0 0.0
    %1979 = vmatpush1.msra.mxu0 0.0
    %1980 = vmatprep.subr.mxu0 0.0
    %1981 = vmatpush1.msra.mxu0 0.0
    %1982 = vmatprep.subr.mxu0 0.0
    %1983 = vmatpush1.msra.mxu0 0.0
    %1984 = vmatprep.subr.mxu0 0.0
    %1985 = vmatpush1.msra.mxu0 0.0
    %1986 = vmatprep.subr.mxu0 0.0
    %1987 = vmatpush1.msra.mxu0 0.0
    %1988 = vmatprep.subr.mxu0 0.0
    %1989 = vmatpush1.msra.mxu0 0.0
    %1990 = vmatprep.subr.mxu0 0.0
    %1991 = vmatpush1.msra.mxu0 0.0
    %1992 = vmatprep.subr.mxu0 0.0
    %1993 = vmatpush1.msra.mxu0 %v101
    %1994 = vmatprep.subr.mxu0 0.0
    %1995 = vmatpush1.msra.mxu0 %v100
    %1996 = vmatprep.subr.mxu0 0.0
    %1997 = vmatpush2.msra.mxu0 0.0
    %1998 = vmatprep.subr.mxu0 0.0
    %1999 = vmatpush2.msra.mxu0 0.0
    %2000 = vmatprep.subr.mxu0 0.0
    %2001 = vmatpush2.msra.mxu0 0.0
    %2002 = vmatprep.subr.mxu0 0.0
    %2003 = vmatpush2.msra.mxu0 0.0
    %2004 = vmatprep.subr.mxu0 0.0
    %2005 = vmatpush2.msra.mxu0 0.0
    %2006 = vmatprep.subr.mxu0 0.0
    %2007 = vmatpush2.msra.mxu0 0.0
    %2008 = vmatprep.subr.mxu0 0.0
    %2009 = vmatpush2.msra.mxu0 0.0
    %2010 = vmatprep.subr.mxu0 0.0
    %2011 = vmatpush2.msra.mxu0 0.0
    %2012 = vmatprep.subr.mxu0 0.0
    %2013 = vmatpush2.msra.mxu0 0.0
    %2014 = vmatprep.subr.mxu0 0.0
    %2015 = vmatpush2.msra.mxu0 0.0
    %2016 = vmatprep.subr.mxu0 0.0
    %2017 = vmatpush2.msra.mxu0 0.0
    %2018 = vmatprep.subr.mxu0 0.0
    %2019 = vmatpush2.msra.mxu0 0.0
    %2020 = vmatprep.subr.mxu0 0.0
    %2021 = vmatpush2.msra.mxu0 0.0
    %2022 = vmatprep.subr.mxu0 0.0
    %2023 = vmatpush2.msra.mxu0 0.0
    %2024 = vmatprep.subr.mxu0 0.0
    %2025 = vmatpush2.msra.mxu0 0.0
    %2026 = vmatprep.subr.mxu0 0.0
    %2027 = vmatpush2.msra.mxu0 0.0
    %2028 = vmatprep.mubr.f32.mxu0 0.0
    %2029 = vmatmul.mubr.f32.gmra.mxu0 %v1962
    %v2030 = vpop.f32.mrf.mxu0
    %v2031 = vadd.f32 %v1955, %v2030
    %v2032 = vpop.f32.mrf.mxu0
    %2033 = vdwg.mxu0
    %v2034 = vadd.f32 %v2031, %v111
    %v2035 = vxor.u32 %v2034, 2147483648
    %v2036 = vmul.f32 %v2035, 1.442695
    %v2037 = vpow.pop %v2036
    %v2038 = vadd.f32 %v2037, 1.0
    %v2039 = vrcp.pop %v2038
    %v2040 = vmul.f32 1.0, %v2039
    %v2041 = vtanh.pop %v2034
    %v2042 = vmul.f32 %v2040, %v1704
    %2044 = vrot.lane.b32.xlu0 %v2041, 64
    %v2045 = vpop.permute.xlu0 %2044
    %v2047 = vmul.f32 %v2040, %v2045
    %2049 = vrot.lane.b32.xlu0 %v2047, 32
    %v2050 = vpop.permute.xlu0 %2049
    %v2052 = vadd.f32 %v2042, %v2050
    %v2053 = vtanh.pop %v2052
    %2055 = vrot.lane.b32.xlu0 %v2053, 64
    %v2056 = vpop.permute.xlu0 %2055
    %v2058 = vmul.f32 %v2040, %v2056
    %2060 = vrot.lane.b32.xlu0 %v1885, 32
    %v2061 = vpop.permute.xlu0 %2060
    %v2062 = vsel %vm136, %v2061, 0
    %2064 = vmatprep.subr.mxu0 0.0
    %2065 = vmatpush1.msra.mxu0 0.0
    %2066 = vmatprep.subr.mxu0 0.0
    %2067 = vmatpush1.msra.mxu0 0.0
    %2068 = vmatprep.subr.mxu0 0.0
    %2069 = vmatpush1.msra.mxu0 0.0
    %2070 = vmatprep.subr.mxu0 0.0
    %2071 = vmatpush1.msra.mxu0 0.0
    %2072 = vmatprep.subr.mxu0 0.0
    %2073 = vmatpush1.msra.mxu0 0.0
    %2074 = vmatprep.subr.mxu0 0.0
    %2075 = vmatpush1.msra.mxu0 0.0
    %2076 = vmatprep.subr.mxu0 0.0
    %2077 = vmatpush1.msra.mxu0 0.0
    %2078 = vmatprep.subr.mxu0 0.0
    %2079 = vmatpush1.msra.mxu0 0.0
    %2080 = vmatprep.subr.mxu0 0.0
    %2081 = vmatpush1.msra.mxu0 0.0
    %2082 = vmatprep.subr.mxu0 0.0
    %2083 = vmatpush1.msra.mxu0 0.0
    %2084 = vmatprep.subr.mxu0 0.0
    %2085 = vmatpush1.msra.mxu0 0.0
    %2086 = vmatprep.subr.mxu0 0.0
    %2087 = vmatpush1.msra.mxu0 0.0
    %2088 = vmatprep.subr.mxu0 0.0
    %2089 = vmatpush1.msra.mxu0 %v120
    %2090 = vmatprep.subr.mxu0 0.0
    %2091 = vmatpush1.msra.mxu0 %v119
    %2092 = vmatprep.subr.mxu0 0.0
    %2093 = vmatpush1.msra.mxu0 %v118
    %2094 = vmatprep.subr.mxu0 0.0
    %2095 = vmatpush1.msra.mxu0 %v117
    %2096 = vmatprep.subr.mxu0 0.0
    %2097 = vmatpush2.msra.mxu0 0.0
    %2098 = vmatprep.subr.mxu0 0.0
    %2099 = vmatpush2.msra.mxu0 0.0
    %2100 = vmatprep.subr.mxu0 0.0
    %2101 = vmatpush2.msra.mxu0 0.0
    %2102 = vmatprep.subr.mxu0 0.0
    %2103 = vmatpush2.msra.mxu0 0.0
    %2104 = vmatprep.subr.mxu0 0.0
    %2105 = vmatpush2.msra.mxu0 0.0
    %2106 = vmatprep.subr.mxu0 0.0
    %2107 = vmatpush2.msra.mxu0 0.0
    %2108 = vmatprep.subr.mxu0 0.0
    %2109 = vmatpush2.msra.mxu0 0.0
    %2110 = vmatprep.subr.mxu0 0.0
    %2111 = vmatpush2.msra.mxu0 0.0
    %2112 = vmatprep.subr.mxu0 0.0
    %2113 = vmatpush2.msra.mxu0 0.0
    %2114 = vmatprep.subr.mxu0 0.0
    %2115 = vmatpush2.msra.mxu0 0.0
    %2116 = vmatprep.subr.mxu0 0.0
    %2117 = vmatpush2.msra.mxu0 0.0
    %2118 = vmatprep.subr.mxu0 0.0
    %2119 = vmatpush2.msra.mxu0 0.0
    %2120 = vmatprep.subr.mxu0 0.0
    %2121 = vmatpush2.msra.mxu0 0.0
    %2122 = vmatprep.subr.mxu0 0.0
    %2123 = vmatpush2.msra.mxu0 0.0
    %2124 = vmatprep.subr.mxu0 0.0
    %2125 = vmatpush2.msra.mxu0 0.0
    %2126 = vmatprep.subr.mxu0 0.0
    %2127 = vmatpush2.msra.mxu0 0.0
    %2128 = vmatprep.mubr.f32.mxu0 0.0
    %2129 = vmatmul.mubr.f32.gmra.mxu0 %v2062
    %v2130 = vpop.f32.mrf.mxu0
    %v2131 = vadd.f32 0.0, %v2130
    %v2132 = vpop.f32.mrf.mxu0
    %2133 = vdwg.mxu0
    %2135 = vrot.lane.b32.xlu0 %v2058, 32
    %v2136 = vpop.permute.xlu0 %2135
    %v2137 = vsel %vm136, %v2136, 0
    %2139 = vmatprep.subr.mxu0 0.0
    %2140 = vmatpush1.msra.mxu0 0.0
    %2141 = vmatprep.subr.mxu0 0.0
    %2142 = vmatpush1.msra.mxu0 0.0
    %2143 = vmatprep.subr.mxu0 0.0
    %2144 = vmatpush1.msra.mxu0 0.0
    %2145 = vmatprep.subr.mxu0 0.0
    %2146 = vmatpush1.msra.mxu0 0.0
    %2147 = vmatprep.subr.mxu0 0.0
    %2148 = vmatpush1.msra.mxu0 0.0
    %2149 = vmatprep.subr.mxu0 0.0
    %2150 = vmatpush1.msra.mxu0 0.0
    %2151 = vmatprep.subr.mxu0 0.0
    %2152 = vmatpush1.msra.mxu0 0.0
    %2153 = vmatprep.subr.mxu0 0.0
    %2154 = vmatpush1.msra.mxu0 0.0
    %2155 = vmatprep.subr.mxu0 0.0
    %2156 = vmatpush1.msra.mxu0 0.0
    %2157 = vmatprep.subr.mxu0 0.0
    %2158 = vmatpush1.msra.mxu0 0.0
    %2159 = vmatprep.subr.mxu0 0.0
    %2160 = vmatpush1.msra.mxu0 0.0
    %2161 = vmatprep.subr.mxu0 0.0
    %2162 = vmatpush1.msra.mxu0 0.0
    %2163 = vmatprep.subr.mxu0 0.0
    %2164 = vmatpush1.msra.mxu0 %v116
    %2165 = vmatprep.subr.mxu0 0.0
    %2166 = vmatpush1.msra.mxu0 %v115
    %2167 = vmatprep.subr.mxu0 0.0
    %2168 = vmatpush1.msra.mxu0 %v114
    %2169 = vmatprep.subr.mxu0 0.0
    %2170 = vmatpush1.msra.mxu0 %v113
    %2171 = vmatprep.subr.mxu0 0.0
    %2172 = vmatpush2.msra.mxu0 0.0
    %2173 = vmatprep.subr.mxu0 0.0
    %2174 = vmatpush2.msra.mxu0 0.0
    %2175 = vmatprep.subr.mxu0 0.0
    %2176 = vmatpush2.msra.mxu0 0.0
    %2177 = vmatprep.subr.mxu0 0.0
    %2178 = vmatpush2.msra.mxu0 0.0
    %2179 = vmatprep.subr.mxu0 0.0
    %2180 = vmatpush2.msra.mxu0 0.0
    %2181 = vmatprep.subr.mxu0 0.0
    %2182 = vmatpush2.msra.mxu0 0.0
    %2183 = vmatprep.subr.mxu0 0.0
    %2184 = vmatpush2.msra.mxu0 0.0
    %2185 = vmatprep.subr.mxu0 0.0
    %2186 = vmatpush2.msra.mxu0 0.0
    %2187 = vmatprep.subr.mxu0 0.0
    %2188 = vmatpush2.msra.mxu0 0.0
    %2189 = vmatprep.subr.mxu0 0.0
    %2190 = vmatpush2.msra.mxu0 0.0
    %2191 = vmatprep.subr.mxu0 0.0
    %2192 = vmatpush2.msra.mxu0 0.0
    %2193 = vmatprep.subr.mxu0 0.0
    %2194 = vmatpush2.msra.mxu0 0.0
    %2195 = vmatprep.subr.mxu0 0.0
    %2196 = vmatpush2.msra.mxu0 0.0
    %2197 = vmatprep.subr.mxu0 0.0
    %2198 = vmatpush2.msra.mxu0 0.0
    %2199 = vmatprep.subr.mxu0 0.0
    %2200 = vmatpush2.msra.mxu0 0.0
    %2201 = vmatprep.subr.mxu0 0.0
    %2202 = vmatpush2.msra.mxu0 0.0
    %2203 = vmatprep.mubr.f32.mxu0 0.0
    %2204 = vmatmul.mubr.f32.gmra.mxu0 %v2137
    %v2205 = vpop.f32.mrf.mxu0
    %v2206 = vadd.f32 %v2131, %v2205
    %v2207 = vpop.f32.mrf.mxu0
    %2208 = vdwg.mxu0
    %v2209 = vadd.f32 %v2206, %v126
    %v2210 = vxor.u32 %v2209, 2147483648
    %v2211 = vmul.f32 %v2210, 1.442695
    %v2212 = vpow.pop %v2211
    %v2213 = vadd.f32 %v2212, 1.0
    %v2214 = vrcp.pop %v2213
    %v2215 = vmul.f32 1.0, %v2214
    %v2216 = vtanh.pop %v2209
    %v2217 = vmul.f32 %v2215, %v1879
    %2219 = vrot.lane.b32.xlu0 %v2216, 64
    %v2220 = vpop.permute.xlu0 %2219
    %v2222 = vmul.f32 %v2215, %v2220
    %2224 = vrot.lane.b32.xlu0 %v2222, 32
    %v2225 = vpop.permute.xlu0 %2224
    %v2227 = vadd.f32 %v2217, %v2225
    %v2228 = vtanh.pop %v2227
    %2230 = vrot.lane.b32.xlu0 %v2228, 64
    %v2231 = vpop.permute.xlu0 %2230
    %v2233 = vmul.f32 %v2215, %v2231
    %v2234 = vld [vmem:[#allocation3 + $0x6] sm:$0x1]
    %v2235 = vld [vmem:[#allocation3 + $0xe] sm:$0x1]
    %2236 = vmatprep.subr.mxu0 0.0
    %2237 = vmatpush1.msra.mxu0 0.0
    %2238 = vmatprep.subr.mxu0 0.0
    %2239 = vmatpush1.msra.mxu0 0.0
    %2240 = vmatprep.subr.mxu0 0.0
    %2241 = vmatpush1.msra.mxu0 0.0
    %2242 = vmatprep.subr.mxu0 0.0
    %2243 = vmatpush1.msra.mxu0 0.0
    %2244 = vmatprep.subr.mxu0 0.0
    %2245 = vmatpush1.msra.mxu0 0.0
    %2246 = vmatprep.subr.mxu0 0.0
    %2247 = vmatpush1.msra.mxu0 0.0
    %2248 = vmatprep.subr.mxu0 0.0
    %2249 = vmatpush1.msra.mxu0 0.0
    %2250 = vmatprep.subr.mxu0 0.0
    %2251 = vmatpush1.msra.mxu0 0.0
    %2252 = vmatprep.subr.mxu0 0.0
    %2253 = vmatpush1.msra.mxu0 0.0
    %2254 = vmatprep.subr.mxu0 0.0
    %2255 = vmatpush1.msra.mxu0 0.0
    %2256 = vmatprep.subr.mxu0 0.0
    %2257 = vmatpush1.msra.mxu0 0.0
    %2258 = vmatprep.subr.mxu0 0.0
    %2259 = vmatpush1.msra.mxu0 0.0
    %2260 = vmatprep.subr.mxu0 0.0
    %2261 = vmatpush1.msra.mxu0 %v105
    %2262 = vmatprep.subr.mxu0 0.0
    %2263 = vmatpush1.msra.mxu0 %v104
    %2264 = vmatprep.subr.mxu0 0.0
    %2265 = vmatpush1.msra.mxu0 %v103
    %2266 = vmatprep.subr.mxu0 0.0
    %2267 = vmatpush1.msra.mxu0 %v102
    %2268 = vmatprep.subr.mxu0 0.0
    %2269 = vmatpush2.msra.mxu0 0.0
    %2270 = vmatprep.subr.mxu0 0.0
    %2271 = vmatpush2.msra.mxu0 0.0
    %2272 = vmatprep.subr.mxu0 0.0
    %2273 = vmatpush2.msra.mxu0 0.0
    %2274 = vmatprep.subr.mxu0 0.0
    %2275 = vmatpush2.msra.mxu0 0.0
    %2276 = vmatprep.subr.mxu0 0.0
    %2277 = vmatpush2.msra.mxu0 0.0
    %2278 = vmatprep.subr.mxu0 0.0
    %2279 = vmatpush2.msra.mxu0 0.0
    %2280 = vmatprep.subr.mxu0 0.0
    %2281 = vmatpush2.msra.mxu0 0.0
    %2282 = vmatprep.subr.mxu0 0.0
    %2283 = vmatpush2.msra.mxu0 0.0
    %2284 = vmatprep.subr.mxu0 0.0
    %2285 = vmatpush2.msra.mxu0 0.0
    %2286 = vmatprep.subr.mxu0 0.0
    %2287 = vmatpush2.msra.mxu0 0.0
    %2288 = vmatprep.subr.mxu0 0.0
    %2289 = vmatpush2.msra.mxu0 0.0
    %2290 = vmatprep.subr.mxu0 0.0
    %2291 = vmatpush2.msra.mxu0 0.0
    %2292 = vmatprep.subr.mxu0 0.0
    %2293 = vmatpush2.msra.mxu0 0.0
    %2294 = vmatprep.subr.mxu0 0.0
    %2295 = vmatpush2.msra.mxu0 0.0
    %2296 = vmatprep.subr.mxu0 0.0
    %2297 = vmatpush2.msra.mxu0 0.0
    %2298 = vmatprep.subr.mxu0 0.0
    %2299 = vmatpush2.msra.mxu0 0.0
    %2300 = vmatprep.mubr.f32.mxu0 0.0
    %2301 = vmatmul.mubr.f32.gmra.mxu0 %v2137
    %v2302 = vpop.f32.mrf.mxu0
    %v2303 = vadd.f32 0.0, %v2302
    %v2304 = vpop.f32.mrf.mxu0
    %2305 = vdwg.mxu0
    %v2308 = vrot.slane %v2235, 7
    %v2309 = vsel %vm213, %v2308, %v2234
    %v2310 = vsel %vm215, %v2309, 0
    %2312 = vmatprep.subr.mxu0 0.0
    %2313 = vmatpush1.msra.mxu0 0.0
    %2314 = vmatprep.subr.mxu0 0.0
    %2315 = vmatpush1.msra.mxu0 0.0
    %2316 = vmatprep.subr.mxu0 0.0
    %2317 = vmatpush1.msra.mxu0 0.0
    %2318 = vmatprep.subr.mxu0 0.0
    %2319 = vmatpush1.msra.mxu0 0.0
    %2320 = vmatprep.subr.mxu0 0.0
    %2321 = vmatpush1.msra.mxu0 0.0
    %2322 = vmatprep.subr.mxu0 0.0
    %2323 = vmatpush1.msra.mxu0 0.0
    %2324 = vmatprep.subr.mxu0 0.0
    %2325 = vmatpush1.msra.mxu0 0.0
    %2326 = vmatprep.subr.mxu0 0.0
    %2327 = vmatpush1.msra.mxu0 0.0
    %2328 = vmatprep.subr.mxu0 0.0
    %2329 = vmatpush1.msra.mxu0 0.0
    %2330 = vmatprep.subr.mxu0 0.0
    %2331 = vmatpush1.msra.mxu0 0.0
    %2332 = vmatprep.subr.mxu0 0.0
    %2333 = vmatpush1.msra.mxu0 0.0
    %2334 = vmatprep.subr.mxu0 0.0
    %2335 = vmatpush1.msra.mxu0 0.0
    %2336 = vmatprep.subr.mxu0 0.0
    %2337 = vmatpush1.msra.mxu0 0.0
    %2338 = vmatprep.subr.mxu0 0.0
    %2339 = vmatpush1.msra.mxu0 0.0
    %2340 = vmatprep.subr.mxu0 0.0
    %2341 = vmatpush1.msra.mxu0 %v101
    %2342 = vmatprep.subr.mxu0 0.0
    %2343 = vmatpush1.msra.mxu0 %v100
    %2344 = vmatprep.subr.mxu0 0.0
    %2345 = vmatpush2.msra.mxu0 0.0
    %2346 = vmatprep.subr.mxu0 0.0
    %2347 = vmatpush2.msra.mxu0 0.0
    %2348 = vmatprep.subr.mxu0 0.0
    %2349 = vmatpush2.msra.mxu0 0.0
    %2350 = vmatprep.subr.mxu0 0.0
    %2351 = vmatpush2.msra.mxu0 0.0
    %2352 = vmatprep.subr.mxu0 0.0
    %2353 = vmatpush2.msra.mxu0 0.0
    %2354 = vmatprep.subr.mxu0 0.0
    %2355 = vmatpush2.msra.mxu0 0.0
    %2356 = vmatprep.subr.mxu0 0.0
    %2357 = vmatpush2.msra.mxu0 0.0
    %2358 = vmatprep.subr.mxu0 0.0
    %2359 = vmatpush2.msra.mxu0 0.0
    %2360 = vmatprep.subr.mxu0 0.0
    %2361 = vmatpush2.msra.mxu0 0.0
    %2362 = vmatprep.subr.mxu0 0.0
    %2363 = vmatpush2.msra.mxu0 0.0
    %2364 = vmatprep.subr.mxu0 0.0
    %2365 = vmatpush2.msra.mxu0 0.0
    %2366 = vmatprep.subr.mxu0 0.0
    %2367 = vmatpush2.msra.mxu0 0.0
    %2368 = vmatprep.subr.mxu0 0.0
    %2369 = vmatpush2.msra.mxu0 0.0
    %2370 = vmatprep.subr.mxu0 0.0
    %2371 = vmatpush2.msra.mxu0 0.0
    %2372 = vmatprep.subr.mxu0 0.0
    %2373 = vmatpush2.msra.mxu0 0.0
    %2374 = vmatprep.subr.mxu0 0.0
    %2375 = vmatpush2.msra.mxu0 0.0
    %2376 = vmatprep.mubr.f32.mxu0 0.0
    %2377 = vmatmul.mubr.f32.gmra.mxu0 %v2310
    %v2378 = vpop.f32.mrf.mxu0
    %v2379 = vadd.f32 %v2303, %v2378
    %v2380 = vpop.f32.mrf.mxu0
    %2381 = vdwg.mxu0
    %v2382 = vadd.f32 %v2379, %v111
    %v2383 = vxor.u32 %v2382, 2147483648
    %v2384 = vmul.f32 %v2383, 1.442695
    %v2385 = vpow.pop %v2384
    %v2386 = vadd.f32 %v2385, 1.0
    %v2387 = vrcp.pop %v2386
    %v2388 = vmul.f32 1.0, %v2387
    %v2389 = vtanh.pop %v2382
    %v2390 = vmul.f32 %v2388, %v2052
    %2392 = vrot.lane.b32.xlu0 %v2389, 64
    %v2393 = vpop.permute.xlu0 %2392
    %v2395 = vmul.f32 %v2388, %v2393
    %2397 = vrot.lane.b32.xlu0 %v2395, 32
    %v2398 = vpop.permute.xlu0 %2397
    %v2400 = vadd.f32 %v2390, %v2398
    %v2401 = vtanh.pop %v2400
    %2403 = vrot.lane.b32.xlu0 %v2401, 64
    %v2404 = vpop.permute.xlu0 %2403
    %v2406 = vmul.f32 %v2388, %v2404
    %2408 = vrot.lane.b32.xlu0 %v2233, 32
    %v2409 = vpop.permute.xlu0 %2408
    %v2410 = vsel %vm136, %v2409, 0
    %2412 = vmatprep.subr.mxu0 0.0
    %2413 = vmatpush1.msra.mxu0 0.0
    %2414 = vmatprep.subr.mxu0 0.0
    %2415 = vmatpush1.msra.mxu0 0.0
    %2416 = vmatprep.subr.mxu0 0.0
    %2417 = vmatpush1.msra.mxu0 0.0
    %2418 = vmatprep.subr.mxu0 0.0
    %2419 = vmatpush1.msra.mxu0 0.0
    %2420 = vmatprep.subr.mxu0 0.0
    %2421 = vmatpush1.msra.mxu0 0.0
    %2422 = vmatprep.subr.mxu0 0.0
    %2423 = vmatpush1.msra.mxu0 0.0
    %2424 = vmatprep.subr.mxu0 0.0
    %2425 = vmatpush1.msra.mxu0 0.0
    %2426 = vmatprep.subr.mxu0 0.0
    %2427 = vmatpush1.msra.mxu0 0.0
    %2428 = vmatprep.subr.mxu0 0.0
    %2429 = vmatpush1.msra.mxu0 0.0
    %2430 = vmatprep.subr.mxu0 0.0
    %2431 = vmatpush1.msra.mxu0 0.0
    %2432 = vmatprep.subr.mxu0 0.0
    %2433 = vmatpush1.msra.mxu0 0.0
    %2434 = vmatprep.subr.mxu0 0.0
    %2435 = vmatpush1.msra.mxu0 0.0
    %2436 = vmatprep.subr.mxu0 0.0
    %2437 = vmatpush1.msra.mxu0 %v120
    %2438 = vmatprep.subr.mxu0 0.0
    %2439 = vmatpush1.msra.mxu0 %v119
    %2440 = vmatprep.subr.mxu0 0.0
    %2441 = vmatpush1.msra.mxu0 %v118
    %2442 = vmatprep.subr.mxu0 0.0
    %2443 = vmatpush1.msra.mxu0 %v117
    %2444 = vmatprep.subr.mxu0 0.0
    %2445 = vmatpush2.msra.mxu0 0.0
    %2446 = vmatprep.subr.mxu0 0.0
    %2447 = vmatpush2.msra.mxu0 0.0
    %2448 = vmatprep.subr.mxu0 0.0
    %2449 = vmatpush2.msra.mxu0 0.0
    %2450 = vmatprep.subr.mxu0 0.0
    %2451 = vmatpush2.msra.mxu0 0.0
    %2452 = vmatprep.subr.mxu0 0.0
    %2453 = vmatpush2.msra.mxu0 0.0
    %2454 = vmatprep.subr.mxu0 0.0
    %2455 = vmatpush2.msra.mxu0 0.0
    %2456 = vmatprep.subr.mxu0 0.0
    %2457 = vmatpush2.msra.mxu0 0.0
    %2458 = vmatprep.subr.mxu0 0.0
    %2459 = vmatpush2.msra.mxu0 0.0
    %2460 = vmatprep.subr.mxu0 0.0
    %2461 = vmatpush2.msra.mxu0 0.0
    %2462 = vmatprep.subr.mxu0 0.0
    %2463 = vmatpush2.msra.mxu0 0.0
    %2464 = vmatprep.subr.mxu0 0.0
    %2465 = vmatpush2.msra.mxu0 0.0
    %2466 = vmatprep.subr.mxu0 0.0
    %2467 = vmatpush2.msra.mxu0 0.0
    %2468 = vmatprep.subr.mxu0 0.0
    %2469 = vmatpush2.msra.mxu0 0.0
    %2470 = vmatprep.subr.mxu0 0.0
    %2471 = vmatpush2.msra.mxu0 0.0
    %2472 = vmatprep.subr.mxu0 0.0
    %2473 = vmatpush2.msra.mxu0 0.0
    %2474 = vmatprep.subr.mxu0 0.0
    %2475 = vmatpush2.msra.mxu0 0.0
    %2476 = vmatprep.mubr.f32.mxu0 0.0
    %2477 = vmatmul.mubr.f32.gmra.mxu0 %v2410
    %v2478 = vpop.f32.mrf.mxu0
    %v2479 = vadd.f32 0.0, %v2478
    %v2480 = vpop.f32.mrf.mxu0
    %2481 = vdwg.mxu0
    %2483 = vrot.lane.b32.xlu0 %v2406, 32
    %v2484 = vpop.permute.xlu0 %2483
    %v2485 = vsel %vm136, %v2484, 0
    %2487 = vmatprep.subr.mxu0 0.0
    %2488 = vmatpush1.msra.mxu0 0.0
    %2489 = vmatprep.subr.mxu0 0.0
    %2490 = vmatpush1.msra.mxu0 0.0
    %2491 = vmatprep.subr.mxu0 0.0
    %2492 = vmatpush1.msra.mxu0 0.0
    %2493 = vmatprep.subr.mxu0 0.0
    %2494 = vmatpush1.msra.mxu0 0.0
    %2495 = vmatprep.subr.mxu0 0.0
    %2496 = vmatpush1.msra.mxu0 0.0
    %2497 = vmatprep.subr.mxu0 0.0
    %2498 = vmatpush1.msra.mxu0 0.0
    %2499 = vmatprep.subr.mxu0 0.0
    %2500 = vmatpush1.msra.mxu0 0.0
    %2501 = vmatprep.subr.mxu0 0.0
    %2502 = vmatpush1.msra.mxu0 0.0
    %2503 = vmatprep.subr.mxu0 0.0
    %2504 = vmatpush1.msra.mxu0 0.0
    %2505 = vmatprep.subr.mxu0 0.0
    %2506 = vmatpush1.msra.mxu0 0.0
    %2507 = vmatprep.subr.mxu0 0.0
    %2508 = vmatpush1.msra.mxu0 0.0
    %2509 = vmatprep.subr.mxu0 0.0
    %2510 = vmatpush1.msra.mxu0 0.0
    %2511 = vmatprep.subr.mxu0 0.0
    %2512 = vmatpush1.msra.mxu0 %v116
    %2513 = vmatprep.subr.mxu0 0.0
    %2514 = vmatpush1.msra.mxu0 %v115
    %2515 = vmatprep.subr.mxu0 0.0
    %2516 = vmatpush1.msra.mxu0 %v114
    %2517 = vmatprep.subr.mxu0 0.0
    %2518 = vmatpush1.msra.mxu0 %v113
    %2519 = vmatprep.subr.mxu0 0.0
    %2520 = vmatpush2.msra.mxu0 0.0
    %2521 = vmatprep.subr.mxu0 0.0
    %2522 = vmatpush2.msra.mxu0 0.0
    %2523 = vmatprep.subr.mxu0 0.0
    %2524 = vmatpush2.msra.mxu0 0.0
    %2525 = vmatprep.subr.mxu0 0.0
    %2526 = vmatpush2.msra.mxu0 0.0
    %2527 = vmatprep.subr.mxu0 0.0
    %2528 = vmatpush2.msra.mxu0 0.0
    %2529 = vmatprep.subr.mxu0 0.0
    %2530 = vmatpush2.msra.mxu0 0.0
    %2531 = vmatprep.subr.mxu0 0.0
    %2532 = vmatpush2.msra.mxu0 0.0
    %2533 = vmatprep.subr.mxu0 0.0
    %2534 = vmatpush2.msra.mxu0 0.0
    %2535 = vmatprep.subr.mxu0 0.0
    %2536 = vmatpush2.msra.mxu0 0.0
    %2537 = vmatprep.subr.mxu0 0.0
    %2538 = vmatpush2.msra.mxu0 0.0
    %2539 = vmatprep.subr.mxu0 0.0
    %2540 = vmatpush2.msra.mxu0 0.0
    %2541 = vmatprep.subr.mxu0 0.0
    %2542 = vmatpush2.msra.mxu0 0.0
    %2543 = vmatprep.subr.mxu0 0.0
    %2544 = vmatpush2.msra.mxu0 0.0
    %2545 = vmatprep.subr.mxu0 0.0
    %2546 = vmatpush2.msra.mxu0 0.0
    %2547 = vmatprep.subr.mxu0 0.0
    %2548 = vmatpush2.msra.mxu0 0.0
    %2549 = vmatprep.subr.mxu0 0.0
    %2550 = vmatpush2.msra.mxu0 0.0
    %2551 = vmatprep.mubr.f32.mxu0 0.0
    %2552 = vmatmul.mubr.f32.gmra.mxu0 %v2485
    %v2553 = vpop.f32.mrf.mxu0
    %v2554 = vadd.f32 %v2479, %v2553
    %v2555 = vpop.f32.mrf.mxu0
    %2556 = vdwg.mxu0
    %v2557 = vadd.f32 %v2554, %v126
    %v2558 = vxor.u32 %v2557, 2147483648
    %v2559 = vmul.f32 %v2558, 1.442695
    %v2560 = vpow.pop %v2559
    %v2561 = vadd.f32 %v2560, 1.0
    %v2562 = vrcp.pop %v2561
    %v2563 = vmul.f32 1.0, %v2562
    %v2564 = vtanh.pop %v2557
    %v2565 = vmul.f32 %v2563, %v2227
    %2567 = vrot.lane.b32.xlu0 %v2564, 64
    %v2568 = vpop.permute.xlu0 %2567
    %v2570 = vmul.f32 %v2563, %v2568
    %2572 = vrot.lane.b32.xlu0 %v2570, 32
    %v2573 = vpop.permute.xlu0 %2572
    %v2575 = vadd.f32 %v2565, %v2573
    %v2576 = vtanh.pop %v2575
    %2578 = vrot.lane.b32.xlu0 %v2576, 64
    %v2579 = vpop.permute.xlu0 %2578
    %v2581 = vmul.f32 %v2563, %v2579
    %v2582 = vld [vmem:[#allocation3 + $0x7] sm:$0x1]
    %v2583 = vld [vmem:[#allocation3 + $0xf] sm:$0x1]
    %2584 = vmatprep.subr.mxu0 0.0
    %2585 = vmatpush1.msra.mxu0 0.0
    %2586 = vmatprep.subr.mxu0 0.0
    %2587 = vmatpush1.msra.mxu0 0.0
    %2588 = vmatprep.subr.mxu0 0.0
    %2589 = vmatpush1.msra.mxu0 0.0
    %2590 = vmatprep.subr.mxu0 0.0
    %2591 = vmatpush1.msra.mxu0 0.0
    %2592 = vmatprep.subr.mxu0 0.0
    %2593 = vmatpush1.msra.mxu0 0.0
    %2594 = vmatprep.subr.mxu0 0.0
    %2595 = vmatpush1.msra.mxu0 0.0
    %2596 = vmatprep.subr.mxu0 0.0
    %2597 = vmatpush1.msra.mxu0 0.0
    %2598 = vmatprep.subr.mxu0 0.0
    %2599 = vmatpush1.msra.mxu0 0.0
    %2600 = vmatprep.subr.mxu0 0.0
    %2601 = vmatpush1.msra.mxu0 0.0
    %2602 = vmatprep.subr.mxu0 0.0
    %2603 = vmatpush1.msra.mxu0 0.0
    %2604 = vmatprep.subr.mxu0 0.0
    %2605 = vmatpush1.msra.mxu0 0.0
    %2606 = vmatprep.subr.mxu0 0.0
    %2607 = vmatpush1.msra.mxu0 0.0
    %2608 = vmatprep.subr.mxu0 0.0
    %2609 = vmatpush1.msra.mxu0 %v105
    %2610 = vmatprep.subr.mxu0 0.0
    %2611 = vmatpush1.msra.mxu0 %v104
    %2612 = vmatprep.subr.mxu0 0.0
    %2613 = vmatpush1.msra.mxu0 %v103
    %2614 = vmatprep.subr.mxu0 0.0
    %2615 = vmatpush1.msra.mxu0 %v102
    %2616 = vmatprep.subr.mxu0 0.0
    %2617 = vmatpush2.msra.mxu0 0.0
    %2618 = vmatprep.subr.mxu0 0.0
    %2619 = vmatpush2.msra.mxu0 0.0
    %2620 = vmatprep.subr.mxu0 0.0
    %2621 = vmatpush2.msra.mxu0 0.0
    %2622 = vmatprep.subr.mxu0 0.0
    %2623 = vmatpush2.msra.mxu0 0.0
    %2624 = vmatprep.subr.mxu0 0.0
    %2625 = vmatpush2.msra.mxu0 0.0
    %2626 = vmatprep.subr.mxu0 0.0
    %2627 = vmatpush2.msra.mxu0 0.0
    %2628 = vmatprep.subr.mxu0 0.0
    %2629 = vmatpush2.msra.mxu0 0.0
    %2630 = vmatprep.subr.mxu0 0.0
    %2631 = vmatpush2.msra.mxu0 0.0
    %2632 = vmatprep.subr.mxu0 0.0
    %2633 = vmatpush2.msra.mxu0 0.0
    %2634 = vmatprep.subr.mxu0 0.0
    %2635 = vmatpush2.msra.mxu0 0.0
    %2636 = vmatprep.subr.mxu0 0.0
    %2637 = vmatpush2.msra.mxu0 0.0
    %2638 = vmatprep.subr.mxu0 0.0
    %2639 = vmatpush2.msra.mxu0 0.0
    %2640 = vmatprep.subr.mxu0 0.0
    %2641 = vmatpush2.msra.mxu0 0.0
    %2642 = vmatprep.subr.mxu0 0.0
    %2643 = vmatpush2.msra.mxu0 0.0
    %2644 = vmatprep.subr.mxu0 0.0
    %2645 = vmatpush2.msra.mxu0 0.0
    %2646 = vmatprep.subr.mxu0 0.0
    %2647 = vmatpush2.msra.mxu0 0.0
    %2648 = vmatprep.mubr.f32.mxu0 0.0
    %2649 = vmatmul.mubr.f32.gmra.mxu0 %v2485
    %v2650 = vpop.f32.mrf.mxu0
    %v2651 = vadd.f32 0.0, %v2650
    %v2652 = vpop.f32.mrf.mxu0
    %2653 = vdwg.mxu0
    %v2656 = vrot.slane %v2583, 7
    %v2657 = vsel %vm213, %v2656, %v2582
    %v2658 = vsel %vm215, %v2657, 0
    %2660 = vmatprep.subr.mxu0 0.0
    %2661 = vmatpush1.msra.mxu0 0.0
    %2662 = vmatprep.subr.mxu0 0.0
    %2663 = vmatpush1.msra.mxu0 0.0
    %2664 = vmatprep.subr.mxu0 0.0
    %2665 = vmatpush1.msra.mxu0 0.0
    %2666 = vmatprep.subr.mxu0 0.0
    %2667 = vmatpush1.msra.mxu0 0.0
    %2668 = vmatprep.subr.mxu0 0.0
    %2669 = vmatpush1.msra.mxu0 0.0
    %2670 = vmatprep.subr.mxu0 0.0
    %2671 = vmatpush1.msra.mxu0 0.0
    %2672 = vmatprep.subr.mxu0 0.0
    %2673 = vmatpush1.msra.mxu0 0.0
    %2674 = vmatprep.subr.mxu0 0.0
    %2675 = vmatpush1.msra.mxu0 0.0
    %2676 = vmatprep.subr.mxu0 0.0
    %2677 = vmatpush1.msra.mxu0 0.0
    %2678 = vmatprep.subr.mxu0 0.0
    %2679 = vmatpush1.msra.mxu0 0.0
    %2680 = vmatprep.subr.mxu0 0.0
    %2681 = vmatpush1.msra.mxu0 0.0
    %2682 = vmatprep.subr.mxu0 0.0
    %2683 = vmatpush1.msra.mxu0 0.0
    %2684 = vmatprep.subr.mxu0 0.0
    %2685 = vmatpush1.msra.mxu0 0.0
    %2686 = vmatprep.subr.mxu0 0.0
    %2687 = vmatpush1.msra.mxu0 0.0
    %2688 = vmatprep.subr.mxu0 0.0
    %2689 = vmatpush1.msra.mxu0 %v101
    %2690 = vmatprep.subr.mxu0 0.0
    %2691 = vmatpush1.msra.mxu0 %v100
    %2692 = vmatprep.subr.mxu0 0.0
    %2693 = vmatpush2.msra.mxu0 0.0
    %2694 = vmatprep.subr.mxu0 0.0
    %2695 = vmatpush2.msra.mxu0 0.0
    %2696 = vmatprep.subr.mxu0 0.0
    %2697 = vmatpush2.msra.mxu0 0.0
    %2698 = vmatprep.subr.mxu0 0.0
    %2699 = vmatpush2.msra.mxu0 0.0
    %2700 = vmatprep.subr.mxu0 0.0
    %2701 = vmatpush2.msra.mxu0 0.0
    %2702 = vmatprep.subr.mxu0 0.0
    %2703 = vmatpush2.msra.mxu0 0.0
    %2704 = vmatprep.subr.mxu0 0.0
    %2705 = vmatpush2.msra.mxu0 0.0
    %2706 = vmatprep.subr.mxu0 0.0
    %2707 = vmatpush2.msra.mxu0 0.0
    %2708 = vmatprep.subr.mxu0 0.0
    %2709 = vmatpush2.msra.mxu0 0.0
    %2710 = vmatprep.subr.mxu0 0.0
    %2711 = vmatpush2.msra.mxu0 0.0
    %2712 = vmatprep.subr.mxu0 0.0
    %2713 = vmatpush2.msra.mxu0 0.0
    %2714 = vmatprep.subr.mxu0 0.0
    %2715 = vmatpush2.msra.mxu0 0.0
    %2716 = vmatprep.subr.mxu0 0.0
    %2717 = vmatpush2.msra.mxu0 0.0
    %2718 = vmatprep.subr.mxu0 0.0
    %2719 = vmatpush2.msra.mxu0 0.0
    %2720 = vmatprep.subr.mxu0 0.0
    %2721 = vmatpush2.msra.mxu0 0.0
    %2722 = vmatprep.subr.mxu0 0.0
    %2723 = vmatpush2.msra.mxu0 0.0
    %2724 = vmatprep.mubr.f32.mxu0 0.0
    %2725 = vmatmul.mubr.f32.gmra.mxu0 %v2658
    %v2726 = vpop.f32.mrf.mxu0
    %v2727 = vadd.f32 %v2651, %v2726
    %v2728 = vpop.f32.mrf.mxu0
    %2729 = vdwg.mxu0
    %v2730 = vadd.f32 %v2727, %v111
    %v2731 = vxor.u32 %v2730, 2147483648
    %v2732 = vmul.f32 %v2731, 1.442695
    %v2733 = vpow.pop %v2732
    %v2734 = vadd.f32 %v2733, 1.0
    %v2735 = vrcp.pop %v2734
    %v2736 = vmul.f32 1.0, %v2735
    %v2737 = vtanh.pop %v2730
    %v2738 = vmul.f32 %v2736, %v2400
    %2740 = vrot.lane.b32.xlu0 %v2737, 64
    %v2741 = vpop.permute.xlu0 %2740
    %v2743 = vmul.f32 %v2736, %v2741
    %2745 = vrot.lane.b32.xlu0 %v2743, 32
    %v2746 = vpop.permute.xlu0 %2745
    %v2748 = vadd.f32 %v2738, %v2746
    %v2749 = vtanh.pop %v2748
    %2751 = vrot.lane.b32.xlu0 %v2749, 64
    %v2752 = vpop.permute.xlu0 %2751
    %v2754 = vmul.f32 %v2736, %v2752
    %2756 = vrot.lane.b32.xlu0 %v2581, 32
    %v2757 = vpop.permute.xlu0 %2756
    %v2758 = vsel %vm136, %v2757, 0
    %2760 = vmatprep.subr.mxu0 0.0
    %2761 = vmatpush1.msra.mxu0 0.0
    %2762 = vmatprep.subr.mxu0 0.0
    %2763 = vmatpush1.msra.mxu0 0.0
    %2764 = vmatprep.subr.mxu0 0.0
    %2765 = vmatpush1.msra.mxu0 0.0
    %2766 = vmatprep.subr.mxu0 0.0
    %2767 = vmatpush1.msra.mxu0 0.0
    %2768 = vmatprep.subr.mxu0 0.0
    %2769 = vmatpush1.msra.mxu0 0.0
    %2770 = vmatprep.subr.mxu0 0.0
    %2771 = vmatpush1.msra.mxu0 0.0
    %2772 = vmatprep.subr.mxu0 0.0
    %2773 = vmatpush1.msra.mxu0 0.0
    %2774 = vmatprep.subr.mxu0 0.0
    %2775 = vmatpush1.msra.mxu0 0.0
    %2776 = vmatprep.subr.mxu0 0.0
    %2777 = vmatpush1.msra.mxu0 0.0
    %2778 = vmatprep.subr.mxu0 0.0
    %2779 = vmatpush1.msra.mxu0 0.0
    %2780 = vmatprep.subr.mxu0 0.0
    %2781 = vmatpush1.msra.mxu0 0.0
    %2782 = vmatprep.subr.mxu0 0.0
    %2783 = vmatpush1.msra.mxu0 0.0
    %2784 = vmatprep.subr.mxu0 0.0
    %2785 = vmatpush1.msra.mxu0 %v120
    %2786 = vmatprep.subr.mxu0 0.0
    %2787 = vmatpush1.msra.mxu0 %v119
    %2788 = vmatprep.subr.mxu0 0.0
    %2789 = vmatpush1.msra.mxu0 %v118
    %2790 = vmatprep.subr.mxu0 0.0
    %2791 = vmatpush1.msra.mxu0 %v117
    %2792 = vmatprep.subr.mxu0 0.0
    %2793 = vmatpush2.msra.mxu0 0.0
    %2794 = vmatprep.subr.mxu0 0.0
    %2795 = vmatpush2.msra.mxu0 0.0
    %2796 = vmatprep.subr.mxu0 0.0
    %2797 = vmatpush2.msra.mxu0 0.0
    %2798 = vmatprep.subr.mxu0 0.0
    %2799 = vmatpush2.msra.mxu0 0.0
    %2800 = vmatprep.subr.mxu0 0.0
    %2801 = vmatpush2.msra.mxu0 0.0
    %2802 = vmatprep.subr.mxu0 0.0
    %2803 = vmatpush2.msra.mxu0 0.0
    %2804 = vmatprep.subr.mxu0 0.0
    %2805 = vmatpush2.msra.mxu0 0.0
    %2806 = vmatprep.subr.mxu0 0.0
    %2807 = vmatpush2.msra.mxu0 0.0
    %2808 = vmatprep.subr.mxu0 0.0
    %2809 = vmatpush2.msra.mxu0 0.0
    %2810 = vmatprep.subr.mxu0 0.0
    %2811 = vmatpush2.msra.mxu0 0.0
    %2812 = vmatprep.subr.mxu0 0.0
    %2813 = vmatpush2.msra.mxu0 0.0
    %2814 = vmatprep.subr.mxu0 0.0
    %2815 = vmatpush2.msra.mxu0 0.0
    %2816 = vmatprep.subr.mxu0 0.0
    %2817 = vmatpush2.msra.mxu0 0.0
    %2818 = vmatprep.subr.mxu0 0.0
    %2819 = vmatpush2.msra.mxu0 0.0
    %2820 = vmatprep.subr.mxu0 0.0
    %2821 = vmatpush2.msra.mxu0 0.0
    %2822 = vmatprep.subr.mxu0 0.0
    %2823 = vmatpush2.msra.mxu0 0.0
    %2824 = vmatprep.mubr.f32.mxu0 0.0
    %2825 = vmatmul.mubr.f32.gmra.mxu0 %v2758
    %v2826 = vpop.f32.mrf.mxu0
    %v2827 = vadd.f32 0.0, %v2826
    %v2828 = vpop.f32.mrf.mxu0
    %2829 = vdwg.mxu0
    %2831 = vrot.lane.b32.xlu0 %v2754, 32
    %v2832 = vpop.permute.xlu0 %2831
    %v2833 = vsel %vm136, %v2832, 0
    %2835 = vmatprep.subr.mxu0 0.0
    %2836 = vmatpush1.msra.mxu0 0.0
    %2837 = vmatprep.subr.mxu0 0.0
    %2838 = vmatpush1.msra.mxu0 0.0
    %2839 = vmatprep.subr.mxu0 0.0
    %2840 = vmatpush1.msra.mxu0 0.0
    %2841 = vmatprep.subr.mxu0 0.0
    %2842 = vmatpush1.msra.mxu0 0.0
    %2843 = vmatprep.subr.mxu0 0.0
    %2844 = vmatpush1.msra.mxu0 0.0
    %2845 = vmatprep.subr.mxu0 0.0
    %2846 = vmatpush1.msra.mxu0 0.0
    %2847 = vmatprep.subr.mxu0 0.0
    %2848 = vmatpush1.msra.mxu0 0.0
    %2849 = vmatprep.subr.mxu0 0.0
    %2850 = vmatpush1.msra.mxu0 0.0
    %2851 = vmatprep.subr.mxu0 0.0
    %2852 = vmatpush1.msra.mxu0 0.0
    %2853 = vmatprep.subr.mxu0 0.0
    %2854 = vmatpush1.msra.mxu0 0.0
    %2855 = vmatprep.subr.mxu0 0.0
    %2856 = vmatpush1.msra.mxu0 0.0
    %2857 = vmatprep.subr.mxu0 0.0
    %2858 = vmatpush1.msra.mxu0 0.0
    %2859 = vmatprep.subr.mxu0 0.0
    %2860 = vmatpush1.msra.mxu0 %v116
    %2861 = vmatprep.subr.mxu0 0.0
    %2862 = vmatpush1.msra.mxu0 %v115
    %2863 = vmatprep.subr.mxu0 0.0
    %2864 = vmatpush1.msra.mxu0 %v114
    %2865 = vmatprep.subr.mxu0 0.0
    %2866 = vmatpush1.msra.mxu0 %v113
    %2867 = vmatprep.subr.mxu0 0.0
    %2868 = vmatpush2.msra.mxu0 0.0
    %2869 = vmatprep.subr.mxu0 0.0
    %2870 = vmatpush2.msra.mxu0 0.0
    %2871 = vmatprep.subr.mxu0 0.0
    %2872 = vmatpush2.msra.mxu0 0.0
    %2873 = vmatprep.subr.mxu0 0.0
    %2874 = vmatpush2.msra.mxu0 0.0
    %2875 = vmatprep.subr.mxu0 0.0
    %2876 = vmatpush2.msra.mxu0 0.0
    %2877 = vmatprep.subr.mxu0 0.0
    %2878 = vmatpush2.msra.mxu0 0.0
    %2879 = vmatprep.subr.mxu0 0.0
    %2880 = vmatpush2.msra.mxu0 0.0
    %2881 = vmatprep.subr.mxu0 0.0
    %2882 = vmatpush2.msra.mxu0 0.0
    %2883 = vmatprep.subr.mxu0 0.0
    %2884 = vmatpush2.msra.mxu0 0.0
    %2885 = vmatprep.subr.mxu0 0.0
    %2886 = vmatpush2.msra.mxu0 0.0
    %2887 = vmatprep.subr.mxu0 0.0
    %2888 = vmatpush2.msra.mxu0 0.0
    %2889 = vmatprep.subr.mxu0 0.0
    %2890 = vmatpush2.msra.mxu0 0.0
    %2891 = vmatprep.subr.mxu0 0.0
    %2892 = vmatpush2.msra.mxu0 0.0
    %2893 = vmatprep.subr.mxu0 0.0
    %2894 = vmatpush2.msra.mxu0 0.0
    %2895 = vmatprep.subr.mxu0 0.0
    %2896 = vmatpush2.msra.mxu0 0.0
    %2897 = vmatprep.subr.mxu0 0.0
    %2898 = vmatpush2.msra.mxu0 0.0
    %2899 = vmatprep.mubr.f32.mxu0 0.0
    %2900 = vmatmul.mubr.f32.gmra.mxu0 %v2833
    %v2901 = vpop.f32.mrf.mxu0
    %v2902 = vadd.f32 %v2827, %v2901
    %v2903 = vpop.f32.mrf.mxu0
    %2904 = vdwg.mxu0
    %v2905 = vadd.f32 %v2902, %v126
    %v2906 = vxor.u32 %v2905, 2147483648
    %v2907 = vmul.f32 %v2906, 1.442695
    %v2908 = vpow.pop %v2907
    %v2909 = vadd.f32 %v2908, 1.0
    %v2910 = vrcp.pop %v2909
    %v2911 = vmul.f32 1.0, %v2910
    %v2912 = vtanh.pop %v2905
    %v2913 = vmul.f32 %v2911, %v2575
    %2915 = vrot.lane.b32.xlu0 %v2912, 64
    %v2916 = vpop.permute.xlu0 %2915
    %v2918 = vmul.f32 %v2911, %v2916
    %2920 = vrot.lane.b32.xlu0 %v2918, 32
    %v2921 = vpop.permute.xlu0 %2920
    %v2923 = vadd.f32 %v2913, %v2921
    %v2924 = vtanh.pop %v2923
    %2926 = vrot.lane.b32.xlu0 %v2924, 64
    %v2927 = vpop.permute.xlu0 %2926
    %v2929 = vmul.f32 %v2911, %v2927
    %v2930 = vmax.f32 %v2929, 0.0
    %v2931 = vld [vmem:[%s9] sm:$0xff]
    %v2932 = vld [vmem:[%s9 + $0x8] sm:$0xff]
    %v2933 = vld [vmem:[%s9 + $0x10] sm:$0xff]
    %v2934 = vld [vmem:[%s9 + $0x18] sm:$0xff]
    %v2935 = vld [vmem:[#allocation2] sm:$0x1]
    %v2937 = vlaneseq
    %v2938 = vshrl.u32 %v2937, 7
    %v2939 = vsub.s32 0, %v2938
    %v2940 = vrot.slane %v2935, %v2939
    %2943 = vrot.lane.b32.xlu0 %v2930, 32
    %v2944 = vpop.permute.xlu0 %2943
    %v2945 = vsel %vm136, %v2944, 0
    %2947 = vmatprep.subr.mxu0 0.0
    %2948 = vmatpush1.msra.mxu0 0.0
    %2949 = vmatprep.subr.mxu0 0.0
    %2950 = vmatpush1.msra.mxu0 0.0
    %2951 = vmatprep.subr.mxu0 0.0
    %2952 = vmatpush1.msra.mxu0 0.0
    %2953 = vmatprep.subr.mxu0 0.0
    %2954 = vmatpush1.msra.mxu0 0.0
    %2955 = vmatprep.subr.mxu0 0.0
    %2956 = vmatpush1.msra.mxu0 0.0
    %2957 = vmatprep.subr.mxu0 0.0
    %2958 = vmatpush1.msra.mxu0 0.0
    %2959 = vmatprep.subr.mxu0 0.0
    %2960 = vmatpush1.msra.mxu0 0.0
    %2961 = vmatprep.subr.mxu0 0.0
    %2962 = vmatpush1.msra.mxu0 0.0
    %2963 = vmatprep.subr.mxu0 0.0
    %2964 = vmatpush1.msra.mxu0 0.0
    %2965 = vmatprep.subr.mxu0 0.0
    %2966 = vmatpush1.msra.mxu0 0.0
    %2967 = vmatprep.subr.mxu0 0.0
    %2968 = vmatpush1.msra.mxu0 0.0
    %2969 = vmatprep.subr.mxu0 0.0
    %2970 = vmatpush1.msra.mxu0 0.0
    %2971 = vmatprep.subr.mxu0 0.0
    %2972 = vmatpush1.msra.mxu0 %v2934
    %2973 = vmatprep.subr.mxu0 0.0
    %2974 = vmatpush1.msra.mxu0 %v2933
    %2975 = vmatprep.subr.mxu0 0.0
    %2976 = vmatpush1.msra.mxu0 %v2932
    %2977 = vmatprep.subr.mxu0 0.0
    %2978 = vmatpush1.msra.mxu0 %v2931
    %2979 = vmatprep.subr.mxu0 0.0
    %2980 = vmatpush2.msra.mxu0 0.0
    %2981 = vmatprep.subr.mxu0 0.0
    %2982 = vmatpush2.msra.mxu0 0.0
    %2983 = vmatprep.subr.mxu0 0.0
    %2984 = vmatpush2.msra.mxu0 0.0
    %2985 = vmatprep.subr.mxu0 0.0
    %2986 = vmatpush2.msra.mxu0 0.0
    %2987 = vmatprep.subr.mxu0 0.0
    %2988 = vmatpush2.msra.mxu0 0.0
    %2989 = vmatprep.subr.mxu0 0.0
    %2990 = vmatpush2.msra.mxu0 0.0
    %2991 = vmatprep.subr.mxu0 0.0
    %2992 = vmatpush2.msra.mxu0 0.0
    %2993 = vmatprep.subr.mxu0 0.0
    %2994 = vmatpush2.msra.mxu0 0.0
    %2995 = vmatprep.subr.mxu0 0.0
    %2996 = vmatpush2.msra.mxu0 0.0
    %2997 = vmatprep.subr.mxu0 0.0
    %2998 = vmatpush2.msra.mxu0 0.0
    %2999 = vmatprep.subr.mxu0 0.0
    %3000 = vmatpush2.msra.mxu0 0.0
    %3001 = vmatprep.subr.mxu0 0.0
    %3002 = vmatpush2.msra.mxu0 0.0
    %3003 = vmatprep.subr.mxu0 0.0
    %3004 = vmatpush2.msra.mxu0 0.0
    %3005 = vmatprep.subr.mxu0 0.0
    %3006 = vmatpush2.msra.mxu0 0.0
    %3007 = vmatprep.subr.mxu0 0.0
    %3008 = vmatpush2.msra.mxu0 0.0
    %3009 = vmatprep.subr.mxu0 0.0
    %3010 = vmatpush2.msra.mxu0 0.0
    %3011 = vmatprep.mubr.f32.mxu0 0.0
    %3012 = vmatmul.mubr.f32.gmra.mxu0 %v2945
    %v3013 = vpop.f32.mrf.mxu0
    %v3014 = vadd.f32 %v2940, %v3013
    %v3015 = vpop.f32.mrf.mxu0
    %3016 = vdwg.mxu0
    %vm3017 = vcmask 1024
    %3018 = vst.msk [vmem:[%s11] sm:$0x3] %vm3017, %v3014
    %vm3020 = vcmask 254976
    %3021 = vst.msk [vmem:[#allocation11] sm:$0x3] %vm3020, %v2832
    %3023 = vrot.lane.b32.xlu0 %v2748, 96
    %v3024 = vpop.permute.xlu0 %3023
    %3026 = vst.msk [vmem:[#allocation12] sm:$0x3] %vm3020, %v3024
    %3028 = vrot.lane.b32.xlu0 %v2929, 32
    %v3029 = vpop.permute.xlu0 %3028
    %s3031 = scalar_lea.vmem [#allocation11], 2
    %3032 = vst.msk [vmem:[%s3031] sm:$0x3] %vm3020, %v3029
    %3034 = vrot.lane.b32.xlu0 %v2923, 96
    %v3035 = vpop.permute.xlu0 %3034
    %s3037 = scalar_lea.vmem [#allocation12], 2
    %3038 = vst.msk [vmem:[%s3037] sm:$0x3] %vm3020, %v3035
    // Predicated region
    $region62: #{lstm_net_forward.1} parent=1 // pred_check
      _
    $region63: #{lstm_net_forward.1} parent=1 // pred_check_branch
      %3040 = sbr.rel (0) target = $region65
    $region64: #{lstm_net_forward.1} parent=1 // pred_region
      _
    $region65: #{lstm_net_forward.1} parent=1 // pred_fallthru
      _
    // Predicated region
    $region66: #{lstm_net_forward.1} parent=1 // pred_check
      _
    $region67: #{lstm_net_forward.1} parent=1 // pred_check_branch
      %3042 = sbr.rel (0) target = $region69
    $region68: #{lstm_net_forward.1} parent=1 // pred_region
      %s3044 = ssub.s32 64, 64
      %3045 = vsyncadd [#allocation5], %s3044
      %s3046 = sshll.u32 [#allocation11], 4
      %s3047 = int_to_ptr.vmem [resolvable:$true] %s3046
      %3052 = dma.vmem_to_hbm [thread:$0]  %s3047, 64, %s12, [#allocation5], 32, 32, 2
    $region69: #{lstm_net_forward.1} parent=1 // pred_fallthru
      _
    // Predicated region
    $region70: #{lstm_net_forward.1} parent=1 // pred_check
      _
    $region71: #{lstm_net_forward.1} parent=1 // pred_check_branch
      %3054 = sbr.rel (0) target = $region73
    $region72: #{lstm_net_forward.1} parent=1 // pred_region
      %s3056 = ssub.s32 64, 64
      %3057 = vsyncadd [#allocation13], %s3056
      %s3058 = sshll.u32 [#allocation12], 4
      %s3059 = int_to_ptr.vmem [resolvable:$true] %s3058
      %3064 = dma.vmem_to_hbm [thread:$0]  %s3059, 64, %s13, [#allocation13], 32, 32, 2
    $region73: #{lstm_net_forward.1} parent=1 // pred_fallthru
      _
    // Predicated region
    $region74: #{lstm_net_forward.1} parent=1 // pred_check
      _
    $region75: #{lstm_net_forward.1} parent=1 // pred_check_branch
      %3066 = sbr.rel (0) target = $region77
    $region76: #{lstm_net_forward.1} parent=1 // pred_region
      _
    $region77: #{lstm_net_forward.1} parent=1 // pred_fallthru
      _
    // Predicated region
    $region78: #{lstm_net_forward.1} parent=1 // pred_check
      _
    $region79: #{lstm_net_forward.1} parent=1 // pred_check_branch
      %3068 = sbr.rel (0) target = $region81
    $region80: #{lstm_net_forward.1} parent=1 // pred_region
      %3069 = dma.done [#allocation5], 64
    $region81: #{lstm_net_forward.1} parent=1 // pred_fallthru
      _
    // Predicated region
    $region82: #{lstm_net_forward.1} parent=1 // pred_check
      _
    $region83: #{lstm_net_forward.1} parent=1 // pred_check_branch
      %3071 = sbr.rel (0) target = $region85
    $region84: #{lstm_net_forward.1} parent=1 // pred_region
      %3072 = dma.done [#allocation13], 64
    $region85: #{lstm_net_forward.1} parent=1 // pred_fallthru
      _
    %3073 = vsyncpa [#allocation4], 1
    %3074 = vsyncpa [#allocation7], 1
    %3075 = vsyncpa [#allocation10], 1
    %3076 = vsyncpa [#allocation5], 1
    %3077 = vsyncpa [#allocation13], 1

</llo_original>
